<compile_context>
chip_gen: v5e
topology: v5e:2x2
jax: 0.10.0
libtpu: 0.0.40
codegen_flags: <defaults>
</compile_context>

<pallas_src>
import functools

import numpy as np
import jax
import jax.numpy as jnp
from jax.experimental import pallas as pl
from jax.experimental.pallas import tpu as pltpu


def _rup(x, m):
    return ((x + m - 1) // m) * m


# ----------------------------------------------------------------------------
# Kernel 1: all TemporalBlocks (+ optional adaptive max-pool), one batch element
# per grid step.
# ----------------------------------------------------------------------------
def _tcn_kernel(x_ref, *args, block_meta, kernel_size, pool):
    if pool:
        *w_refs, sel_ref, out_ref = args
    else:
        *w_refs, out_ref = args
    Lp = x_ref.shape[-1]
    f32 = jnp.float32

    def shift_right_mat(s):
        # R[i, j] = 1 iff j == i + s, so (h @ R)[:, t] = h[:, t - s] (0 for t < s):
        # exact causal left-zero-padding, performed on the MXU.
        r = jax.lax.broadcasted_iota(jnp.int32, (Lp, Lp), 0)
        c = jax.lax.broadcasted_iota(jnp.int32, (Lp, Lp), 1)
        return (c == r + s).astype(f32)

    h = x_ref[0]                                        # (c_in_p, Lp), lane-dense
    wi = 0
    for (c_in_p, c_out_p, dilation, has_down) in block_meta:
        w1 = w_refs[wi][...]
        b1 = w_refs[wi + 1][...]
        w2 = w_refs[wi + 2][...]
        b2 = w_refs[wi + 3][...]
        wi += 4
        if has_down:
            wd = w_refs[wi][...]
            bd = w_refs[wi + 1][...]
            wi += 2

        # tap k of the causal dilated conv reads x[t - (K-1-k)*dilation]
        shifts = [(kernel_size - 1 - k) * dilation for k in range(kernel_size)]
        mats = {s: shift_right_mat(s) for s in sorted(set(shifts)) if s != 0}

        def im2col(v, _mats=mats, _shifts=shifts):
            cols = [v if s == 0 else
                    jnp.dot(v, _mats[s], preferred_element_type=f32)
                    for s in _shifts]
            return cols[0] if len(cols) == 1 else jnp.concatenate(cols, axis=0)

        # conv1(+chomp) + bias + ReLU  (dropout1 is identity at inference)
        y1 = jnp.maximum(
            jnp.dot(w1, im2col(h), preferred_element_type=f32) + b1, 0.0)
        # conv2(+chomp) + bias + ReLU  (dropout2 is identity at inference)
        y2 = jnp.maximum(
            jnp.dot(w2, im2col(y1), preferred_element_type=f32) + b2, 0.0)
        # residual: 1x1 conv only when n_inputs != n_outputs, else plain add
        res = (jnp.dot(wd, h, preferred_element_type=f32) + bd) if has_down else h
        h = jnp.maximum(y2 + res, 0.0)

    if pool:
        # AdaptiveMaxPool1d: pooled[:, i] = max over bin i, expressed as an
        # elementwise max of selection matmuls (selectors built host-side).
        pooled = jnp.dot(h, sel_ref[0], preferred_element_type=f32)
        for j in range(1, sel_ref.shape[0]):
            pooled = jnp.maximum(
                pooled, jnp.dot(h, sel_ref[j], preferred_element_type=f32))
        out_ref[0] = pooled
    else:
        out_ref[0] = h


# ----------------------------------------------------------------------------
# Kernel 2: head for the whole batch: flatten -> Linear(1024) -> Linear(out)
# ----------------------------------------------------------------------------
def _head_kernel(p_ref, w1_ref, b1_ref, w2_ref, b2_ref, out_ref):
    hid = jnp.dot(p_ref[...], w1_ref[...],
                  preferred_element_type=jnp.float32) + b1_ref[...]
    out_ref[...] = jnp.dot(hid, w2_ref[...],
                           preferred_element_type=jnp.float32) + b2_ref[...]


# ----------------------------------------------------------------------------
# Host-side helpers
# ----------------------------------------------------------------------------
def _pool_selectors(L, pool_out, Lp):
    """(m, Lp, pool_out) 0/1 selectors so max_j (h @ sel[j]) == AdaptiveMaxPool1d."""
    m = -(-L // pool_out)
    sel = np.zeros((m, Lp, pool_out), np.float32)
    for i in range(pool_out):
        s = (i * L) // pool_out
        e = -(-((i + 1) * L) // pool_out)
        for j in range(m):
            sel[j, min(s + j, e - 1), i] = 1.0   # duplicates are harmless under max
    return sel


def _stack_taps(w, c_out_p, c_in_p):
    """(K, c_out, c_in) conv weight -> (c_out_p, K*c_in_p) matching in-kernel im2col."""
    K, c_out, c_in = w.shape
    wp = jnp.pad(w, ((0, 0), (0, c_out_p - c_out), (0, c_in_p - c_in)))
    return jnp.transpose(wp, (1, 0, 2)).reshape(c_out_p, K * c_in_p)


# ----------------------------------------------------------------------------
# Full forward
# ----------------------------------------------------------------------------
def base_tcn_forward(params, x, *, kernel_size, only_tcn=True, pool_out=25):
    """x: (B, L, input_size) -> (B, output_size) if only_tcn else (B, L, C_last)."""
    B, L, _ = x.shape
    Lp = _rup(max(L, 1), 128)                    # lane-dense time axis

    h0 = jnp.transpose(x, (0, 2, 1)).astype(jnp.float32)   # (B, C_in, L), NCW
    c0 = h0.shape[1]
    c0_p = _rup(c0, 8)                           # sublane-aligned channels
    xp = jnp.pad(h0, ((0, 0), (0, c0_p - c0), (0, Lp - L)))

    flat_w = []
    in_specs = [pl.BlockSpec((1, c0_p, Lp), lambda b: (b, 0, 0))]
    block_meta = []
    c_in, c_in_p = c0, c0_p
    for i, (w1, b1, w2, b2, wd, bd) in enumerate(params["blocks"]):
        c_out = w1.shape[1]
        c_out_p = _rup(c_out, 8)
        dil = 2 ** i
        has_down = wd is not None
        ws = [_stack_taps(w1, c_out_p, c_in_p),
              jnp.pad(b1, ((0, c_out_p - c_out), (0, 0))),
              _stack_taps(w2, c_out_p, c_out_p),
              jnp.pad(b2, ((0, c_out_p - c_out), (0, 0)))]
        if has_down:
            ws += [jnp.pad(wd, ((0, c_out_p - c_out), (0, c_in_p - c_in))),
                   jnp.pad(bd, ((0, c_out_p - c_out), (0, 0)))]
        for w in ws:
            flat_w.append(w)
            in_specs.append(pl.BlockSpec(w.shape, lambda b: (0, 0)))
        block_meta.append((c_in_p, c_out_p, dil, has_down))
        c_in, c_in_p = c_out, c_out_p

    c_last, c_last_p = c_in, c_in_p

    if only_tcn:
        sel = jnp.asarray(_pool_selectors(L, pool_out, Lp))
        flat_w.append(sel)
        in_specs.append(pl.BlockSpec(sel.shape, lambda b: (0, 0, 0)))
        out_shape = jax.ShapeDtypeStruct((B, c_last_p, pool_out), jnp.float32)
        out_spec = pl.BlockSpec((1, c_last_p, pool_out), lambda b: (b, 0, 0))
    else:
        out_shape = jax.ShapeDtypeStruct((B, c_last_p, Lp), jnp.float32)
        out_spec = pl.BlockSpec((1, c_last_p, Lp), lambda b: (b, 0, 0))

    kern = functools.partial(_tcn_kernel, block_meta=tuple(block_meta),
                             kernel_size=kernel_size, pool=only_tcn)
    tcn_out = pl.pallas_call(
        kern,
        out_shape=out_shape,
        grid=(B,),
        in_specs=in_specs,
        out_specs=out_spec,
        compiler_params=pltpu.CompilerParams(dimension_semantics=("parallel",)),
    )(xp, *flat_w)

    if not only_tcn:
        return jnp.transpose(tcn_out[:, :c_last, :L], (0, 2, 1))

    # Head: flatten (channel-major, matches torch .view) -> Linear -> Linear.
    pooled_flat = tcn_out.reshape(B, c_last_p * pool_out)
    lw1 = params["lw1"]                                     # (c_last, pool_out, hidden)
    hidden = lw1.shape[-1]
    lw1p = jnp.pad(lw1, ((0, c_last_p - c_last), (0, 0), (0, 0))
                   ).reshape(c_last_p * pool_out, hidden)
    lb1, lw2, lb2 = params["lb1"], params["lw2"], params["lb2"]
    out_size = lw2.shape[-1]
    return pl.pallas_call(
        _head_kernel,
        out_shape=jax.ShapeDtypeStruct((B, out_size), jnp.float32),
        grid=(1,),
        in_specs=[pl.BlockSpec(pooled_flat.shape, lambda i: (0, 0)),
                  pl.BlockSpec(lw1p.shape, lambda i: (0, 0)),
                  pl.BlockSpec(lb1.shape, lambda i: (0, 0)),
                  pl.BlockSpec(lw2.shape, lambda i: (0, 0)),
                  pl.BlockSpec(lb2.shape, lambda i: (0, 0))],
        out_specs=pl.BlockSpec((B, out_size), lambda i: (0, 0)),
    )(pooled_flat, lw1p, lb1, lw2, lb2)


# ----------------------------------------------------------------------------
# Parameter init (deterministic, synthetic).  Real PyTorch checkpoints would
# need their weight_norm g/v folded and Conv1d weights permuted to (K, out, in).
# ----------------------------------------------------------------------------
def init_params(key, input_size, output_size, num_channels, kernel_size,
                pool_out=25, hidden=1024):
    keys = jax.random.split(key, 6 * len(num_channels) + 4)
    blocks = []
    idx = 0
    c_in = input_size
    for c_out in num_channels:
        k1, k2, k3, k4, k5, k6 = keys[idx:idx + 6]
        idx += 6
        w1 = 0.1 * jax.random.normal(k1, (kernel_size, c_out, c_in), jnp.float32)
        b1 = 0.1 * jax.random.normal(k2, (c_out, 1), jnp.float32)
        w2 = 0.1 * jax.random.normal(k3, (kernel_size, c_out, c_out), jnp.float32)
        b2 = 0.1 * jax.random.normal(k4, (c_out, 1), jnp.float32)
        if c_in != c_out:
            wd = 0.1 * jax.random.normal(k5, (c_out, c_in), jnp.float32)
            bd = 0.1 * jax.random.normal(k6, (c_out, 1), jnp.float32)
        else:                       # downsample is None -> residual is identity
            wd, bd = None, None
        blocks.append((w1, b1, w2, b2, wd, bd))
        c_in = c_out

    kh1, kh2, kh3, kh4 = keys[idx:idx + 4]
    c_last = num_channels[-1]
    # torch linear1.weight is (hidden, c_last*25); we store its transpose reshaped
    # to (c_last, pool_out, hidden) so the channel-major flatten matches .view().
    lw1 = 0.05 * jax.random.normal(kh1, (c_last, pool_out, hidden), jnp.float32)
    lb1 = 0.05 * jax.random.normal(kh2, (1, hidden), jnp.float32)
    lw2 = 0.05 * jax.random.normal(kh3, (hidden, output_size), jnp.float32)
    lb2 = 0.05 * jax.random.normal(kh4, (1, output_size), jnp.float32)
    return {"blocks": blocks, "lw1": lw1, "lb1": lb1, "lw2": lw2, "lb2": lb2}


# ----------------------------------------------------------------------------
# Pure-JAX reference (same math) for correctness checks
# ----------------------------------------------------------------------------
def ref_tcn(params, x, kernel_size):
    h = jnp.transpose(x, (0, 2, 1)).astype(jnp.float32)
    for i, (w1, b1, w2, b2, wd, bd) in enumerate(params["blocks"]):
        d = 2 ** i
        pad = (kernel_size - 1) * d

        def conv(inp, w, b):
            xpad = jnp.pad(inp, ((0, 0), (0, 0), (pad, 0)))
            L = inp.shape[-1]
            acc = jnp.zeros((inp.shape[0], w.shape[1], L), jnp.float32)
            for k in range(kernel_size):
                acc = acc + jnp.einsum('oi,bil->bol', w[k],
                                       xpad[:, :, k * d:k * d + L])
            return acc + b[None]

        y1 = jax.nn.relu(conv(h, w1, b1))
        y2 = jax.nn.relu(conv(y1, w2, b2))
        res = h if wd is None else jnp.einsum('oi,bil->bol', wd, h) + bd[None]
        h = jax.nn.relu(y2 + res)
    return h


def ref_forward(params, x, kernel_size, pool_out=25):
    h = ref_tcn(params, x, kernel_size)
    B, C, L = h.shape
    bins = []
    for i in range(pool_out):
        s = (i * L) // pool_out
        e = -(-((i + 1) * L) // pool_out)
        bins.append(jnp.max(h[:, :, s:e], axis=-1))
    pooled = jnp.stack(bins, axis=-1)                     # (B, C, pool_out)
    flat = pooled.reshape(B, C * pool_out)
    hlin = flat @ params["lw1"].reshape(C * pool_out, -1) + params["lb1"]
    return hlin @ params["lw2"] + params["lb2"]


if __name__ == "__main__":
    B, L, input_size = 2, 50, 4
    num_channels = [8, 8, 16]      # covers both downsample and identity residual
    kernel_size = 2
    output_size = 5

    key = jax.random.PRNGKey(0)
    kp, kx = jax.random.split(key)
    params = init_params(kp, input_size, output_size, num_channels, kernel_size)
    x = jax.random.normal(kx, (B, L, input_size), jnp.float32)

    fwd = jax.jit(functools.partial(base_tcn_forward, kernel_size=kernel_size))
    out = fwd(params, x)
    jax.block_until_ready(out)
    assert out.shape == (B, output_size), out.shape
    ref = ref_forward(params, x, kernel_size)
    err = float(jnp.max(jnp.abs(out - ref)))
    assert err < 1e-3, f"max abs err {err}"

    # only_tcn=False path: full (B, L, C_last) sequence output
    fwd_seq = jax.jit(functools.partial(base_tcn_forward, kernel_size=kernel_size,
                                        only_tcn=False))
    seq = fwd_seq(params, x)
    jax.block_until_ready(seq)
    assert seq.shape == (B, L, num_channels[-1]), seq.shape
    ref_seq = jnp.transpose(ref_tcn(params, x, kernel_size), (0, 2, 1))
    err_seq = float(jnp.max(jnp.abs(seq - ref_seq)))
    assert err_seq < 1e-3, f"max abs err (seq) {err_seq}"

    print("KERNEL_OK")
</pallas_src>

<mosaic_0001>
module attributes {stable_mosaic.version = 11 : i64} {
  func.func @_tcn_kernel(%arg0: i32, %arg1: memref<1x8x128xf32, #tpu.memory_space<vmem>>, %arg2: memref<8x16xf32, #tpu.memory_space<vmem>>, %arg3: memref<8x1xf32, #tpu.memory_space<vmem>>, %arg4: memref<8x16xf32, #tpu.memory_space<vmem>>, %arg5: memref<8x1xf32, #tpu.memory_space<vmem>>, %arg6: memref<8x8xf32, #tpu.memory_space<vmem>>, %arg7: memref<8x1xf32, #tpu.memory_space<vmem>>, %arg8: memref<8x16xf32, #tpu.memory_space<vmem>>, %arg9: memref<8x1xf32, #tpu.memory_space<vmem>>, %arg10: memref<8x16xf32, #tpu.memory_space<vmem>>, %arg11: memref<8x1xf32, #tpu.memory_space<vmem>>, %arg12: memref<16x16xf32, #tpu.memory_space<vmem>>, %arg13: memref<16x1xf32, #tpu.memory_space<vmem>>, %arg14: memref<16x32xf32, #tpu.memory_space<vmem>>, %arg15: memref<16x1xf32, #tpu.memory_space<vmem>>, %arg16: memref<16x8xf32, #tpu.memory_space<vmem>>, %arg17: memref<16x1xf32, #tpu.memory_space<vmem>>, %arg18: memref<2x128x25xf32, #tpu.memory_space<vmem>>, %arg19: memref<1x16x25xf32, #tpu.memory_space<vmem>>) attributes {dimension_semantics = [#tpu.dimension_semantics<parallel>], iteration_bounds = array<i64: 2>, scalar_prefetch = 0 : i64, scratch_operands = 0 : i64, tpu.core_type = #tpu.core_type<tc>, window_params = [{transform_indices = @transform_0, window_bounds = array<i64: 1, 8, 128>}, {pipeline_mode = #tpu.pipeline_mode<synchronous>, transform_indices = @transform_1, window_bounds = array<i64: 8, 16>}, {pipeline_mode = #tpu.pipeline_mode<synchronous>, transform_indices = @transform_2, window_bounds = array<i64: 8, 1>}, {pipeline_mode = #tpu.pipeline_mode<synchronous>, transform_indices = @transform_3, window_bounds = array<i64: 8, 16>}, {pipeline_mode = #tpu.pipeline_mode<synchronous>, transform_indices = @transform_4, window_bounds = array<i64: 8, 1>}, {pipeline_mode = #tpu.pipeline_mode<synchronous>, transform_indices = @transform_5, window_bounds = array<i64: 8, 8>}, {pipeline_mode = #tpu.pipeline_mode<synchronous>, transform_indices = @transform_6, window_bounds = array<i64: 8, 1>}, {pipeline_mode = #tpu.pipeline_mode<synchronous>, transform_indices = @transform_7, window_bounds = array<i64: 8, 16>}, {pipeline_mode = #tpu.pipeline_mode<synchronous>, transform_indices = @transform_8, window_bounds = array<i64: 8, 1>}, {pipeline_mode = #tpu.pipeline_mode<synchronous>, transform_indices = @transform_9, window_bounds = array<i64: 8, 16>}, {pipeline_mode = #tpu.pipeline_mode<synchronous>, transform_indices = @transform_10, window_bounds = array<i64: 8, 1>}, {pipeline_mode = #tpu.pipeline_mode<synchronous>, transform_indices = @transform_11, window_bounds = array<i64: 16, 16>}, {pipeline_mode = #tpu.pipeline_mode<synchronous>, transform_indices = @transform_12, window_bounds = array<i64: 16, 1>}, {pipeline_mode = #tpu.pipeline_mode<synchronous>, transform_indices = @transform_13, window_bounds = array<i64: 16, 32>}, {pipeline_mode = #tpu.pipeline_mode<synchronous>, transform_indices = @transform_14, window_bounds = array<i64: 16, 1>}, {pipeline_mode = #tpu.pipeline_mode<synchronous>, transform_indices = @transform_15, window_bounds = array<i64: 16, 8>}, {pipeline_mode = #tpu.pipeline_mode<synchronous>, transform_indices = @transform_16, window_bounds = array<i64: 16, 1>}, {pipeline_mode = #tpu.pipeline_mode<synchronous>, transform_indices = @transform_17, window_bounds = array<i64: 2, 128, 25>}, {transform_indices = @transform_18, window_bounds = array<i64: 1, 16, 25>}]} {
    %c0 = arith.constant 0 : index
    %c0_0 = arith.constant 0 : index
    %c0_1 = arith.constant 0 : index
    %0 = vector.load %arg1[%c0, %c0_0, %c0_1] : memref<1x8x128xf32, #tpu.memory_space<vmem>>, vector<1x8x128xf32>
    %1 = vector.shape_cast %0 : vector<1x8x128xf32> to vector<8x128xf32>
    %c0_2 = arith.constant 0 : index
    %c0_3 = arith.constant 0 : index
    %2 = vector.load %arg2[%c0_2, %c0_3] : memref<8x16xf32, #tpu.memory_space<vmem>>, vector<8x16xf32>
    %c0_4 = arith.constant 0 : index
    %c0_5 = arith.constant 0 : index
    %3 = vector.load %arg3[%c0_4, %c0_5] : memref<8x1xf32, #tpu.memory_space<vmem>>, vector<8x1xf32>
    %c0_6 = arith.constant 0 : index
    %c0_7 = arith.constant 0 : index
    %4 = vector.load %arg4[%c0_6, %c0_7] : memref<8x16xf32, #tpu.memory_space<vmem>>, vector<8x16xf32>
    %c0_8 = arith.constant 0 : index
    %c0_9 = arith.constant 0 : index
    %5 = vector.load %arg5[%c0_8, %c0_9] : memref<8x1xf32, #tpu.memory_space<vmem>>, vector<8x1xf32>
    %c0_10 = arith.constant 0 : index
    %c0_11 = arith.constant 0 : index
    %6 = vector.load %arg6[%c0_10, %c0_11] : memref<8x8xf32, #tpu.memory_space<vmem>>, vector<8x8xf32>
    %c0_12 = arith.constant 0 : index
    %c0_13 = arith.constant 0 : index
    %7 = vector.load %arg7[%c0_12, %c0_13] : memref<8x1xf32, #tpu.memory_space<vmem>>, vector<8x1xf32>
    %8 = tpu.iota {dimensions = array<i32: 0>} : vector<128x128xi32>
    %9 = tpu.iota {dimensions = array<i32: 1>} : vector<128x128xi32>
    %c1_i32 = arith.constant 1 : i32
    %10 = vector.broadcast %c1_i32 : i32 to vector<128x128xi32>
    %11 = arith.addi %8, %10 : vector<128x128xi32>
    %12 = arith.cmpi eq, %9, %11 : vector<128x128xi32>
    %13 = arith.extui %12 : vector<128x128xi1> to vector<128x128xi32>
    %14 = arith.sitofp %13 : vector<128x128xi32> to vector<128x128xf32>
    %cst = arith.constant dense<0.000000e+00> : vector<8x128xf32>
    %15 = tpu.matmul %1, %14, %cst {dimension_numbers = #tpu.dot_dimension_numbers<[1], [0], [0], [1], [0, 0, 1, 1], [], []>} : vector<8x128xf32>, vector<128x128xf32>, vector<8x128xf32> -> vector<8x128xf32>
    %16 = tpu.concatenate %15, %1 in 0 : vector<8x128xf32>, vector<8x128xf32> -> vector<16x128xf32>
    %cst_14 = arith.constant dense<0.000000e+00> : vector<8x128xf32>
    %17 = tpu.matmul %2, %16, %cst_14 {dimension_numbers = #tpu.dot_dimension_numbers<[1], [0], [0], [1], [0, 0, 1, 1], [], []>} : vector<8x16xf32>, vector<16x128xf32>, vector<8x128xf32> -> vector<8x128xf32>
    %18 = vector.broadcast %3 : vector<8x1xf32> to vector<8x128xf32>
    %19 = arith.addf %17, %18 : vector<8x128xf32>
    %cst_15 = arith.constant 0.000000e+00 : f32
    %20 = vector.broadcast %cst_15 : f32 to vector<8x128xf32>
    %21 = arith.maximumf %19, %20 : vector<8x128xf32>
    %cst_16 = arith.constant dense<0.000000e+00> : vector<8x128xf32>
    %22 = tpu.matmul %21, %14, %cst_16 {dimension_numbers = #tpu.dot_dimension_numbers<[1], [0], [0], [1], [0, 0, 1, 1], [], []>} : vector<8x128xf32>, vector<128x128xf32>, vector<8x128xf32> -> vector<8x128xf32>
    %23 = tpu.concatenate %22, %21 in 0 : vector<8x128xf32>, vector<8x128xf32> -> vector<16x128xf32>
    %cst_17 = arith.constant dense<0.000000e+00> : vector<8x128xf32>
    %24 = tpu.matmul %4, %23, %cst_17 {dimension_numbers = #tpu.dot_dimension_numbers<[1], [0], [0], [1], [0, 0, 1, 1], [], []>} : vector<8x16xf32>, vector<16x128xf32>, vector<8x128xf32> -> vector<8x128xf32>
    %25 = vector.broadcast %5 : vector<8x1xf32> to vector<8x128xf32>
    %26 = arith.addf %24, %25 : vector<8x128xf32>
    %cst_18 = arith.constant 0.000000e+00 : f32
    %27 = vector.broadcast %cst_18 : f32 to vector<8x128xf32>
    %28 = arith.maximumf %26, %27 : vector<8x128xf32>
    %cst_19 = arith.constant dense<0.000000e+00> : vector<8x128xf32>
    %29 = tpu.matmul %6, %1, %cst_19 {dimension_numbers = #tpu.dot_dimension_numbers<[1], [0], [0], [1], [0, 0, 1, 1], [], []>} : vector<8x8xf32>, vector<8x128xf32>, vector<8x128xf32> -> vector<8x128xf32>
    %30 = vector.broadcast %7 : vector<8x1xf32> to vector<8x128xf32>
    %31 = arith.addf %29, %30 : vector<8x128xf32>
    %32 = arith.addf %28, %31 : vector<8x128xf32>
    %cst_20 = arith.constant 0.000000e+00 : f32
    %33 = vector.broadcast %cst_20 : f32 to vector<8x128xf32>
    %34 = arith.maximumf %32, %33 : vector<8x128xf32>
    %c0_21 = arith.constant 0 : index
    %c0_22 = arith.constant 0 : index
    %35 = vector.load %arg8[%c0_21, %c0_22] : memref<8x16xf32, #tpu.memory_space<vmem>>, vector<8x16xf32>
    %c0_23 = arith.constant 0 : index
    %c0_24 = arith.constant 0 : index
    %36 = vector.load %arg9[%c0_23, %c0_24] : memref<8x1xf32, #tpu.memory_space<vmem>>, vector<8x1xf32>
    %c0_25 = arith.constant 0 : index
    %c0_26 = arith.constant 0 : index
    %37 = vector.load %arg10[%c0_25, %c0_26] : memref<8x16xf32, #tpu.memory_space<vmem>>, vector<8x16xf32>
    %c0_27 = arith.constant 0 : index
    %c0_28 = arith.constant 0 : index
    %38 = vector.load %arg11[%c0_27, %c0_28] : memref<8x1xf32, #tpu.memory_space<vmem>>, vector<8x1xf32>
    %39 = tpu.iota {dimensions = array<i32: 0>} : vector<128x128xi32>
    %40 = tpu.iota {dimensions = array<i32: 1>} : vector<128x128xi32>
    %c2_i32 = arith.constant 2 : i32
    %41 = vector.broadcast %c2_i32 : i32 to vector<128x128xi32>
    %42 = arith.addi %39, %41 : vector<128x128xi32>
    %43 = arith.cmpi eq, %40, %42 : vector<128x128xi32>
    %44 = arith.extui %43 : vector<128x128xi1> to vector<128x128xi32>
    %45 = arith.sitofp %44 : vector<128x128xi32> to vector<128x128xf32>
    %cst_29 = arith.constant dense<0.000000e+00> : vector<8x128xf32>
    %46 = tpu.matmul %34, %45, %cst_29 {dimension_numbers = #tpu.dot_dimension_numbers<[1], [0], [0], [1], [0, 0, 1, 1], [], []>} : vector<8x128xf32>, vector<128x128xf32>, vector<8x128xf32> -> vector<8x128xf32>
    %47 = tpu.concatenate %46, %34 in 0 : vector<8x128xf32>, vector<8x128xf32> -> vector<16x128xf32>
    %cst_30 = arith.constant dense<0.000000e+00> : vector<8x128xf32>
    %48 = tpu.matmul %35, %47, %cst_30 {dimension_numbers = #tpu.dot_dimension_numbers<[1], [0], [0], [1], [0, 0, 1, 1], [], []>} : vector<8x16xf32>, vector<16x128xf32>, vector<8x128xf32> -> vector<8x128xf32>
    %49 = vector.broadcast %36 : vector<8x1xf32> to vector<8x128xf32>
    %50 = arith.addf %48, %49 : vector<8x128xf32>
    %cst_31 = arith.constant 0.000000e+00 : f32
    %51 = vector.broadcast %cst_31 : f32 to vector<8x128xf32>
    %52 = arith.maximumf %50, %51 : vector<8x128xf32>
    %cst_32 = arith.constant dense<0.000000e+00> : vector<8x128xf32>
    %53 = tpu.matmul %52, %45, %cst_32 {dimension_numbers = #tpu.dot_dimension_numbers<[1], [0], [0], [1], [0, 0, 1, 1], [], []>} : vector<8x128xf32>, vector<128x128xf32>, vector<8x128xf32> -> vector<8x128xf32>
    %54 = tpu.concatenate %53, %52 in 0 : vector<8x128xf32>, vector<8x128xf32> -> vector<16x128xf32>
    %cst_33 = arith.constant dense<0.000000e+00> : vector<8x128xf32>
    %55 = tpu.matmul %37, %54, %cst_33 {dimension_numbers = #tpu.dot_dimension_numbers<[1], [0], [0], [1], [0, 0, 1, 1], [], []>} : vector<8x16xf32>, vector<16x128xf32>, vector<8x128xf32> -> vector<8x128xf32>
    %56 = vector.broadcast %38 : vector<8x1xf32> to vector<8x128xf32>
    %57 = arith.addf %55, %56 : vector<8x128xf32>
    %cst_34 = arith.constant 0.000000e+00 : f32
    %58 = vector.broadcast %cst_34 : f32 to vector<8x128xf32>
    %59 = arith.maximumf %57, %58 : vector<8x128xf32>
    %60 = arith.addf %59, %34 : vector<8x128xf32>
    %cst_35 = arith.constant 0.000000e+00 : f32
    %61 = vector.broadcast %cst_35 : f32 to vector<8x128xf32>
    %62 = arith.maximumf %60, %61 : vector<8x128xf32>
    %c0_36 = arith.constant 0 : index
    %c0_37 = arith.constant 0 : index
    %63 = vector.load %arg12[%c0_36, %c0_37] : memref<16x16xf32, #tpu.memory_space<vmem>>, vector<16x16xf32>
    %c0_38 = arith.constant 0 : index
    %c0_39 = arith.constant 0 : index
    %64 = vector.load %arg13[%c0_38, %c0_39] : memref<16x1xf32, #tpu.memory_space<vmem>>, vector<16x1xf32>
    %c0_40 = arith.constant 0 : index
    %c0_41 = arith.constant 0 : index
    %65 = vector.load %arg14[%c0_40, %c0_41] : memref<16x32xf32, #tpu.memory_space<vmem>>, vector<16x32xf32>
    %c0_42 = arith.constant 0 : index
    %c0_43 = arith.constant 0 : index
    %66 = vector.load %arg15[%c0_42, %c0_43] : memref<16x1xf32, #tpu.memory_space<vmem>>, vector<16x1xf32>
    %c0_44 = arith.constant 0 : index
    %c0_45 = arith.constant 0 : index
    %67 = vector.load %arg16[%c0_44, %c0_45] : memref<16x8xf32, #tpu.memory_space<vmem>>, vector<16x8xf32>
    %c0_46 = arith.constant 0 : index
    %c0_47 = arith.constant 0 : index
    %68 = vector.load %arg17[%c0_46, %c0_47] : memref<16x1xf32, #tpu.memory_space<vmem>>, vector<16x1xf32>
    %69 = tpu.iota {dimensions = array<i32: 0>} : vector<128x128xi32>
    %70 = tpu.iota {dimensions = array<i32: 1>} : vector<128x128xi32>
    %c4_i32 = arith.constant 4 : i32
    %71 = vector.broadcast %c4_i32 : i32 to vector<128x128xi32>
    %72 = arith.addi %69, %71 : vector<128x128xi32>
    %73 = arith.cmpi eq, %70, %72 : vector<128x128xi32>
    %74 = arith.extui %73 : vector<128x128xi1> to vector<128x128xi32>
    %75 = arith.sitofp %74 : vector<128x128xi32> to vector<128x128xf32>
    %cst_48 = arith.constant dense<0.000000e+00> : vector<8x128xf32>
    %76 = tpu.matmul %62, %75, %cst_48 {dimension_numbers = #tpu.dot_dimension_numbers<[1], [0], [0], [1], [0, 0, 1, 1], [], []>} : vector<8x128xf32>, vector<128x128xf32>, vector<8x128xf32> -> vector<8x128xf32>
    %77 = tpu.concatenate %76, %62 in 0 : vector<8x128xf32>, vector<8x128xf32> -> vector<16x128xf32>
    %cst_49 = arith.constant dense<0.000000e+00> : vector<16x128xf32>
    %78 = tpu.matmul %63, %77, %cst_49 {dimension_numbers = #tpu.dot_dimension_numbers<[1], [0], [0], [1], [0, 0, 1, 1], [], []>} : vector<16x16xf32>, vector<16x128xf32>, vector<16x128xf32> -> vector<16x128xf32>
    %79 = vector.broadcast %64 : vector<16x1xf32> to vector<16x128xf32>
    %80 = arith.addf %78, %79 : vector<16x128xf32>
    %cst_50 = arith.constant 0.000000e+00 : f32
    %81 = vector.broadcast %cst_50 : f32 to vector<16x128xf32>
    %82 = arith.maximumf %80, %81 : vector<16x128xf32>
    %cst_51 = arith.constant dense<0.000000e+00> : vector<16x128xf32>
    %83 = tpu.matmul %82, %75, %cst_51 {dimension_numbers = #tpu.dot_dimension_numbers<[1], [0], [0], [1], [0, 0, 1, 1], [], []>} : vector<16x128xf32>, vector<128x128xf32>, vector<16x128xf32> -> vector<16x128xf32>
    %84 = tpu.concatenate %83, %82 in 0 : vector<16x128xf32>, vector<16x128xf32> -> vector<32x128xf32>
    %cst_52 = arith.constant dense<0.000000e+00> : vector<16x128xf32>
    %85 = tpu.matmul %65, %84, %cst_52 {dimension_numbers = #tpu.dot_dimension_numbers<[1], [0], [0], [1], [0, 0, 1, 1], [], []>} : vector<16x32xf32>, vector<32x128xf32>, vector<16x128xf32> -> vector<16x128xf32>
    %86 = vector.broadcast %66 : vector<16x1xf32> to vector<16x128xf32>
    %87 = arith.addf %85, %86 : vector<16x128xf32>
    %cst_53 = arith.constant 0.000000e+00 : f32
    %88 = vector.broadcast %cst_53 : f32 to vector<16x128xf32>
    %89 = arith.maximumf %87, %88 : vector<16x128xf32>
    %cst_54 = arith.constant dense<0.000000e+00> : vector<16x128xf32>
    %90 = tpu.matmul %67, %62, %cst_54 {dimension_numbers = #tpu.dot_dimension_numbers<[1], [0], [0], [1], [0, 0, 1, 1], [], []>} : vector<16x8xf32>, vector<8x128xf32>, vector<16x128xf32> -> vector<16x128xf32>
    %91 = vector.broadcast %68 : vector<16x1xf32> to vector<16x128xf32>
    %92 = arith.addf %90, %91 : vector<16x128xf32>
    %93 = arith.addf %89, %92 : vector<16x128xf32>
    %cst_55 = arith.constant 0.000000e+00 : f32
    %94 = vector.broadcast %cst_55 : f32 to vector<16x128xf32>
    %95 = arith.maximumf %93, %94 : vector<16x128xf32>
    %c0_56 = arith.constant 0 : index
    %c0_57 = arith.constant 0 : index
    %c0_58 = arith.constant 0 : index
    %96 = vector.load %arg18[%c0_56, %c0_57, %c0_58] : memref<2x128x25xf32, #tpu.memory_space<vmem>>, vector<1x128x25xf32>
    %97 = vector.shape_cast %96 : vector<1x128x25xf32> to vector<128x25xf32>
    %cst_59 = arith.constant dense<0.000000e+00> : vector<16x25xf32>
    %98 = tpu.matmul %95, %97, %cst_59 {dimension_numbers = #tpu.dot_dimension_numbers<[1], [0], [0], [1], [0, 0, 1, 1], [], []>} : vector<16x128xf32>, vector<128x25xf32>, vector<16x25xf32> -> vector<16x25xf32>
    %c1 = arith.constant 1 : index
    %c0_60 = arith.constant 0 : index
    %c0_61 = arith.constant 0 : index
    %99 = vector.load %arg18[%c1, %c0_60, %c0_61] : memref<2x128x25xf32, #tpu.memory_space<vmem>>, vector<1x128x25xf32>
    %100 = vector.shape_cast %99 : vector<1x128x25xf32> to vector<128x25xf32>
    %cst_62 = arith.constant dense<0.000000e+00> : vector<16x25xf32>
    %101 = tpu.matmul %95, %100, %cst_62 {dimension_numbers = #tpu.dot_dimension_numbers<[1], [0], [0], [1], [0, 0, 1, 1], [], []>} : vector<16x128xf32>, vector<128x25xf32>, vector<16x25xf32> -> vector<16x25xf32>
    %102 = arith.maximumf %98, %101 : vector<16x25xf32>
    %c0_63 = arith.constant 0 : index
    %c0_64 = arith.constant 0 : index
    %c0_65 = arith.constant 0 : index
    %103 = vector.load %arg19[%c0_63, %c0_64, %c0_65] : memref<1x16x25xf32, #tpu.memory_space<vmem>>, vector<1x16x25xf32>
    %104 = vector.shape_cast %103 : vector<1x16x25xf32> to vector<16x25xf32>
    %105 = vector.shape_cast %102 : vector<16x25xf32> to vector<1x16x25xf32>
    tpu.vector_store %arg19[%c0_63, %c0_64, %c0_65], %105 {strides = array<i32>} : memref<1x16x25xf32, #tpu.memory_space<vmem>>, vector<1x16x25xf32>,
    return
  }
  func.func @transform_0(%arg0: i32) -> (i32, i32, i32) {
    %c0_i32 = arith.constant 0 : i32
    %c0_i32_0 = arith.constant 0 : i32
    %c0_i32_1 = arith.constant 0 : i32
    return %arg0, %c0_i32, %c0_i32_0 : i32, i32, i32
  }
  func.func @transform_1(%arg0: i32) -> (i32, i32) {
    %c0_i32 = arith.constant 0 : i32
    %c0_i32_0 = arith.constant 0 : i32
    %c0_i32_1 = arith.constant 0 : i32
    return %c0_i32, %c0_i32_0 : i32, i32
  }
  func.func @transform_2(%arg0: i32) -> (i32, i32) {
    %c0_i32 = arith.constant 0 : i32
    %c0_i32_0 = arith.constant 0 : i32
    %c0_i32_1 = arith.constant 0 : i32
    return %c0_i32, %c0_i32_0 : i32, i32
  }
  func.func @transform_3(%arg0: i32) -> (i32, i32) {
    %c0_i32 = arith.constant 0 : i32
    %c0_i32_0 = arith.constant 0 : i32
    %c0_i32_1 = arith.constant 0 : i32
    return %c0_i32, %c0_i32_0 : i32, i32
  }
  func.func @transform_4(%arg0: i32) -> (i32, i32) {
    %c0_i32 = arith.constant 0 : i32
    %c0_i32_0 = arith.constant 0 : i32
    %c0_i32_1 = arith.constant 0 : i32
    return %c0_i32, %c0_i32_0 : i32, i32
  }
  func.func @transform_5(%arg0: i32) -> (i32, i32) {
    %c0_i32 = arith.constant 0 : i32
    %c0_i32_0 = arith.constant 0 : i32
    %c0_i32_1 = arith.constant 0 : i32
    return %c0_i32, %c0_i32_0 : i32, i32
  }
  func.func @transform_6(%arg0: i32) -> (i32, i32) {
    %c0_i32 = arith.constant 0 : i32
    %c0_i32_0 = arith.constant 0 : i32
    %c0_i32_1 = arith.constant 0 : i32
    return %c0_i32, %c0_i32_0 : i32, i32
  }
  func.func @transform_7(%arg0: i32) -> (i32, i32) {
    %c0_i32 = arith.constant 0 : i32
    %c0_i32_0 = arith.constant 0 : i32
    %c0_i32_1 = arith.constant 0 : i32
    return %c0_i32, %c0_i32_0 : i32, i32
  }
  func.func @transform_8(%arg0: i32) -> (i32, i32) {
    %c0_i32 = arith.constant 0 : i32
    %c0_i32_0 = arith.constant 0 : i32
    %c0_i32_1 = arith.constant 0 : i32
    return %c0_i32, %c0_i32_0 : i32, i32
  }
  func.func @transform_9(%arg0: i32) -> (i32, i32) {
    %c0_i32 = arith.constant 0 : i32
    %c0_i32_0 = arith.constant 0 : i32
    %c0_i32_1 = arith.constant 0 : i32
    return %c0_i32, %c0_i32_0 : i32, i32
  }
  func.func @transform_10(%arg0: i32) -> (i32, i32) {
    %c0_i32 = arith.constant 0 : i32
    %c0_i32_0 = arith.constant 0 : i32
    %c0_i32_1 = arith.constant 0 : i32
    return %c0_i32, %c0_i32_0 : i32, i32
  }
  func.func @transform_11(%arg0: i32) -> (i32, i32) {
    %c0_i32 = arith.constant 0 : i32
    %c0_i32_0 = arith.constant 0 : i32
    %c0_i32_1 = arith.constant 0 : i32
    return %c0_i32, %c0_i32_0 : i32, i32
  }
  func.func @transform_12(%arg0: i32) -> (i32, i32) {
    %c0_i32 = arith.constant 0 : i32
    %c0_i32_0 = arith.constant 0 : i32
    %c0_i32_1 = arith.constant 0 : i32
    return %c0_i32, %c0_i32_0 : i32, i32
  }
  func.func @transform_13(%arg0: i32) -> (i32, i32) {
    %c0_i32 = arith.constant 0 : i32
    %c0_i32_0 = arith.constant 0 : i32
    %c0_i32_1 = arith.constant 0 : i32
    return %c0_i32, %c0_i32_0 : i32, i32
  }
  func.func @transform_14(%arg0: i32) -> (i32, i32) {
    %c0_i32 = arith.constant 0 : i32
    %c0_i32_0 = arith.constant 0 : i32
    %c0_i32_1 = arith.constant 0 : i32
    return %c0_i32, %c0_i32_0 : i32, i32
  }
  func.func @transform_15(%arg0: i32) -> (i32, i32) {
    %c0_i32 = arith.constant 0 : i32
    %c0_i32_0 = arith.constant 0 : i32
    %c0_i32_1 = arith.constant 0 : i32
    return %c0_i32, %c0_i32_0 : i32, i32
  }
  func.func @transform_16(%arg0: i32) -> (i32, i32) {
    %c0_i32 = arith.constant 0 : i32
    %c0_i32_0 = arith.constant 0 : i32
    %c0_i32_1 = arith.constant 0 : i32
    return %c0_i32, %c0_i32_0 : i32, i32
  }
  func.func @transform_17(%arg0: i32) -> (i32, i32, i32) {
    %c0_i32 = arith.constant 0 : i32
    %c0_i32_0 = arith.constant 0 : i32
    %c0_i32_1 = arith.constant 0 : i32
    %c0_i32_2 = arith.constant 0 : i32
    return %c0_i32, %c0_i32_0, %c0_i32_1 : i32, i32, i32
  }
  func.func @transform_18(%arg0: i32) -> (i32, i32, i32) {
    %c0_i32 = arith.constant 0 : i32
    %c0_i32_0 = arith.constant 0 : i32
    %c0_i32_1 = arith.constant 0 : i32
    return %arg0, %c0_i32, %c0_i32_0 : i32, i32, i32
  }
}

module attributes {stable_mosaic.version = 11 : i64} {
  func.func @_head_kernel(%arg0: i32, %arg1: memref<2x400xf32, #tpu.memory_space<vmem>>, %arg2: memref<400x1024xf32, #tpu.memory_space<vmem>>, %arg3: memref<1x1024xf32, #tpu.memory_space<vmem>>, %arg4: memref<1024x5xf32, #tpu.memory_space<vmem>>, %arg5: memref<1x5xf32, #tpu.memory_space<vmem>>, %arg6: memref<2x5xf32, #tpu.memory_space<vmem>>) attributes {dimension_semantics = [#tpu.dimension_semantics<arbitrary>], iteration_bounds = array<i64: 1>, scalar_prefetch = 0 : i64, scratch_operands = 0 : i64, tpu.core_type = #tpu.core_type<tc>, window_params = [{pipeline_mode = #tpu.pipeline_mode<synchronous>, transform_indices = @transform_0, window_bounds = array<i64: 2, 400>}, {pipeline_mode = #tpu.pipeline_mode<synchronous>, transform_indices = @transform_1, window_bounds = array<i64: 400, 1024>}, {pipeline_mode = #tpu.pipeline_mode<synchronous>, transform_indices = @transform_2, window_bounds = array<i64: 1, 1024>}, {pipeline_mode = #tpu.pipeline_mode<synchronous>, transform_indices = @transform_3, window_bounds = array<i64: 1024, 5>}, {pipeline_mode = #tpu.pipeline_mode<synchronous>, transform_indices = @transform_4, window_bounds = array<i64: 1, 5>}, {pipeline_mode = #tpu.pipeline_mode<synchronous>, transform_indices = @transform_5, window_bounds = array<i64: 2, 5>}]} {
    %c0 = arith.constant 0 : index
    %c0_0 = arith.constant 0 : index
    %0 = vector.load %arg1[%c0, %c0_0] : memref<2x400xf32, #tpu.memory_space<vmem>>, vector<2x400xf32>
    %c0_1 = arith.constant 0 : index
    %c0_2 = arith.constant 0 : index
    %1 = vector.load %arg2[%c0_1, %c0_2] : memref<400x1024xf32, #tpu.memory_space<vmem>>, vector<400x1024xf32>
    %cst = arith.constant dense<0.000000e+00> : vector<2x1024xf32>
    %2 = tpu.matmul %0, %1, %cst {dimension_numbers = #tpu.dot_dimension_numbers<[1], [0], [0], [1], [0, 0, 1, 1], [], []>} : vector<2x400xf32>, vector<400x1024xf32>, vector<2x1024xf32> -> vector<2x1024xf32>
    %c0_3 = arith.constant 0 : index
    %c0_4 = arith.constant 0 : index
    %3 = vector.load %arg3[%c0_3, %c0_4] : memref<1x1024xf32, #tpu.memory_space<vmem>>, vector<1x1024xf32>
    %4 = vector.broadcast %3 : vector<1x1024xf32> to vector<2x1024xf32>
    %5 = arith.addf %2, %4 : vector<2x1024xf32>
    %c0_5 = arith.constant 0 : index
    %c0_6 = arith.constant 0 : index
    %6 = vector.load %arg4[%c0_5, %c0_6] : memref<1024x5xf32, #tpu.memory_space<vmem>>, vector<1024x5xf32>
    %cst_7 = arith.constant dense<0.000000e+00> : vector<2x5xf32>
    %7 = tpu.matmul %5, %6, %cst_7 {dimension_numbers = #tpu.dot_dimension_numbers<[1], [0], [0], [1], [0, 0, 1, 1], [], []>} : vector<2x1024xf32>, vector<1024x5xf32>, vector<2x5xf32> -> vector<2x5xf32>
    %c0_8 = arith.constant 0 : index
    %c0_9 = arith.constant 0 : index
    %8 = vector.load %arg5[%c0_8, %c0_9] : memref<1x5xf32, #tpu.memory_space<vmem>>, vector<1x5xf32>
    %9 = vector.broadcast %8 : vector<1x5xf32> to vector<2x5xf32>
    %10 = arith.addf %7, %9 : vector<2x5xf32>
    %c0_10 = arith.constant 0 : index
    %c0_11 = arith.constant 0 : index
    %11 = vector.load %arg6[%c0_10, %c0_11] : memref<2x5xf32, #tpu.memory_space<vmem>>, vector<2x5xf32>
    tpu.vector_store %arg6[%c0_10, %c0_11], %10 {strides = array<i32>} : memref<2x5xf32, #tpu.memory_space<vmem>>, vector<2x5xf32>,
    return
  }
  func.func @transform_0(%arg0: i32) -> (i32, i32) {
    %c0_i32 = arith.constant 0 : i32
    %c0_i32_0 = arith.constant 0 : i32
    %c0_i32_1 = arith.constant 0 : i32
    return %c0_i32, %c0_i32_0 : i32, i32
  }
  func.func @transform_1(%arg0: i32) -> (i32, i32) {
    %c0_i32 = arith.constant 0 : i32
    %c0_i32_0 = arith.constant 0 : i32
    %c0_i32_1 = arith.constant 0 : i32
    return %c0_i32, %c0_i32_0 : i32, i32
  }
  func.func @transform_2(%arg0: i32) -> (i32, i32) {
    %c0_i32 = arith.constant 0 : i32
    %c0_i32_0 = arith.constant 0 : i32
    %c0_i32_1 = arith.constant 0 : i32
    return %c0_i32, %c0_i32_0 : i32, i32
  }
  func.func @transform_3(%arg0: i32) -> (i32, i32) {
    %c0_i32 = arith.constant 0 : i32
    %c0_i32_0 = arith.constant 0 : i32
    %c0_i32_1 = arith.constant 0 : i32
    return %c0_i32, %c0_i32_0 : i32, i32
  }
  func.func @transform_4(%arg0: i32) -> (i32, i32) {
    %c0_i32 = arith.constant 0 : i32
    %c0_i32_0 = arith.constant 0 : i32
    %c0_i32_1 = arith.constant 0 : i32
    return %c0_i32, %c0_i32_0 : i32, i32
  }
  func.func @transform_5(%arg0: i32) -> (i32, i32) {
    %c0_i32 = arith.constant 0 : i32
    %c0_i32_0 = arith.constant 0 : i32
    %c0_i32_1 = arith.constant 0 : i32
    return %c0_i32, %c0_i32_0 : i32, i32
  }
}

</mosaic_0001>

<llo_original>
// kernel: base_tcn_forward.2
$region0: #{base_tcn_forward.2}
  #allocation0 [shape = 'u32[]', space=smem, size = 0x4, offset = 0x4, fixed_abs, tag = 'smem constant byte address 0x4 - core index']
  #allocation1 [shape = 'u32[72,128]{1,0:T(1,128)}', space=vmem, size = 0x9000, scoped, tag = 'internal scratch']
  %s0 = inlined_call_operand.vmem [shape: f32[2,8,128], index: 0, kind: input, shape index: {}]
  %s1 = inlined_call_operand.vmem [shape: f32[8,16], index: 1, kind: input, shape index: {}]
  %s2 = inlined_call_operand.vmem [shape: f32[8,1], index: 2, kind: input, shape index: {}]
  %s3 = inlined_call_operand.vmem [shape: f32[8,16], index: 3, kind: input, shape index: {}]
  %s4 = inlined_call_operand.vmem [shape: f32[8,1], index: 4, kind: input, shape index: {}]
  %s5 = inlined_call_operand.vmem [shape: f32[8,8], index: 5, kind: input, shape index: {}]
  %s6 = inlined_call_operand.vmem [shape: f32[8,1], index: 6, kind: input, shape index: {}]
  %s7 = inlined_call_operand.vmem [shape: f32[8,16], index: 7, kind: input, shape index: {}]
  %s8 = inlined_call_operand.vmem [shape: f32[8,1], index: 8, kind: input, shape index: {}]
  %s9 = inlined_call_operand.vmem [shape: f32[8,16], index: 9, kind: input, shape index: {}]
  %s10 = inlined_call_operand.vmem [shape: f32[8,1], index: 10, kind: input, shape index: {}]
  %s11 = inlined_call_operand.vmem [shape: f32[16,16], index: 11, kind: input, shape index: {}]
  %s12 = inlined_call_operand.vmem [shape: f32[16,1], index: 12, kind: input, shape index: {}]
  %s13 = inlined_call_operand.vmem [shape: f32[16,32], index: 13, kind: input, shape index: {}]
  %s14 = inlined_call_operand.vmem [shape: f32[16,1], index: 14, kind: input, shape index: {}]
  %s15 = inlined_call_operand.vmem [shape: f32[16,8], index: 15, kind: input, shape index: {}]
  %s16 = inlined_call_operand.vmem [shape: f32[16,1], index: 16, kind: input, shape index: {}]
  %s17 = inlined_call_operand.vmem [shape: f32[2,128,25], index: 17, kind: input, shape index: {}]
  %s18 = inlined_call_operand.vmem [shape: f32[2,16,25], index: 18, kind: output, shape index: {}]
  %s19 = sld [smem:[#allocation0]]
  $region105: #{base_tcn_forward.2} parent=0
    _
  %s21 = ssub.s32 1, %s19
  %s22 = scalar_select 0, %s21, %s19
  loop: start=0, step=1, limit=4
  $region2: #{base_tcn_forward.2} parent=0 // loop_pre_header
    _
  $region3: #{base_tcn_forward.2} parent=0 // loop_header
    %s24 = sphi 0, %s28
    %p25 = scmp.ge.s32.totalorder %s24, 4
    %s34 = sphi 0, %s36
    %s37 = sphi 0, %s34
    %s38 = sphi 0, %s37
    %s54 = sphi 0, %s38
    %s58 = sphi 0, %s58
    %s60 = sphi 0, %s58
    %s61 = sphi 0, %s60
    %s75 = sphi 0, %s61
    %s79 = sphi 0, %s79
    %s81 = sphi 0, %s79
    %s82 = sphi 0, %s81
    %s96 = sphi 0, %s82
    %s100 = sphi 0, %s100
    %s102 = sphi 0, %s100
    %s103 = sphi 0, %s102
    %s117 = sphi 0, %s103
    %s121 = sphi 0, %s121
    %s123 = sphi 0, %s121
    %s124 = sphi 0, %s123
    %s138 = sphi 0, %s124
    %s142 = sphi 0, %s142
    %s144 = sphi 0, %s142
    %s145 = sphi 0, %s144
    %s159 = sphi 0, %s145
    %s163 = sphi 0, %s163
    %s165 = sphi 0, %s163
    %s166 = sphi 0, %s165
    %s180 = sphi 0, %s166
    %s184 = sphi 0, %s184
    %s186 = sphi 0, %s184
    %s187 = sphi 0, %s186
    %s201 = sphi 0, %s187
    %s205 = sphi 0, %s205
    %s207 = sphi 0, %s205
    %s208 = sphi 0, %s207
    %s222 = sphi 0, %s208
    %s226 = sphi 0, %s226
    %s228 = sphi 0, %s226
    %s229 = sphi 0, %s228
    %s243 = sphi 0, %s229
    %s247 = sphi 0, %s247
    %s249 = sphi 0, %s247
    %s250 = sphi 0, %s249
    %s264 = sphi 0, %s250
    %s268 = sphi 0, %s268
    %s270 = sphi 0, %s268
    %s271 = sphi 0, %s270
    %s285 = sphi 0, %s271
    %s289 = sphi 0, %s289
    %s291 = sphi 0, %s289
    %s292 = sphi 0, %s291
    %s306 = sphi 0, %s292
    %s310 = sphi 0, %s310
    %s312 = sphi 0, %s310
    %s313 = sphi 0, %s312
    %s327 = sphi 0, %s313
    %s331 = sphi 0, %s331
    %s333 = sphi 0, %s331
    %s334 = sphi 0, %s333
    %s348 = sphi 0, %s334
    %s352 = sphi 0, %s352
    %s354 = sphi 0, %s352
    %s355 = sphi 0, %s354
    %s369 = sphi 0, %s355
    %s373 = sphi 0, %s373
    %s375 = sphi 0, %s373
    %s376 = sphi 0, %s375
    %s390 = sphi 0, %s376
    %s394 = sphi 0, %s394
    %s396 = sphi 0, %s394
    %s397 = sphi 0, %s396
    %s411 = sphi 0, %s397
    %s417 = sphi 0, %s419
    %s420 = sphi 0, %s417
    %s421 = sphi 0, %s420
    %s437 = sphi 0, %s421
  $region4: #{base_tcn_forward.2} parent=0 // loop_header_branch
    %27 = sbr.rel (%p25) target = $region8
  $region5: #{base_tcn_forward.2} parent=0 // loop_body
    %s29 = ssub.s32 %s24, 1
    %s30 = ssub.s32 %s24, 2
    %s31 = sadd.s32 %s24, 1
    %s32 = ssub.s32 %s24, %s31
    %p33 = scmp.eq.s32.totalorder %s32, 0
    %s35 = sadd.s32 %s34, 1
    %s36 = scalar_select %p33, %s34, %s35
    %p39 = pneg %p33
    %p40 = scmp.eq.s32.totalorder %s24, 1
    %p41 = por %p39, %p40
    %p42 = scmp.ne.s32.totalorder %s34, %s37
    %p43 = scmp.eq.s32.totalorder %s24, 0
    %p44 = por %p42, %p43
    %p45 = scmp.ne.s32.totalorder %s34, %s37
    %p46 = scmp.eq.s32.totalorder %s29, 1
    %p47 = por %p45, %p46
    %p48 = scmp.ne.s32.totalorder %s37, %s38
    %p49 = scmp.eq.s32.totalorder %s29, 0
    %p50 = por %p48, %p49
    %p51 = scmp.ne.s32.totalorder %s37, %s38
    %p52 = scmp.eq.s32.totalorder %s30, 1
    %p53 = por %p51, %p52
    %p55 = scmp.ne.s32.totalorder %s38, %s54
    %p56 = scmp.eq.s32.totalorder %s30, 0
    %p57 = por %p55, %p56
    %s59 = sadd.s32 %s58, 1
    %p62 = scmp.eq.s32.totalorder %s24, 1
    %p63 = scmp.ne.s32.totalorder %s58, %s60
    %p64 = scmp.eq.s32.totalorder %s24, 0
    %p65 = por %p63, %p64
    %p66 = scmp.ne.s32.totalorder %s58, %s60
    %p67 = scmp.eq.s32.totalorder %s29, 1
    %p68 = por %p66, %p67
    %p69 = scmp.ne.s32.totalorder %s60, %s61
    %p70 = scmp.eq.s32.totalorder %s29, 0
    %p71 = por %p69, %p70
    %p72 = scmp.ne.s32.totalorder %s60, %s61
    %p73 = scmp.eq.s32.totalorder %s30, 1
    %p74 = por %p72, %p73
    %p76 = scmp.ne.s32.totalorder %s61, %s75
    %p77 = scmp.eq.s32.totalorder %s30, 0
    %p78 = por %p76, %p77
    %s80 = sadd.s32 %s79, 1
    %p83 = scmp.eq.s32.totalorder %s24, 1
    %p84 = scmp.ne.s32.totalorder %s79, %s81
    %p85 = scmp.eq.s32.totalorder %s24, 0
    %p86 = por %p84, %p85
    %p87 = scmp.ne.s32.totalorder %s79, %s81
    %p88 = scmp.eq.s32.totalorder %s29, 1
    %p89 = por %p87, %p88
    %p90 = scmp.ne.s32.totalorder %s81, %s82
    %p91 = scmp.eq.s32.totalorder %s29, 0
    %p92 = por %p90, %p91
    %p93 = scmp.ne.s32.totalorder %s81, %s82
    %p94 = scmp.eq.s32.totalorder %s30, 1
    %p95 = por %p93, %p94
    %p97 = scmp.ne.s32.totalorder %s82, %s96
    %p98 = scmp.eq.s32.totalorder %s30, 0
    %p99 = por %p97, %p98
    %s101 = sadd.s32 %s100, 1
    %p104 = scmp.eq.s32.totalorder %s24, 1
    %p105 = scmp.ne.s32.totalorder %s100, %s102
    %p106 = scmp.eq.s32.totalorder %s24, 0
    %p107 = por %p105, %p106
    %p108 = scmp.ne.s32.totalorder %s100, %s102
    %p109 = scmp.eq.s32.totalorder %s29, 1
    %p110 = por %p108, %p109
    %p111 = scmp.ne.s32.totalorder %s102, %s103
    %p112 = scmp.eq.s32.totalorder %s29, 0
    %p113 = por %p111, %p112
    %p114 = scmp.ne.s32.totalorder %s102, %s103
    %p115 = scmp.eq.s32.totalorder %s30, 1
    %p116 = por %p114, %p115
    %p118 = scmp.ne.s32.totalorder %s103, %s117
    %p119 = scmp.eq.s32.totalorder %s30, 0
    %p120 = por %p118, %p119
    %s122 = sadd.s32 %s121, 1
    %p125 = scmp.eq.s32.totalorder %s24, 1
    %p126 = scmp.ne.s32.totalorder %s121, %s123
    %p127 = scmp.eq.s32.totalorder %s24, 0
    %p128 = por %p126, %p127
    %p129 = scmp.ne.s32.totalorder %s121, %s123
    %p130 = scmp.eq.s32.totalorder %s29, 1
    %p131 = por %p129, %p130
    %p132 = scmp.ne.s32.totalorder %s123, %s124
    %p133 = scmp.eq.s32.totalorder %s29, 0
    %p134 = por %p132, %p133
    %p135 = scmp.ne.s32.totalorder %s123, %s124
    %p136 = scmp.eq.s32.totalorder %s30, 1
    %p137 = por %p135, %p136
    %p139 = scmp.ne.s32.totalorder %s124, %s138
    %p140 = scmp.eq.s32.totalorder %s30, 0
    %p141 = por %p139, %p140
    %s143 = sadd.s32 %s142, 1
    %p146 = scmp.eq.s32.totalorder %s24, 1
    %p147 = scmp.ne.s32.totalorder %s142, %s144
    %p148 = scmp.eq.s32.totalorder %s24, 0
    %p149 = por %p147, %p148
    %p150 = scmp.ne.s32.totalorder %s142, %s144
    %p151 = scmp.eq.s32.totalorder %s29, 1
    %p152 = por %p150, %p151
    %p153 = scmp.ne.s32.totalorder %s144, %s145
    %p154 = scmp.eq.s32.totalorder %s29, 0
    %p155 = por %p153, %p154
    %p156 = scmp.ne.s32.totalorder %s144, %s145
    %p157 = scmp.eq.s32.totalorder %s30, 1
    %p158 = por %p156, %p157
    %p160 = scmp.ne.s32.totalorder %s145, %s159
    %p161 = scmp.eq.s32.totalorder %s30, 0
    %p162 = por %p160, %p161
    %s164 = sadd.s32 %s163, 1
    %p167 = scmp.eq.s32.totalorder %s24, 1
    %p168 = scmp.ne.s32.totalorder %s163, %s165
    %p169 = scmp.eq.s32.totalorder %s24, 0
    %p170 = por %p168, %p169
    %p171 = scmp.ne.s32.totalorder %s163, %s165
    %p172 = scmp.eq.s32.totalorder %s29, 1
    %p173 = por %p171, %p172
    %p174 = scmp.ne.s32.totalorder %s165, %s166
    %p175 = scmp.eq.s32.totalorder %s29, 0
    %p176 = por %p174, %p175
    %p177 = scmp.ne.s32.totalorder %s165, %s166
    %p178 = scmp.eq.s32.totalorder %s30, 1
    %p179 = por %p177, %p178
    %p181 = scmp.ne.s32.totalorder %s166, %s180
    %p182 = scmp.eq.s32.totalorder %s30, 0
    %p183 = por %p181, %p182
    %s185 = sadd.s32 %s184, 1
    %p188 = scmp.eq.s32.totalorder %s24, 1
    %p189 = scmp.ne.s32.totalorder %s184, %s186
    %p190 = scmp.eq.s32.totalorder %s24, 0
    %p191 = por %p189, %p190
    %p192 = scmp.ne.s32.totalorder %s184, %s186
    %p193 = scmp.eq.s32.totalorder %s29, 1
    %p194 = por %p192, %p193
    %p195 = scmp.ne.s32.totalorder %s186, %s187
    %p196 = scmp.eq.s32.totalorder %s29, 0
    %p197 = por %p195, %p196
    %p198 = scmp.ne.s32.totalorder %s186, %s187
    %p199 = scmp.eq.s32.totalorder %s30, 1
    %p200 = por %p198, %p199
    %p202 = scmp.ne.s32.totalorder %s187, %s201
    %p203 = scmp.eq.s32.totalorder %s30, 0
    %p204 = por %p202, %p203
    %s206 = sadd.s32 %s205, 1
    %p209 = scmp.eq.s32.totalorder %s24, 1
    %p210 = scmp.ne.s32.totalorder %s205, %s207
    %p211 = scmp.eq.s32.totalorder %s24, 0
    %p212 = por %p210, %p211
    %p213 = scmp.ne.s32.totalorder %s205, %s207
    %p214 = scmp.eq.s32.totalorder %s29, 1
    %p215 = por %p213, %p214
    %p216 = scmp.ne.s32.totalorder %s207, %s208
    %p217 = scmp.eq.s32.totalorder %s29, 0
    %p218 = por %p216, %p217
    %p219 = scmp.ne.s32.totalorder %s207, %s208
    %p220 = scmp.eq.s32.totalorder %s30, 1
    %p221 = por %p219, %p220
    %p223 = scmp.ne.s32.totalorder %s208, %s222
    %p224 = scmp.eq.s32.totalorder %s30, 0
    %p225 = por %p223, %p224
    %s227 = sadd.s32 %s226, 1
    %p230 = scmp.eq.s32.totalorder %s24, 1
    %p231 = scmp.ne.s32.totalorder %s226, %s228
    %p232 = scmp.eq.s32.totalorder %s24, 0
    %p233 = por %p231, %p232
    %p234 = scmp.ne.s32.totalorder %s226, %s228
    %p235 = scmp.eq.s32.totalorder %s29, 1
    %p236 = por %p234, %p235
    %p237 = scmp.ne.s32.totalorder %s228, %s229
    %p238 = scmp.eq.s32.totalorder %s29, 0
    %p239 = por %p237, %p238
    %p240 = scmp.ne.s32.totalorder %s228, %s229
    %p241 = scmp.eq.s32.totalorder %s30, 1
    %p242 = por %p240, %p241
    %p244 = scmp.ne.s32.totalorder %s229, %s243
    %p245 = scmp.eq.s32.totalorder %s30, 0
    %p246 = por %p244, %p245
    %s248 = sadd.s32 %s247, 1
    %p251 = scmp.eq.s32.totalorder %s24, 1
    %p252 = scmp.ne.s32.totalorder %s247, %s249
    %p253 = scmp.eq.s32.totalorder %s24, 0
    %p254 = por %p252, %p253
    %p255 = scmp.ne.s32.totalorder %s247, %s249
    %p256 = scmp.eq.s32.totalorder %s29, 1
    %p257 = por %p255, %p256
    %p258 = scmp.ne.s32.totalorder %s249, %s250
    %p259 = scmp.eq.s32.totalorder %s29, 0
    %p260 = por %p258, %p259
    %p261 = scmp.ne.s32.totalorder %s249, %s250
    %p262 = scmp.eq.s32.totalorder %s30, 1
    %p263 = por %p261, %p262
    %p265 = scmp.ne.s32.totalorder %s250, %s264
    %p266 = scmp.eq.s32.totalorder %s30, 0
    %p267 = por %p265, %p266
    %s269 = sadd.s32 %s268, 1
    %p272 = scmp.eq.s32.totalorder %s24, 1
    %p273 = scmp.ne.s32.totalorder %s268, %s270
    %p274 = scmp.eq.s32.totalorder %s24, 0
    %p275 = por %p273, %p274
    %p276 = scmp.ne.s32.totalorder %s268, %s270
    %p277 = scmp.eq.s32.totalorder %s29, 1
    %p278 = por %p276, %p277
    %p279 = scmp.ne.s32.totalorder %s270, %s271
    %p280 = scmp.eq.s32.totalorder %s29, 0
    %p281 = por %p279, %p280
    %p282 = scmp.ne.s32.totalorder %s270, %s271
    %p283 = scmp.eq.s32.totalorder %s30, 1
    %p284 = por %p282, %p283
    %p286 = scmp.ne.s32.totalorder %s271, %s285
    %p287 = scmp.eq.s32.totalorder %s30, 0
    %p288 = por %p286, %p287
    %s290 = sadd.s32 %s289, 1
    %p293 = scmp.eq.s32.totalorder %s24, 1
    %p294 = scmp.ne.s32.totalorder %s289, %s291
    %p295 = scmp.eq.s32.totalorder %s24, 0
    %p296 = por %p294, %p295
    %p297 = scmp.ne.s32.totalorder %s289, %s291
    %p298 = scmp.eq.s32.totalorder %s29, 1
    %p299 = por %p297, %p298
    %p300 = scmp.ne.s32.totalorder %s291, %s292
    %p301 = scmp.eq.s32.totalorder %s29, 0
    %p302 = por %p300, %p301
    %p303 = scmp.ne.s32.totalorder %s291, %s292
    %p304 = scmp.eq.s32.totalorder %s30, 1
    %p305 = por %p303, %p304
    %p307 = scmp.ne.s32.totalorder %s292, %s306
    %p308 = scmp.eq.s32.totalorder %s30, 0
    %p309 = por %p307, %p308
    %s311 = sadd.s32 %s310, 1
    %p314 = scmp.eq.s32.totalorder %s24, 1
    %p315 = scmp.ne.s32.totalorder %s310, %s312
    %p316 = scmp.eq.s32.totalorder %s24, 0
    %p317 = por %p315, %p316
    %p318 = scmp.ne.s32.totalorder %s310, %s312
    %p319 = scmp.eq.s32.totalorder %s29, 1
    %p320 = por %p318, %p319
    %p321 = scmp.ne.s32.totalorder %s312, %s313
    %p322 = scmp.eq.s32.totalorder %s29, 0
    %p323 = por %p321, %p322
    %p324 = scmp.ne.s32.totalorder %s312, %s313
    %p325 = scmp.eq.s32.totalorder %s30, 1
    %p326 = por %p324, %p325
    %p328 = scmp.ne.s32.totalorder %s313, %s327
    %p329 = scmp.eq.s32.totalorder %s30, 0
    %p330 = por %p328, %p329
    %s332 = sadd.s32 %s331, 1
    %p335 = scmp.eq.s32.totalorder %s24, 1
    %p336 = scmp.ne.s32.totalorder %s331, %s333
    %p337 = scmp.eq.s32.totalorder %s24, 0
    %p338 = por %p336, %p337
    %p339 = scmp.ne.s32.totalorder %s331, %s333
    %p340 = scmp.eq.s32.totalorder %s29, 1
    %p341 = por %p339, %p340
    %p342 = scmp.ne.s32.totalorder %s333, %s334
    %p343 = scmp.eq.s32.totalorder %s29, 0
    %p344 = por %p342, %p343
    %p345 = scmp.ne.s32.totalorder %s333, %s334
    %p346 = scmp.eq.s32.totalorder %s30, 1
    %p347 = por %p345, %p346
    %p349 = scmp.ne.s32.totalorder %s334, %s348
    %p350 = scmp.eq.s32.totalorder %s30, 0
    %p351 = por %p349, %p350
    %s353 = sadd.s32 %s352, 1
    %p356 = scmp.eq.s32.totalorder %s24, 1
    %p357 = scmp.ne.s32.totalorder %s352, %s354
    %p358 = scmp.eq.s32.totalorder %s24, 0
    %p359 = por %p357, %p358
    %p360 = scmp.ne.s32.totalorder %s352, %s354
    %p361 = scmp.eq.s32.totalorder %s29, 1
    %p362 = por %p360, %p361
    %p363 = scmp.ne.s32.totalorder %s354, %s355
    %p364 = scmp.eq.s32.totalorder %s29, 0
    %p365 = por %p363, %p364
    %p366 = scmp.ne.s32.totalorder %s354, %s355
    %p367 = scmp.eq.s32.totalorder %s30, 1
    %p368 = por %p366, %p367
    %p370 = scmp.ne.s32.totalorder %s355, %s369
    %p371 = scmp.eq.s32.totalorder %s30, 0
    %p372 = por %p370, %p371
    %s374 = sadd.s32 %s373, 1
    %p377 = scmp.eq.s32.totalorder %s24, 1
    %p378 = scmp.ne.s32.totalorder %s373, %s375
    %p379 = scmp.eq.s32.totalorder %s24, 0
    %p380 = por %p378, %p379
    %p381 = scmp.ne.s32.totalorder %s373, %s375
    %p382 = scmp.eq.s32.totalorder %s29, 1
    %p383 = por %p381, %p382
    %p384 = scmp.ne.s32.totalorder %s375, %s376
    %p385 = scmp.eq.s32.totalorder %s29, 0
    %p386 = por %p384, %p385
    %p387 = scmp.ne.s32.totalorder %s375, %s376
    %p388 = scmp.eq.s32.totalorder %s30, 1
    %p389 = por %p387, %p388
    %p391 = scmp.ne.s32.totalorder %s376, %s390
    %p392 = scmp.eq.s32.totalorder %s30, 0
    %p393 = por %p391, %p392
    %s395 = sadd.s32 %s394, 1
    %p398 = scmp.eq.s32.totalorder %s24, 1
    %p399 = scmp.ne.s32.totalorder %s394, %s396
    %p400 = scmp.eq.s32.totalorder %s24, 0
    %p401 = por %p399, %p400
    %p402 = scmp.ne.s32.totalorder %s394, %s396
    %p403 = scmp.eq.s32.totalorder %s29, 1
    %p404 = por %p402, %p403
    %p405 = scmp.ne.s32.totalorder %s396, %s397
    %p406 = scmp.eq.s32.totalorder %s29, 0
    %p407 = por %p405, %p406
    %p408 = scmp.ne.s32.totalorder %s396, %s397
    %p409 = scmp.eq.s32.totalorder %s30, 1
    %p410 = por %p408, %p409
    %p412 = scmp.ne.s32.totalorder %s397, %s411
    %p413 = scmp.eq.s32.totalorder %s30, 0
    %p414 = por %p412, %p413
    %s415 = ssub.s32 %s24, %s31
    %p416 = scmp.eq.s32.totalorder %s415, 0
    %s418 = sadd.s32 %s417, 1
    %s419 = scalar_select %p416, %s417, %s418
    %p422 = pneg %p416
    %p423 = scmp.eq.s32.totalorder %s24, 1
    %p424 = por %p422, %p423
    %p425 = scmp.ne.s32.totalorder %s417, %s420
    %p426 = scmp.eq.s32.totalorder %s24, 0
    %p427 = por %p425, %p426
    %p428 = scmp.ne.s32.totalorder %s417, %s420
    %p429 = scmp.eq.s32.totalorder %s29, 1
    %p430 = por %p428, %p429
    %p431 = scmp.ne.s32.totalorder %s420, %s421
    %p432 = scmp.eq.s32.totalorder %s29, 0
    %p433 = por %p431, %p432
    %p434 = scmp.ne.s32.totalorder %s420, %s421
    %p435 = scmp.eq.s32.totalorder %s30, 1
    %p436 = por %p434, %p435
    %p438 = scmp.ne.s32.totalorder %s421, %s437
    %p439 = scmp.eq.s32.totalorder %s30, 0
    %p440 = por %p438, %p439
    %p441 = scmp.le.s32.totalorder 1, %s24
    %p442 = scmp.lt.s32.totalorder %s24, 3
    %p443 = pnand %p441, %p442
    %p444 = pneg %p443
    // Predicated region
    $region9: #{base_tcn_forward.2} parent=5 // pred_check
      _
    $region10: #{base_tcn_forward.2} parent=5 // pred_check_branch
      %446 = sbr.rel (%p443) target = $region12
    $region11: #{base_tcn_forward.2} parent=5 // pred_region
      %s447 = ssub.s32 %s24, 1
      // Predicated region
      $region13: #{base_tcn_forward.2} parent=11 // pred_check
        %p448 = pneg %p71
      $region14: #{base_tcn_forward.2} parent=11 // pred_check_branch
        %450 = sbr.rel (%p448) target = $region16
      $region15: #{base_tcn_forward.2} parent=11 // pred_region
        _
      $region16: #{base_tcn_forward.2} parent=11 // pred_fallthru
        _
      // Predicated region
      $region17: #{base_tcn_forward.2} parent=11 // pred_check
        %p451 = pneg %p92
      $region18: #{base_tcn_forward.2} parent=11 // pred_check_branch
        %453 = sbr.rel (%p451) target = $region20
      $region19: #{base_tcn_forward.2} parent=11 // pred_region
        _
      $region20: #{base_tcn_forward.2} parent=11 // pred_fallthru
        _
      // Predicated region
      $region21: #{base_tcn_forward.2} parent=11 // pred_check
        %p454 = pneg %p113
      $region22: #{base_tcn_forward.2} parent=11 // pred_check_branch
        %456 = sbr.rel (%p454) target = $region24
      $region23: #{base_tcn_forward.2} parent=11 // pred_region
        _
      $region24: #{base_tcn_forward.2} parent=11 // pred_fallthru
        _
      // Predicated region
      $region25: #{base_tcn_forward.2} parent=11 // pred_check
        %p457 = pneg %p134
      $region26: #{base_tcn_forward.2} parent=11 // pred_check_branch
        %459 = sbr.rel (%p457) target = $region28
      $region27: #{base_tcn_forward.2} parent=11 // pred_region
        _
      $region28: #{base_tcn_forward.2} parent=11 // pred_fallthru
        _
      // Predicated region
      $region29: #{base_tcn_forward.2} parent=11 // pred_check
        %p460 = pneg %p155
      $region30: #{base_tcn_forward.2} parent=11 // pred_check_branch
        %462 = sbr.rel (%p460) target = $region32
      $region31: #{base_tcn_forward.2} parent=11 // pred_region
        _
      $region32: #{base_tcn_forward.2} parent=11 // pred_fallthru
        _
      // Predicated region
      $region33: #{base_tcn_forward.2} parent=11 // pred_check
        %p463 = pneg %p176
      $region34: #{base_tcn_forward.2} parent=11 // pred_check_branch
        %465 = sbr.rel (%p463) target = $region36
      $region35: #{base_tcn_forward.2} parent=11 // pred_region
        _
      $region36: #{base_tcn_forward.2} parent=11 // pred_fallthru
        _
      // Predicated region
      $region37: #{base_tcn_forward.2} parent=11 // pred_check
        %p466 = pneg %p197
      $region38: #{base_tcn_forward.2} parent=11 // pred_check_branch
        %468 = sbr.rel (%p466) target = $region40
      $region39: #{base_tcn_forward.2} parent=11 // pred_region
        _
      $region40: #{base_tcn_forward.2} parent=11 // pred_fallthru
        _
      // Predicated region
      $region41: #{base_tcn_forward.2} parent=11 // pred_check
        %p469 = pneg %p218
      $region42: #{base_tcn_forward.2} parent=11 // pred_check_branch
        %471 = sbr.rel (%p469) target = $region44
      $region43: #{base_tcn_forward.2} parent=11 // pred_region
        _
      $region44: #{base_tcn_forward.2} parent=11 // pred_fallthru
        _
      // Predicated region
      $region45: #{base_tcn_forward.2} parent=11 // pred_check
        %p472 = pneg %p239
      $region46: #{base_tcn_forward.2} parent=11 // pred_check_branch
        %474 = sbr.rel (%p472) target = $region48
      $region47: #{base_tcn_forward.2} parent=11 // pred_region
        _
      $region48: #{base_tcn_forward.2} parent=11 // pred_fallthru
        _
      // Predicated region
      $region49: #{base_tcn_forward.2} parent=11 // pred_check
        %p475 = pneg %p260
      $region50: #{base_tcn_forward.2} parent=11 // pred_check_branch
        %477 = sbr.rel (%p475) target = $region52
      $region51: #{base_tcn_forward.2} parent=11 // pred_region
        _
      $region52: #{base_tcn_forward.2} parent=11 // pred_fallthru
        _
      // Predicated region
      $region53: #{base_tcn_forward.2} parent=11 // pred_check
        %p478 = pneg %p281
      $region54: #{base_tcn_forward.2} parent=11 // pred_check_branch
        %480 = sbr.rel (%p478) target = $region56
      $region55: #{base_tcn_forward.2} parent=11 // pred_region
        _
      $region56: #{base_tcn_forward.2} parent=11 // pred_fallthru
        _
      // Predicated region
      $region57: #{base_tcn_forward.2} parent=11 // pred_check
        %p481 = pneg %p302
      $region58: #{base_tcn_forward.2} parent=11 // pred_check_branch
        %483 = sbr.rel (%p481) target = $region60
      $region59: #{base_tcn_forward.2} parent=11 // pred_region
        _
      $region60: #{base_tcn_forward.2} parent=11 // pred_fallthru
        _
      // Predicated region
      $region61: #{base_tcn_forward.2} parent=11 // pred_check
        %p484 = pneg %p323
      $region62: #{base_tcn_forward.2} parent=11 // pred_check_branch
        %486 = sbr.rel (%p484) target = $region64
      $region63: #{base_tcn_forward.2} parent=11 // pred_region
        _
      $region64: #{base_tcn_forward.2} parent=11 // pred_fallthru
        _
      // Predicated region
      $region65: #{base_tcn_forward.2} parent=11 // pred_check
        %p487 = pneg %p344
      $region66: #{base_tcn_forward.2} parent=11 // pred_check_branch
        %489 = sbr.rel (%p487) target = $region68
      $region67: #{base_tcn_forward.2} parent=11 // pred_region
        _
      $region68: #{base_tcn_forward.2} parent=11 // pred_fallthru
        _
      // Predicated region
      $region69: #{base_tcn_forward.2} parent=11 // pred_check
        %p490 = pneg %p365
      $region70: #{base_tcn_forward.2} parent=11 // pred_check_branch
        %492 = sbr.rel (%p490) target = $region72
      $region71: #{base_tcn_forward.2} parent=11 // pred_region
        _
      $region72: #{base_tcn_forward.2} parent=11 // pred_fallthru
        _
      // Predicated region
      $region73: #{base_tcn_forward.2} parent=11 // pred_check
        %p493 = pneg %p386
      $region74: #{base_tcn_forward.2} parent=11 // pred_check_branch
        %495 = sbr.rel (%p493) target = $region76
      $region75: #{base_tcn_forward.2} parent=11 // pred_region
        _
      $region76: #{base_tcn_forward.2} parent=11 // pred_fallthru
        _
      // Predicated region
      $region77: #{base_tcn_forward.2} parent=11 // pred_check
        %p496 = pneg %p407
      $region78: #{base_tcn_forward.2} parent=11 // pred_check_branch
        %498 = sbr.rel (%p496) target = $region80
      $region79: #{base_tcn_forward.2} parent=11 // pred_region
        _
      $region80: #{base_tcn_forward.2} parent=11 // pred_fallthru
        _
    $region12: #{base_tcn_forward.2} parent=5 // pred_fallthru
      _
    %p499 = scmp.lt.s32.totalorder %s24, 2
    // Predicated region
    $region81: #{base_tcn_forward.2} parent=5 // pred_check
      %p500 = pneg %p499
    $region82: #{base_tcn_forward.2} parent=5 // pred_check_branch
      %502 = sbr.rel (%p500) target = $region84
    $region83: #{base_tcn_forward.2} parent=5 // pred_region
      // Predicated region
      $region85: #{base_tcn_forward.2} parent=83 // pred_check
        %p503 = pneg %p44
      $region86: #{base_tcn_forward.2} parent=83 // pred_check_branch
        %505 = sbr.rel (%p503) target = $region88
      $region87: #{base_tcn_forward.2} parent=83 // pred_region
        %p506 = scmp.lt.s32.totalorder %s24, 1
        %s507 = scalar_select %p506, %s24, 1
        %s508 = smul.addr %s507, 8
        %s509 = scalar_lea.vmem %s0, %s508
      $region88: #{base_tcn_forward.2} parent=83 // pred_fallthru
        _
    $region84: #{base_tcn_forward.2} parent=5 // pred_fallthru
      _
    %p510 = scmp.le.s32.totalorder 1, %s24
    %p511 = scmp.lt.s32.totalorder %s24, 3
    %p512 = pnand %p510, %p511
    %p513 = pneg %p512
    // Predicated region
    $region89: #{base_tcn_forward.2} parent=5 // pred_check
      _
    $region90: #{base_tcn_forward.2} parent=5 // pred_check_branch
      %515 = sbr.rel (%p512) target = $region92
    $region91: #{base_tcn_forward.2} parent=5 // pred_region
      %s516 = ssub.s32 %s24, 1
      %p517 = scmp.lt.s32.totalorder %s29, 1
      %s518 = scalar_select %p517, %s29, 1
      %s519 = smul.addr %s518, 8
      %s520 = scalar_lea.vmem %s0, %s519
      %p521 = pneg %p50
      %p522 = pneg %p47
      %p523 = pneg %p71
      %p524 = pneg %p68
      %p525 = pneg %p92
      %p526 = pneg %p89
      %p527 = pneg %p113
      %p528 = pneg %p110
      %p529 = pneg %p134
      %p530 = pneg %p131
      %p531 = pneg %p155
      %p532 = pneg %p152
      %p533 = pneg %p176
      %p534 = pneg %p173
      %p535 = pneg %p197
      %p536 = pneg %p194
      %p537 = pneg %p218
      %p538 = pneg %p215
      %p539 = pneg %p239
      %p540 = pneg %p236
      %p541 = pneg %p260
      %p542 = pneg %p257
      %p543 = pneg %p281
      %p544 = pneg %p278
      %p545 = pneg %p302
      %p546 = pneg %p299
      %p547 = pneg %p323
      %p548 = pneg %p320
      %p549 = pneg %p344
      %p550 = pneg %p341
      %p551 = pneg %p365
      %p552 = pneg %p362
      %p553 = pneg %p386
      %p554 = pneg %p383
      %p555 = pneg %p407
      %p556 = pneg %p404
      %p557 = pneg %p433
      %p558 = pneg %p430
      %p559 = scmp.lt.s32.totalorder %s29, 1
      %s560 = scalar_select %p559, %s29, 1
      %s561 = smul.addr %s560, 2
      %s562 = smul.addr %s561, 8
      %s563 = scalar_lea.vmem %s18, %s562
      %p564 = scmp.lt.s32.totalorder %s29, 1
      %s565 = scalar_select %p564, %s29, 1
      %s566 = smul.addr %s565, 8
      %s567 = scalar_lea.vmem %s0, %s566
      %p568 = scmp.lt.s32.totalorder %s29, 1
      %s569 = scalar_select %p568, %s29, 1
      %s570 = smul.addr %s569, 2
      %s571 = smul.addr %s570, 8
      %s572 = scalar_lea.vmem %s18, %s571
      %v573 = vld [vmem:[%s567] sm:$0xff]
      %v574 = vld [vmem:[%s1] sm:$0xff]
      %v575 = vld [vmem:[%s2] sm:$0xff]
      %v576 = vld [vmem:[%s3] sm:$0xff]
      %v577 = vld [vmem:[%s4] sm:$0xff]
      %v578 = vld [vmem:[%s5] sm:$0xff]
      %v579 = vld [vmem:[%s6] sm:$0xff]
      %v580 = vlaneseq
      %v581 = vshrl.u32 %v580, 7
      %v582 = vadd.s32 %v581, 8
      %v583 = vadd.s32 %v581, 16
      %v584 = vadd.s32 %v581, 24
      %v585 = vadd.s32 %v581, 32
      %v586 = vadd.s32 %v581, 40
      %v587 = vadd.s32 %v581, 48
      %v588 = vadd.s32 %v581, 56
      %v589 = vadd.s32 %v581, 64
      %v590 = vadd.s32 %v581, 72
      %v591 = vadd.s32 %v581, 80
      %v592 = vadd.s32 %v581, 88
      %v593 = vadd.s32 %v581, 96
      %v594 = vadd.s32 %v581, 104
      %v595 = vadd.s32 %v581, 112
      %v596 = vadd.s32 %v581, 120
      %v597 = vlaneseq
      %v598 = vand.u32 %v597, 127
      %v599 = vadd.s32 %v581, 1
      %v600 = vadd.s32 %v582, 1
      %v601 = vadd.s32 %v583, 1
      %v602 = vadd.s32 %v584, 1
      %v603 = vadd.s32 %v585, 1
      %v604 = vadd.s32 %v586, 1
      %v605 = vadd.s32 %v587, 1
      %v606 = vadd.s32 %v588, 1
      %v607 = vadd.s32 %v589, 1
      %v608 = vadd.s32 %v590, 1
      %v609 = vadd.s32 %v591, 1
      %v610 = vadd.s32 %v592, 1
      %v611 = vadd.s32 %v593, 1
      %v612 = vadd.s32 %v594, 1
      %v613 = vadd.s32 %v595, 1
      %v614 = vadd.s32 %v596, 1
      %vm615 = vcmp.eq.s32.totalorder %v598, %v599
      %vm616 = vcmp.eq.s32.totalorder %v598, %v600
      %vm617 = vcmp.eq.s32.totalorder %v598, %v601
      %vm618 = vcmp.eq.s32.totalorder %v598, %v602
      %vm619 = vcmp.eq.s32.totalorder %v598, %v603
      %vm620 = vcmp.eq.s32.totalorder %v598, %v604
      %vm621 = vcmp.eq.s32.totalorder %v598, %v605
      %vm622 = vcmp.eq.s32.totalorder %v598, %v606
      %vm623 = vcmp.eq.s32.totalorder %v598, %v607
      %vm624 = vcmp.eq.s32.totalorder %v598, %v608
      %vm625 = vcmp.eq.s32.totalorder %v598, %v609
      %vm626 = vcmp.eq.s32.totalorder %v598, %v610
      %vm627 = vcmp.eq.s32.totalorder %v598, %v611
      %vm628 = vcmp.eq.s32.totalorder %v598, %v612
      %vm629 = vcmp.eq.s32.totalorder %v598, %v613
      %vm630 = vcmp.eq.s32.totalorder %v598, %v614
      %v631 = vsel %vm615, 1, 0
      %v632 = vsel %vm616, 1, 0
      %v633 = vsel %vm617, 1, 0
      %v634 = vsel %vm618, 1, 0
      %v635 = vsel %vm619, 1, 0
      %v636 = vsel %vm620, 1, 0
      %v637 = vsel %vm621, 1, 0
      %v638 = vsel %vm622, 1, 0
      %v639 = vsel %vm623, 1, 0
      %v640 = vsel %vm624, 1, 0
      %v641 = vsel %vm625, 1, 0
      %v642 = vsel %vm626, 1, 0
      %v643 = vsel %vm627, 1, 0
      %v644 = vsel %vm628, 1, 0
      %v645 = vsel %vm629, 1, 0
      %v646 = vsel %vm630, 1, 0
      %v647 = vcvt.s32.f32 %v631
      %v648 = vcvt.s32.f32 %v632
      %v649 = vcvt.s32.f32 %v633
      %v650 = vcvt.s32.f32 %v634
      %v651 = vcvt.s32.f32 %v635
      %v652 = vcvt.s32.f32 %v636
      %v653 = vcvt.s32.f32 %v637
      %v654 = vcvt.s32.f32 %v638
      %v655 = vcvt.s32.f32 %v639
      %v656 = vcvt.s32.f32 %v640
      %v657 = vcvt.s32.f32 %v641
      %v658 = vcvt.s32.f32 %v642
      %v659 = vcvt.s32.f32 %v643
      %v660 = vcvt.s32.f32 %v644
      %v661 = vcvt.s32.f32 %v645
      %v662 = vcvt.s32.f32 %v646
      %663 = vmatpush.msra.mxu0 %v662
      %664 = vmatpush.msra.mxu0 %v661
      %665 = vmatpush.msra.mxu0 %v660
      %666 = vmatpush.msra.mxu0 %v659
      %667 = vmatpush.msra.mxu0 %v658
      %668 = vmatpush.msra.mxu0 %v657
      %669 = vmatpush.msra.mxu0 %v656
      %670 = vmatpush.msra.mxu0 %v655
      %671 = vmatpush.msra.mxu0 %v654
      %672 = vmatpush.msra.mxu0 %v653
      %673 = vmatpush.msra.mxu0 %v652
      %674 = vmatpush.msra.mxu0 %v651
      %675 = vmatpush.msra.mxu0 %v650
      %676 = vmatpush.msra.mxu0 %v649
      %677 = vmatpush.msra.mxu0 %v648
      %678 = vmatpush.msra.mxu0 %v647
      %679 = vmatmul.f32.gmra.mxu0 %v573
      %v680 = vpop.f32.mrf.mxu0
      %v681 = vadd.f32 0.0, %v680
      %682 = vdwg.mxu0
      %684 = vset.pattern.permute.xlu0 0
      %685 = vperm.xlu0 %684, %v575
      %v686 = vpop.permute.xlu0 %685
      %vm688 = vcmask 130048
      %v690 = vsel %vm688, %v574, 0
      %692 = vmatpush.msra.mxu0 0.0
      %693 = vmatpush.msra.mxu0 0.0
      %694 = vmatpush.msra.mxu0 0.0
      %695 = vmatpush.msra.mxu0 0.0
      %696 = vmatpush.msra.mxu0 0.0
      %697 = vmatpush.msra.mxu0 0.0
      %698 = vmatpush.msra.mxu0 0.0
      %699 = vmatpush.msra.mxu0 0.0
      %700 = vmatpush.msra.mxu0 0.0
      %701 = vmatpush.msra.mxu0 0.0
      %702 = vmatpush.msra.mxu0 0.0
      %703 = vmatpush.msra.mxu0 0.0
      %704 = vmatpush.msra.mxu0 0.0
      %705 = vmatpush.msra.mxu0 0.0
      %706 = vmatpush.msra.mxu0 %v573
      %707 = vmatpush.msra.mxu0 %v681
      %708 = vmatmul.f32.gmra.mxu0 %v690
      %v709 = vpop.f32.mrf.mxu0
      %v710 = vadd.f32 %v686, %v709
      %711 = vdwg.mxu0
      %v712 = vmax.f32 %v710, 0.0
      %713 = vmatpush.msra.mxu0 %v662
      %714 = vmatpush.msra.mxu0 %v661
      %715 = vmatpush.msra.mxu0 %v660
      %716 = vmatpush.msra.mxu0 %v659
      %717 = vmatpush.msra.mxu0 %v658
      %718 = vmatpush.msra.mxu0 %v657
      %719 = vmatpush.msra.mxu0 %v656
      %720 = vmatpush.msra.mxu0 %v655
      %721 = vmatpush.msra.mxu0 %v654
      %722 = vmatpush.msra.mxu0 %v653
      %723 = vmatpush.msra.mxu0 %v652
      %724 = vmatpush.msra.mxu0 %v651
      %725 = vmatpush.msra.mxu0 %v650
      %726 = vmatpush.msra.mxu0 %v649
      %727 = vmatpush.msra.mxu0 %v648
      %728 = vmatpush.msra.mxu0 %v647
      %729 = vmatmul.f32.gmra.mxu0 %v712
      %v730 = vpop.f32.mrf.mxu0
      %v731 = vadd.f32 0.0, %v730
      %732 = vdwg.mxu0
      %734 = vset.pattern.permute.xlu0 0
      %735 = vperm.xlu0 %734, %v577
      %v736 = vpop.permute.xlu0 %735
      %v739 = vsel %vm688, %v576, 0
      %741 = vmatpush.msra.mxu0 0.0
      %742 = vmatpush.msra.mxu0 0.0
      %743 = vmatpush.msra.mxu0 0.0
      %744 = vmatpush.msra.mxu0 0.0
      %745 = vmatpush.msra.mxu0 0.0
      %746 = vmatpush.msra.mxu0 0.0
      %747 = vmatpush.msra.mxu0 0.0
      %748 = vmatpush.msra.mxu0 0.0
      %749 = vmatpush.msra.mxu0 0.0
      %750 = vmatpush.msra.mxu0 0.0
      %751 = vmatpush.msra.mxu0 0.0
      %752 = vmatpush.msra.mxu0 0.0
      %753 = vmatpush.msra.mxu0 0.0
      %754 = vmatpush.msra.mxu0 0.0
      %755 = vmatpush.msra.mxu0 %v712
      %756 = vmatpush.msra.mxu0 %v731
      %757 = vmatmul.f32.gmra.mxu0 %v739
      %v758 = vpop.f32.mrf.mxu0
      %v759 = vadd.f32 %v736, %v758
      %760 = vdwg.mxu0
      %v761 = vmax.f32 %v759, 0.0
      %763 = vset.pattern.permute.xlu0 0
      %764 = vperm.xlu0 %763, %v579
      %v765 = vpop.permute.xlu0 %764
      %vm767 = vcmask 64512
      %v769 = vsel %vm767, %v578, 0
      %771 = vmatpush.msra.mxu0 0.0
      %772 = vmatpush.msra.mxu0 0.0
      %773 = vmatpush.msra.mxu0 0.0
      %774 = vmatpush.msra.mxu0 0.0
      %775 = vmatpush.msra.mxu0 0.0
      %776 = vmatpush.msra.mxu0 0.0
      %777 = vmatpush.msra.mxu0 0.0
      %778 = vmatpush.msra.mxu0 0.0
      %779 = vmatpush.msra.mxu0 0.0
      %780 = vmatpush.msra.mxu0 0.0
      %781 = vmatpush.msra.mxu0 0.0
      %782 = vmatpush.msra.mxu0 0.0
      %783 = vmatpush.msra.mxu0 0.0
      %784 = vmatpush.msra.mxu0 0.0
      %785 = vmatpush.msra.mxu0 0.0
      %786 = vmatpush.msra.mxu0 %v573
      %787 = vmatmul.f32.gmra.mxu0 %v769
      %v788 = vpop.f32.mrf.mxu0
      %v789 = vadd.f32 %v765, %v788
      %790 = vdwg.mxu0
      %v791 = vadd.f32 %v761, %v789
      %v792 = vmax.f32 %v791, 0.0
      %v793 = vld [vmem:[%s7] sm:$0xff]
      %v794 = vld [vmem:[%s8] sm:$0xff]
      %v795 = vld [vmem:[%s9] sm:$0xff]
      %v796 = vld [vmem:[%s10] sm:$0xff]
      %v797 = vadd.s32 %v581, 2
      %v798 = vadd.s32 %v582, 2
      %v799 = vadd.s32 %v583, 2
      %v800 = vadd.s32 %v584, 2
      %v801 = vadd.s32 %v585, 2
      %v802 = vadd.s32 %v586, 2
      %v803 = vadd.s32 %v587, 2
      %v804 = vadd.s32 %v588, 2
      %v805 = vadd.s32 %v589, 2
      %v806 = vadd.s32 %v590, 2
      %v807 = vadd.s32 %v591, 2
      %v808 = vadd.s32 %v592, 2
      %v809 = vadd.s32 %v593, 2
      %v810 = vadd.s32 %v594, 2
      %v811 = vadd.s32 %v595, 2
      %v812 = vadd.s32 %v596, 2
      %vm813 = vcmp.eq.s32.totalorder %v598, %v797
      %vm814 = vcmp.eq.s32.totalorder %v598, %v798
      %vm815 = vcmp.eq.s32.totalorder %v598, %v799
      %vm816 = vcmp.eq.s32.totalorder %v598, %v800
      %vm817 = vcmp.eq.s32.totalorder %v598, %v801
      %vm818 = vcmp.eq.s32.totalorder %v598, %v802
      %vm819 = vcmp.eq.s32.totalorder %v598, %v803
      %vm820 = vcmp.eq.s32.totalorder %v598, %v804
      %vm821 = vcmp.eq.s32.totalorder %v598, %v805
      %vm822 = vcmp.eq.s32.totalorder %v598, %v806
      %vm823 = vcmp.eq.s32.totalorder %v598, %v807
      %vm824 = vcmp.eq.s32.totalorder %v598, %v808
      %vm825 = vcmp.eq.s32.totalorder %v598, %v809
      %vm826 = vcmp.eq.s32.totalorder %v598, %v810
      %vm827 = vcmp.eq.s32.totalorder %v598, %v811
      %vm828 = vcmp.eq.s32.totalorder %v598, %v812
      %v829 = vsel %vm813, 1, 0
      %v830 = vsel %vm814, 1, 0
      %v831 = vsel %vm815, 1, 0
      %v832 = vsel %vm816, 1, 0
      %v833 = vsel %vm817, 1, 0
      %v834 = vsel %vm818, 1, 0
      %v835 = vsel %vm819, 1, 0
      %v836 = vsel %vm820, 1, 0
      %v837 = vsel %vm821, 1, 0
      %v838 = vsel %vm822, 1, 0
      %v839 = vsel %vm823, 1, 0
      %v840 = vsel %vm824, 1, 0
      %v841 = vsel %vm825, 1, 0
      %v842 = vsel %vm826, 1, 0
      %v843 = vsel %vm827, 1, 0
      %v844 = vsel %vm828, 1, 0
      %v845 = vcvt.s32.f32 %v829
      %v846 = vcvt.s32.f32 %v830
      %v847 = vcvt.s32.f32 %v831
      %v848 = vcvt.s32.f32 %v832
      %v849 = vcvt.s32.f32 %v833
      %v850 = vcvt.s32.f32 %v834
      %v851 = vcvt.s32.f32 %v835
      %v852 = vcvt.s32.f32 %v836
      %v853 = vcvt.s32.f32 %v837
      %v854 = vcvt.s32.f32 %v838
      %v855 = vcvt.s32.f32 %v839
      %v856 = vcvt.s32.f32 %v840
      %v857 = vcvt.s32.f32 %v841
      %v858 = vcvt.s32.f32 %v842
      %v859 = vcvt.s32.f32 %v843
      %v860 = vcvt.s32.f32 %v844
      %861 = vmatpush.msra.mxu0 %v860
      %862 = vmatpush.msra.mxu0 %v859
      %863 = vmatpush.msra.mxu0 %v858
      %864 = vmatpush.msra.mxu0 %v857
      %865 = vmatpush.msra.mxu0 %v856
      %866 = vmatpush.msra.mxu0 %v855
      %867 = vmatpush.msra.mxu0 %v854
      %868 = vmatpush.msra.mxu0 %v853
      %869 = vmatpush.msra.mxu0 %v852
      %870 = vmatpush.msra.mxu0 %v851
      %871 = vmatpush.msra.mxu0 %v850
      %872 = vmatpush.msra.mxu0 %v849
      %873 = vmatpush.msra.mxu0 %v848
      %874 = vmatpush.msra.mxu0 %v847
      %875 = vmatpush.msra.mxu0 %v846
      %876 = vmatpush.msra.mxu0 %v845
      %877 = vmatmul.f32.gmra.mxu0 %v792
      %v878 = vpop.f32.mrf.mxu0
      %v879 = vadd.f32 0.0, %v878
      %880 = vdwg.mxu0
      %882 = vset.pattern.permute.xlu0 0
      %883 = vperm.xlu0 %882, %v794
      %v884 = vpop.permute.xlu0 %883
      %v887 = vsel %vm688, %v793, 0
      %889 = vmatpush.msra.mxu0 0.0
      %890 = vmatpush.msra.mxu0 0.0
      %891 = vmatpush.msra.mxu0 0.0
      %892 = vmatpush.msra.mxu0 0.0
      %893 = vmatpush.msra.mxu0 0.0
      %894 = vmatpush.msra.mxu0 0.0
      %895 = vmatpush.msra.mxu0 0.0
      %896 = vmatpush.msra.mxu0 0.0
      %897 = vmatpush.msra.mxu0 0.0
      %898 = vmatpush.msra.mxu0 0.0
      %899 = vmatpush.msra.mxu0 0.0
      %900 = vmatpush.msra.mxu0 0.0
      %901 = vmatpush.msra.mxu0 0.0
      %902 = vmatpush.msra.mxu0 0.0
      %903 = vmatpush.msra.mxu0 %v792
      %904 = vmatpush.msra.mxu0 %v879
      %905 = vmatmul.f32.gmra.mxu0 %v887
      %v906 = vpop.f32.mrf.mxu0
      %v907 = vadd.f32 %v884, %v906
      %908 = vdwg.mxu0
      %v909 = vmax.f32 %v907, 0.0
      %910 = vmatpush.msra.mxu0 %v860
      %911 = vmatpush.msra.mxu0 %v859
      %912 = vmatpush.msra.mxu0 %v858
      %913 = vmatpush.msra.mxu0 %v857
      %914 = vmatpush.msra.mxu0 %v856
      %915 = vmatpush.msra.mxu0 %v855
      %916 = vmatpush.msra.mxu0 %v854
      %917 = vmatpush.msra.mxu0 %v853
      %918 = vmatpush.msra.mxu0 %v852
      %919 = vmatpush.msra.mxu0 %v851
      %920 = vmatpush.msra.mxu0 %v850
      %921 = vmatpush.msra.mxu0 %v849
      %922 = vmatpush.msra.mxu0 %v848
      %923 = vmatpush.msra.mxu0 %v847
      %924 = vmatpush.msra.mxu0 %v846
      %925 = vmatpush.msra.mxu0 %v845
      %926 = vmatmul.f32.gmra.mxu0 %v909
      %v927 = vpop.f32.mrf.mxu0
      %v928 = vadd.f32 0.0, %v927
      %929 = vdwg.mxu0
      %931 = vset.pattern.permute.xlu0 0
      %932 = vperm.xlu0 %931, %v796
      %v933 = vpop.permute.xlu0 %932
      %v936 = vsel %vm688, %v795, 0
      %938 = vmatpush.msra.mxu0 0.0
      %939 = vmatpush.msra.mxu0 0.0
      %940 = vmatpush.msra.mxu0 0.0
      %941 = vmatpush.msra.mxu0 0.0
      %942 = vmatpush.msra.mxu0 0.0
      %943 = vmatpush.msra.mxu0 0.0
      %944 = vmatpush.msra.mxu0 0.0
      %945 = vmatpush.msra.mxu0 0.0
      %946 = vmatpush.msra.mxu0 0.0
      %947 = vmatpush.msra.mxu0 0.0
      %948 = vmatpush.msra.mxu0 0.0
      %949 = vmatpush.msra.mxu0 0.0
      %950 = vmatpush.msra.mxu0 0.0
      %951 = vmatpush.msra.mxu0 0.0
      %952 = vmatpush.msra.mxu0 %v909
      %953 = vmatpush.msra.mxu0 %v928
      %954 = vmatmul.f32.gmra.mxu0 %v936
      %v955 = vpop.f32.mrf.mxu0
      %v956 = vadd.f32 %v933, %v955
      %957 = vdwg.mxu0
      %v958 = vmax.f32 %v956, 0.0
      %v959 = vadd.f32 %v958, %v792
      %v960 = vmax.f32 %v959, 0.0
      %v961 = vld [vmem:[%s11] sm:$0xff]
      %v962 = vld [vmem:[%s11 + $0x8] sm:$0xff]
      %v963 = vld [vmem:[%s12] sm:$0xff]
      %v964 = vld [vmem:[%s12 + $0x8] sm:$0xff]
      %v965 = vld [vmem:[%s13] sm:$0xff]
      %v966 = vld [vmem:[%s13 + $0x8] sm:$0xff]
      %v967 = vld [vmem:[%s14] sm:$0xff]
      %v968 = vld [vmem:[%s14 + $0x8] sm:$0xff]
      %v969 = vld [vmem:[%s15] sm:$0xff]
      %v970 = vld [vmem:[%s15 + $0x8] sm:$0xff]
      %v971 = vld [vmem:[%s16] sm:$0xff]
      %v972 = vld [vmem:[%s16 + $0x8] sm:$0xff]
      %v973 = vadd.s32 %v581, 4
      %v974 = vadd.s32 %v582, 4
      %v975 = vadd.s32 %v583, 4
      %v976 = vadd.s32 %v584, 4
      %v977 = vadd.s32 %v585, 4
      %v978 = vadd.s32 %v586, 4
      %v979 = vadd.s32 %v587, 4
      %v980 = vadd.s32 %v588, 4
      %v981 = vadd.s32 %v589, 4
      %v982 = vadd.s32 %v590, 4
      %v983 = vadd.s32 %v591, 4
      %v984 = vadd.s32 %v592, 4
      %v985 = vadd.s32 %v593, 4
      %v986 = vadd.s32 %v594, 4
      %v987 = vadd.s32 %v595, 4
      %v988 = vadd.s32 %v596, 4
      %vm989 = vcmp.eq.s32.totalorder %v598, %v973
      %vm990 = vcmp.eq.s32.totalorder %v598, %v974
      %vm991 = vcmp.eq.s32.totalorder %v598, %v975
      %vm992 = vcmp.eq.s32.totalorder %v598, %v976
      %vm993 = vcmp.eq.s32.totalorder %v598, %v977
      %vm994 = vcmp.eq.s32.totalorder %v598, %v978
      %vm995 = vcmp.eq.s32.totalorder %v598, %v979
      %vm996 = vcmp.eq.s32.totalorder %v598, %v980
      %vm997 = vcmp.eq.s32.totalorder %v598, %v981
      %vm998 = vcmp.eq.s32.totalorder %v598, %v982
      %vm999 = vcmp.eq.s32.totalorder %v598, %v983
      %vm1000 = vcmp.eq.s32.totalorder %v598, %v984
      %vm1001 = vcmp.eq.s32.totalorder %v598, %v985
      %vm1002 = vcmp.eq.s32.totalorder %v598, %v986
      %vm1003 = vcmp.eq.s32.totalorder %v598, %v987
      %vm1004 = vcmp.eq.s32.totalorder %v598, %v988
      %v1005 = vsel %vm989, 1, 0
      %v1006 = vsel %vm990, 1, 0
      %v1007 = vsel %vm991, 1, 0
      %v1008 = vsel %vm992, 1, 0
      %v1009 = vsel %vm993, 1, 0
      %v1010 = vsel %vm994, 1, 0
      %v1011 = vsel %vm995, 1, 0
      %v1012 = vsel %vm996, 1, 0
      %v1013 = vsel %vm997, 1, 0
      %v1014 = vsel %vm998, 1, 0
      %v1015 = vsel %vm999, 1, 0
      %v1016 = vsel %vm1000, 1, 0
      %v1017 = vsel %vm1001, 1, 0
      %v1018 = vsel %vm1002, 1, 0
      %v1019 = vsel %vm1003, 1, 0
      %v1020 = vsel %vm1004, 1, 0
      %v1021 = vcvt.s32.f32 %v1005
      %v1022 = vcvt.s32.f32 %v1006
      %v1023 = vcvt.s32.f32 %v1007
      %v1024 = vcvt.s32.f32 %v1008
      %v1025 = vcvt.s32.f32 %v1009
      %v1026 = vcvt.s32.f32 %v1010
      %v1027 = vcvt.s32.f32 %v1011
      %v1028 = vcvt.s32.f32 %v1012
      %v1029 = vcvt.s32.f32 %v1013
      %v1030 = vcvt.s32.f32 %v1014
      %v1031 = vcvt.s32.f32 %v1015
      %v1032 = vcvt.s32.f32 %v1016
      %v1033 = vcvt.s32.f32 %v1017
      %v1034 = vcvt.s32.f32 %v1018
      %v1035 = vcvt.s32.f32 %v1019
      %v1036 = vcvt.s32.f32 %v1020
      %1037 = vmatpush.msra.mxu0 %v1036
      %1038 = vmatpush.msra.mxu0 %v1035
      %1039 = vmatpush.msra.mxu0 %v1034
      %1040 = vmatpush.msra.mxu0 %v1033
      %1041 = vmatpush.msra.mxu0 %v1032
      %1042 = vmatpush.msra.mxu0 %v1031
      %1043 = vmatpush.msra.mxu0 %v1030
      %1044 = vmatpush.msra.mxu0 %v1029
      %1045 = vmatpush.msra.mxu0 %v1028
      %1046 = vmatpush.msra.mxu0 %v1027
      %1047 = vmatpush.msra.mxu0 %v1026
      %1048 = vmatpush.msra.mxu0 %v1025
      %1049 = vmatpush.msra.mxu0 %v1024
      %1050 = vmatpush.msra.mxu0 %v1023
      %1051 = vmatpush.msra.mxu0 %v1022
      %1052 = vmatpush.msra.mxu0 %v1021
      %1053 = vmatmul.f32.gmra.mxu0 %v960
      %v1054 = vpop.f32.mrf.mxu0
      %v1055 = vadd.f32 0.0, %v1054
      %1056 = vdwg.mxu0
      %1058 = vset.pattern.permute.xlu0 0
      %1059 = vperm.xlu0 %1058, %v963
      %v1060 = vpop.permute.xlu0 %1059
      %1063 = vset.pattern.permute.xlu0 0
      %1064 = vperm.xlu0 %1063, %v964
      %v1065 = vpop.permute.xlu0 %1064
      %v1068 = vsel %vm688, %v961, 0
      %v1071 = vsel %vm688, %v962, 0
      %1073 = vmatpush.msra.mxu0 0.0
      %1074 = vmatpush.msra.mxu0 0.0
      %1075 = vmatpush.msra.mxu0 0.0
      %1076 = vmatpush.msra.mxu0 0.0
      %1077 = vmatpush.msra.mxu0 0.0
      %1078 = vmatpush.msra.mxu0 0.0
      %1079 = vmatpush.msra.mxu0 0.0
      %1080 = vmatpush.msra.mxu0 0.0
      %1081 = vmatpush.msra.mxu0 0.0
      %1082 = vmatpush.msra.mxu0 0.0
      %1083 = vmatpush.msra.mxu0 0.0
      %1084 = vmatpush.msra.mxu0 0.0
      %1085 = vmatpush.msra.mxu0 0.0
      %1086 = vmatpush.msra.mxu0 0.0
      %1087 = vmatpush.msra.mxu0 %v960
      %1088 = vmatpush.msra.mxu0 %v1055
      %1089 = vmatmul.f32.gmra.mxu0 %v1068
      %v1090 = vpop.f32.mrf.mxu0
      %v1091 = vadd.f32 %v1060, %v1090
      %1092 = vmatmul.f32.gmra.mxu0 %v1071
      %v1093 = vpop.f32.mrf.mxu0
      %v1094 = vadd.f32 %v1065, %v1093
      %1095 = vdwg.mxu0
      %v1096 = vmax.f32 %v1091, 0.0
      %v1097 = vmax.f32 %v1094, 0.0
      %1098 = vmatpush.msra.mxu0 %v1036
      %1099 = vmatpush.msra.mxu0 %v1035
      %1100 = vmatpush.msra.mxu0 %v1034
      %1101 = vmatpush.msra.mxu0 %v1033
      %1102 = vmatpush.msra.mxu0 %v1032
      %1103 = vmatpush.msra.mxu0 %v1031
      %1104 = vmatpush.msra.mxu0 %v1030
      %1105 = vmatpush.msra.mxu0 %v1029
      %1106 = vmatpush.msra.mxu0 %v1028
      %1107 = vmatpush.msra.mxu0 %v1027
      %1108 = vmatpush.msra.mxu0 %v1026
      %1109 = vmatpush.msra.mxu0 %v1025
      %1110 = vmatpush.msra.mxu0 %v1024
      %1111 = vmatpush.msra.mxu0 %v1023
      %1112 = vmatpush.msra.mxu0 %v1022
      %1113 = vmatpush.msra.mxu0 %v1021
      %1114 = vmatmul.f32.gmra.mxu0 %v1096
      %v1115 = vpop.f32.mrf.mxu0
      %v1116 = vadd.f32 0.0, %v1115
      %1117 = vmatmul.f32.gmra.mxu0 %v1097
      %v1118 = vpop.f32.mrf.mxu0
      %v1119 = vadd.f32 0.0, %v1118
      %1120 = vdwg.mxu0
      %1122 = vset.pattern.permute.xlu0 0
      %1123 = vperm.xlu0 %1122, %v967
      %v1124 = vpop.permute.xlu0 %1123
      %1127 = vset.pattern.permute.xlu0 0
      %1128 = vperm.xlu0 %1127, %v968
      %v1129 = vpop.permute.xlu0 %1128
      %vm1131 = vcmask 261120
      %v1133 = vsel %vm1131, %v965, 0
      %v1136 = vsel %vm1131, %v966, 0
      %1138 = vmatpush.msra.mxu0 0.0
      %1139 = vmatpush.msra.mxu0 0.0
      %1140 = vmatpush.msra.mxu0 0.0
      %1141 = vmatpush.msra.mxu0 0.0
      %1142 = vmatpush.msra.mxu0 0.0
      %1143 = vmatpush.msra.mxu0 0.0
      %1144 = vmatpush.msra.mxu0 0.0
      %1145 = vmatpush.msra.mxu0 0.0
      %1146 = vmatpush.msra.mxu0 0.0
      %1147 = vmatpush.msra.mxu0 0.0
      %1148 = vmatpush.msra.mxu0 0.0
      %1149 = vmatpush.msra.mxu0 0.0
      %1150 = vmatpush.msra.mxu0 %v1097
      %1151 = vmatpush.msra.mxu0 %v1096
      %1152 = vmatpush.msra.mxu0 %v1119
      %1153 = vmatpush.msra.mxu0 %v1116
      %1154 = vmatmul.f32.gmra.mxu0 %v1133
      %v1155 = vpop.f32.mrf.mxu0
      %v1156 = vadd.f32 %v1124, %v1155
      %1157 = vmatmul.f32.gmra.mxu0 %v1136
      %v1158 = vpop.f32.mrf.mxu0
      %v1159 = vadd.f32 %v1129, %v1158
      %1160 = vdwg.mxu0
      %v1161 = vmax.f32 %v1156, 0.0
      %v1162 = vmax.f32 %v1159, 0.0
      %1164 = vset.pattern.permute.xlu0 0
      %1165 = vperm.xlu0 %1164, %v971
      %v1166 = vpop.permute.xlu0 %1165
      %1169 = vset.pattern.permute.xlu0 0
      %1170 = vperm.xlu0 %1169, %v972
      %v1171 = vpop.permute.xlu0 %1170
      %v1174 = vsel %vm767, %v969, 0
      %v1177 = vsel %vm767, %v970, 0
      %1179 = vmatpush.msra.mxu0 0.0
      %1180 = vmatpush.msra.mxu0 0.0
      %1181 = vmatpush.msra.mxu0 0.0
      %1182 = vmatpush.msra.mxu0 0.0
      %1183 = vmatpush.msra.mxu0 0.0
      %1184 = vmatpush.msra.mxu0 0.0
      %1185 = vmatpush.msra.mxu0 0.0
      %1186 = vmatpush.msra.mxu0 0.0
      %1187 = vmatpush.msra.mxu0 0.0
      %1188 = vmatpush.msra.mxu0 0.0
      %1189 = vmatpush.msra.mxu0 0.0
      %1190 = vmatpush.msra.mxu0 0.0
      %1191 = vmatpush.msra.mxu0 0.0
      %1192 = vmatpush.msra.mxu0 0.0
      %1193 = vmatpush.msra.mxu0 0.0
      %1194 = vmatpush.msra.mxu0 %v960
      %1195 = vmatmul.f32.gmra.mxu0 %v1174
      %v1196 = vpop.f32.mrf.mxu0
      %v1197 = vadd.f32 %v1166, %v1196
      %1198 = vmatmul.f32.gmra.mxu0 %v1177
      %v1199 = vpop.f32.mrf.mxu0
      %v1200 = vadd.f32 %v1171, %v1199
      %1201 = vdwg.mxu0
      %v1202 = vadd.f32 %v1161, %v1197
      %v1203 = vadd.f32 %v1162, %v1200
      %v1204 = vmax.f32 %v1202, 0.0
      %v1205 = vmax.f32 %v1203, 0.0
      %v1206 = vld [vmem:[%s17] sm:$0xff]
      %v1207 = vld [vmem:[%s17 + $0x8] sm:$0xff]
      %v1208 = vld [vmem:[%s17 + $0x10] sm:$0xff]
      %v1209 = vld [vmem:[%s17 + $0x18] sm:$0xff]
      %v1210 = vld [vmem:[%s17 + $0x20] sm:$0xff]
      %v1211 = vld [vmem:[%s17 + $0x28] sm:$0xff]
      %v1212 = vld [vmem:[%s17 + $0x30] sm:$0xff]
      %v1213 = vld [vmem:[%s17 + $0x38] sm:$0xff]
      %v1214 = vld [vmem:[%s17 + $0x40] sm:$0xff]
      %v1215 = vld [vmem:[%s17 + $0x48] sm:$0xff]
      %v1216 = vld [vmem:[%s17 + $0x50] sm:$0xff]
      %v1217 = vld [vmem:[%s17 + $0x58] sm:$0xff]
      %v1218 = vld [vmem:[%s17 + $0x60] sm:$0xff]
      %v1219 = vld [vmem:[%s17 + $0x68] sm:$0xff]
      %v1220 = vld [vmem:[%s17 + $0x70] sm:$0xff]
      %v1221 = vld [vmem:[%s17 + $0x78] sm:$0xff]
      %1222 = vmatpush.msra.mxu0 %v1221
      %1223 = vmatpush.msra.mxu0 %v1220
      %1224 = vmatpush.msra.mxu0 %v1219
      %1225 = vmatpush.msra.mxu0 %v1218
      %1226 = vmatpush.msra.mxu0 %v1217
      %1227 = vmatpush.msra.mxu0 %v1216
      %1228 = vmatpush.msra.mxu0 %v1215
      %1229 = vmatpush.msra.mxu0 %v1214
      %1230 = vmatpush.msra.mxu0 %v1213
      %1231 = vmatpush.msra.mxu0 %v1212
      %1232 = vmatpush.msra.mxu0 %v1211
      %1233 = vmatpush.msra.mxu0 %v1210
      %1234 = vmatpush.msra.mxu0 %v1209
      %1235 = vmatpush.msra.mxu0 %v1208
      %1236 = vmatpush.msra.mxu0 %v1207
      %1237 = vmatpush.msra.mxu0 %v1206
      %1238 = vmatmul.f32.gmra.mxu0 %v1204
      %v1239 = vpop.f32.mrf.mxu0
      %v1240 = vadd.f32 0.0, %v1239
      %1241 = vmatmul.f32.gmra.mxu0 %v1205
      %v1242 = vpop.f32.mrf.mxu0
      %v1243 = vadd.f32 0.0, %v1242
      %1244 = vdwg.mxu0
      %s1245 = scalar_lea.vmem %s17, 128
      %v1246 = vld [vmem:[%s1245] sm:$0xff]
      %v1247 = vld [vmem:[%s1245 + $0x8] sm:$0xff]
      %v1248 = vld [vmem:[%s1245 + $0x10] sm:$0xff]
      %v1249 = vld [vmem:[%s1245 + $0x18] sm:$0xff]
      %v1250 = vld [vmem:[%s1245 + $0x20] sm:$0xff]
      %v1251 = vld [vmem:[%s1245 + $0x28] sm:$0xff]
      %v1252 = vld [vmem:[%s1245 + $0x30] sm:$0xff]
      %v1253 = vld [vmem:[%s1245 + $0x38] sm:$0xff]
      %v1254 = vld [vmem:[%s1245 + $0x40] sm:$0xff]
      %v1255 = vld [vmem:[%s1245 + $0x48] sm:$0xff]
      %v1256 = vld [vmem:[%s1245 + $0x50] sm:$0xff]
      %v1257 = vld [vmem:[%s1245 + $0x58] sm:$0xff]
      %v1258 = vld [vmem:[%s1245 + $0x60] sm:$0xff]
      %v1259 = vld [vmem:[%s1245 + $0x68] sm:$0xff]
      %v1260 = vld [vmem:[%s1245 + $0x70] sm:$0xff]
      %v1261 = vld [vmem:[%s1245 + $0x78] sm:$0xff]
      %1262 = vmatpush.msra.mxu0 %v1261
      %1263 = vmatpush.msra.mxu0 %v1260
      %1264 = vmatpush.msra.mxu0 %v1259
      %1265 = vmatpush.msra.mxu0 %v1258
      %1266 = vmatpush.msra.mxu0 %v1257
      %1267 = vmatpush.msra.mxu0 %v1256
      %1268 = vmatpush.msra.mxu0 %v1255
      %1269 = vmatpush.msra.mxu0 %v1254
      %1270 = vmatpush.msra.mxu0 %v1253
      %1271 = vmatpush.msra.mxu0 %v1252
      %1272 = vmatpush.msra.mxu0 %v1251
      %1273 = vmatpush.msra.mxu0 %v1250
      %1274 = vmatpush.msra.mxu0 %v1249
      %1275 = vmatpush.msra.mxu0 %v1248
      %1276 = vmatpush.msra.mxu0 %v1247
      %1277 = vmatpush.msra.mxu0 %v1246
      %1278 = vmatmul.f32.gmra.mxu0 %v1204
      %v1279 = vpop.f32.mrf.mxu0
      %v1280 = vadd.f32 0.0, %v1279
      %1281 = vmatmul.f32.gmra.mxu0 %v1205
      %v1282 = vpop.f32.mrf.mxu0
      %v1283 = vadd.f32 0.0, %v1282
      %1284 = vdwg.mxu0
      %v1285 = vmax.f32 %v1240, %v1280
      %v1286 = vmax.f32 %v1243, %v1283
      %vm1287 = vcmask 203776
      %1288 = vst.msk [vmem:[%s572] sm:$0xff] %vm1287, %v1285
      %1289 = vst.msk [vmem:[%s572 + $0x8] sm:$0xff] %vm1287, %v1286
      %p1290 = scmp.lt.s32.totalorder %s29, 1
      %s1291 = scalar_select %p1290, %s29, 1
      %s1292 = smul.addr %s1291, 2
      %s1293 = smul.addr %s1292, 8
      %s1294 = scalar_lea.vmem %s18, %s1293
      // Predicated region
      $region93: #{base_tcn_forward.2} parent=91 // pred_check
        %p1295 = pneg %p430
      $region94: #{base_tcn_forward.2} parent=91 // pred_check_branch
        %1297 = sbr.rel (%p1295) target = $region96
      $region95: #{base_tcn_forward.2} parent=91 // pred_region
        _
      $region96: #{base_tcn_forward.2} parent=91 // pred_fallthru
        _
    $region92: #{base_tcn_forward.2} parent=5 // pred_fallthru
      _
    %p1298 = scmp.le.s32.totalorder 2, %s24
    // Predicated region
    $region97: #{base_tcn_forward.2} parent=5 // pred_check
      %p1299 = pneg %p1298
    $region98: #{base_tcn_forward.2} parent=5 // pred_check_branch
      %1301 = sbr.rel (%p1299) target = $region100
    $region99: #{base_tcn_forward.2} parent=5 // pred_region
      %s1302 = ssub.s32 %s24, 2
      // Predicated region
      $region101: #{base_tcn_forward.2} parent=99 // pred_check
        %p1303 = pneg %p436
      $region102: #{base_tcn_forward.2} parent=99 // pred_check_branch
        %1305 = sbr.rel (%p1303) target = $region104
      $region103: #{base_tcn_forward.2} parent=99 // pred_region
        %p1306 = scmp.lt.s32.totalorder %s30, 1
        %s1307 = scalar_select %p1306, %s30, 1
        %s1308 = smul.addr %s1307, 2
        %s1309 = smul.addr %s1308, 8
        %s1310 = scalar_lea.vmem %s18, %s1309
      $region104: #{base_tcn_forward.2} parent=99 // pred_fallthru
        _
    $region100: #{base_tcn_forward.2} parent=5 // pred_fallthru
      _
  $region6: #{base_tcn_forward.2} parent=0 // loop_footer
    %s28 = sadd.s32 1, %s24
  $region7: #{base_tcn_forward.2} parent=0 // loop_footer_branch
    %23 = sbr.rel target = $region3
  $region8: #{base_tcn_forward.2} parent=0 // loop_exit
    _

// kernel: base_tcn_forward.3
$region0: #{base_tcn_forward.3}
  #allocation0 [shape = 'u32[]', space=smem, size = 0x4, offset = 0x4, fixed_abs, tag = 'smem constant byte address 0x4 - core index']
  #allocation1 [shape = 'u32[72,128]{1,0:T(1,128)}', space=vmem, size = 0x9000, scoped, tag = 'internal scratch']
  %s0 = inlined_call_operand.vmem [shape: f32[2,400], index: 0, kind: input, shape index: {}]
  %s1 = inlined_call_operand.vmem [shape: f32[400,1024], index: 1, kind: input, shape index: {}]
  %s2 = inlined_call_operand.vmem [shape: f32[1,1024], index: 2, kind: input, shape index: {}]
  %s3 = inlined_call_operand.vmem [shape: f32[1024,5], index: 3, kind: input, shape index: {}]
  %s4 = inlined_call_operand.vmem [shape: f32[1,5], index: 4, kind: input, shape index: {}]
  %s5 = inlined_call_operand.hbm [shape: f32[2,5], index: 5, kind: output, shape index: {}]
  %s6 = sld [smem:[#allocation0]]
  $region30: #{base_tcn_forward.3} parent=0
    _
  %s8 = ssub.s32 1, %s6
  %s9 = scalar_select 0, %s8, %s6
  $region1: #{base_tcn_forward.3} parent=0
    #allocation2 [shape = 'u8[1024]{0}', space=vmem, size = 0x400, scoped, tag = 'output window, operand 0, single buffered']
    #allocation3 [shape = 's32[1]{0}', space=sflag, size = 0x4, scoped, tag = 'scoped memory for base_tcn_forward.3']
    %10 = vsyncpa [#allocation3], 0
    // Predicated region
    $region2: #{base_tcn_forward.3} parent=1 // pred_check
      _
    $region3: #{base_tcn_forward.3} parent=1 // pred_check_branch
      %12 = sbr.rel (0) target = $region5
    $region4: #{base_tcn_forward.3} parent=1 // pred_region
      _
    $region5: #{base_tcn_forward.3} parent=1 // pred_fallthru
      _
    // Predicated region
    $region6: #{base_tcn_forward.3} parent=1 // pred_check
      _
    $region7: #{base_tcn_forward.3} parent=1 // pred_check_branch
      %14 = sbr.rel (0) target = $region9
    $region8: #{base_tcn_forward.3} parent=1 // pred_region
      _
    $region9: #{base_tcn_forward.3} parent=1 // pred_fallthru
      _
    // Predicated region
    $region10: #{base_tcn_forward.3} parent=1 // pred_check
      _
    $region11: #{base_tcn_forward.3} parent=1 // pred_check_branch
      %16 = sbr.rel (0) target = $region13
    $region12: #{base_tcn_forward.3} parent=1 // pred_region
      _
    $region13: #{base_tcn_forward.3} parent=1 // pred_fallthru
      _
    // Predicated region
    $region14: #{base_tcn_forward.3} parent=1 // pred_check
      _
    $region15: #{base_tcn_forward.3} parent=1 // pred_check_branch
      %18 = sbr.rel (0) target = $region17
    $region16: #{base_tcn_forward.3} parent=1 // pred_region
      _
    $region17: #{base_tcn_forward.3} parent=1 // pred_fallthru
      _
    // Predicated region
    $region18: #{base_tcn_forward.3} parent=1 // pred_check
      _
    $region19: #{base_tcn_forward.3} parent=1 // pred_check_branch
      %20 = sbr.rel (0) target = $region21
    $region20: #{base_tcn_forward.3} parent=1 // pred_region
      _
    $region21: #{base_tcn_forward.3} parent=1 // pred_fallthru
      _
    %v21 = vld [vmem:[%s0] sm:$0xff]
    %v22 = vld [vmem:[%s1] sm:$0xff]
    %v23 = vld [vmem:[%s1 + $0x8] sm:$0xff]
    %v24 = vld [vmem:[%s1 + $0x10] sm:$0xff]
    %v25 = vld [vmem:[%s1 + $0x18] sm:$0xff]
    %v26 = vld [vmem:[%s1 + $0x20] sm:$0xff]
    %v27 = vld [vmem:[%s1 + $0x28] sm:$0xff]
    %v28 = vld [vmem:[%s1 + $0x30] sm:$0xff]
    %v29 = vld [vmem:[%s1 + $0x38] sm:$0xff]
    %v30 = vld [vmem:[%s1 + $0x40] sm:$0xff]
    %v31 = vld [vmem:[%s1 + $0x48] sm:$0xff]
    %v32 = vld [vmem:[%s1 + $0x50] sm:$0xff]
    %v33 = vld [vmem:[%s1 + $0x58] sm:$0xff]
    %v34 = vld [vmem:[%s1 + $0x60] sm:$0xff]
    %v35 = vld [vmem:[%s1 + $0x68] sm:$0xff]
    %v36 = vld [vmem:[%s1 + $0x70] sm:$0xff]
    %v37 = vld [vmem:[%s1 + $0x78] sm:$0xff]
    %v38 = vld [vmem:[%s1 + $0x80] sm:$0xff]
    %v39 = vld [vmem:[%s1 + $0x88] sm:$0xff]
    %v40 = vld [vmem:[%s1 + $0x90] sm:$0xff]
    %v41 = vld [vmem:[%s1 + $0x98] sm:$0xff]
    %v42 = vld [vmem:[%s1 + $0xa0] sm:$0xff]
    %v43 = vld [vmem:[%s1 + $0xa8] sm:$0xff]
    %v44 = vld [vmem:[%s1 + $0xb0] sm:$0xff]
    %v45 = vld [vmem:[%s1 + $0xb8] sm:$0xff]
    %v46 = vld [vmem:[%s1 + $0xc0] sm:$0xff]
    %v47 = vld [vmem:[%s1 + $0xc8] sm:$0xff]
    %v48 = vld [vmem:[%s1 + $0xd0] sm:$0xff]
    %v49 = vld [vmem:[%s1 + $0xd8] sm:$0xff]
    %v50 = vld [vmem:[%s1 + $0xe0] sm:$0xff]
    %v51 = vld [vmem:[%s1 + $0xe8] sm:$0xff]
    %v52 = vld [vmem:[%s1 + $0xf0] sm:$0xff]
    %v53 = vld [vmem:[%s1 + $0xf8] sm:$0xff]
    %v54 = vld [vmem:[%s1 + $0x100] sm:$0xff]
    %v55 = vld [vmem:[%s1 + $0x108] sm:$0xff]
    %v56 = vld [vmem:[%s1 + $0x110] sm:$0xff]
    %v57 = vld [vmem:[%s1 + $0x118] sm:$0xff]
    %v58 = vld [vmem:[%s1 + $0x120] sm:$0xff]
    %v59 = vld [vmem:[%s1 + $0x128] sm:$0xff]
    %v60 = vld [vmem:[%s1 + $0x130] sm:$0xff]
    %v61 = vld [vmem:[%s1 + $0x138] sm:$0xff]
    %v62 = vld [vmem:[%s1 + $0x140] sm:$0xff]
    %v63 = vld [vmem:[%s1 + $0x148] sm:$0xff]
    %v64 = vld [vmem:[%s1 + $0x150] sm:$0xff]
    %v65 = vld [vmem:[%s1 + $0x158] sm:$0xff]
    %v66 = vld [vmem:[%s1 + $0x160] sm:$0xff]
    %v67 = vld [vmem:[%s1 + $0x168] sm:$0xff]
    %v68 = vld [vmem:[%s1 + $0x170] sm:$0xff]
    %v69 = vld [vmem:[%s1 + $0x178] sm:$0xff]
    %v70 = vld [vmem:[%s1 + $0x180] sm:$0xff]
    %v71 = vld [vmem:[%s1 + $0x188] sm:$0xff]
    %v72 = vld [vmem:[%s1 + $0x190] sm:$0xff]
    %v73 = vld [vmem:[%s1 + $0x198] sm:$0xff]
    %v74 = vld [vmem:[%s1 + $0x1a0] sm:$0xff]
    %v75 = vld [vmem:[%s1 + $0x1a8] sm:$0xff]
    %v76 = vld [vmem:[%s1 + $0x1b0] sm:$0xff]
    %v77 = vld [vmem:[%s1 + $0x1b8] sm:$0xff]
    %v78 = vld [vmem:[%s1 + $0x1c0] sm:$0xff]
    %v79 = vld [vmem:[%s1 + $0x1c8] sm:$0xff]
    %v80 = vld [vmem:[%s1 + $0x1d0] sm:$0xff]
    %v81 = vld [vmem:[%s1 + $0x1d8] sm:$0xff]
    %v82 = vld [vmem:[%s1 + $0x1e0] sm:$0xff]
    %v83 = vld [vmem:[%s1 + $0x1e8] sm:$0xff]
    %v84 = vld [vmem:[%s1 + $0x1f0] sm:$0xff]
    %v85 = vld [vmem:[%s1 + $0x1f8] sm:$0xff]
    %v86 = vld [vmem:[%s1 + $0x200] sm:$0xff]
    %v87 = vld [vmem:[%s1 + $0x208] sm:$0xff]
    %v88 = vld [vmem:[%s1 + $0x210] sm:$0xff]
    %v89 = vld [vmem:[%s1 + $0x218] sm:$0xff]
    %v90 = vld [vmem:[%s1 + $0x220] sm:$0xff]
    %v91 = vld [vmem:[%s1 + $0x228] sm:$0xff]
    %v92 = vld [vmem:[%s1 + $0x230] sm:$0xff]
    %v93 = vld [vmem:[%s1 + $0x238] sm:$0xff]
    %v94 = vld [vmem:[%s1 + $0x240] sm:$0xff]
    %v95 = vld [vmem:[%s1 + $0x248] sm:$0xff]
    %v96 = vld [vmem:[%s1 + $0x250] sm:$0xff]
    %v97 = vld [vmem:[%s1 + $0x258] sm:$0xff]
    %v98 = vld [vmem:[%s1 + $0x260] sm:$0xff]
    %v99 = vld [vmem:[%s1 + $0x268] sm:$0xff]
    %v100 = vld [vmem:[%s1 + $0x270] sm:$0xff]
    %v101 = vld [vmem:[%s1 + $0x278] sm:$0xff]
    %v102 = vld [vmem:[%s1 + $0x280] sm:$0xff]
    %v103 = vld [vmem:[%s1 + $0x288] sm:$0xff]
    %v104 = vld [vmem:[%s1 + $0x290] sm:$0xff]
    %v105 = vld [vmem:[%s1 + $0x298] sm:$0xff]
    %v106 = vld [vmem:[%s1 + $0x2a0] sm:$0xff]
    %v107 = vld [vmem:[%s1 + $0x2a8] sm:$0xff]
    %v108 = vld [vmem:[%s1 + $0x2b0] sm:$0xff]
    %v109 = vld [vmem:[%s1 + $0x2b8] sm:$0xff]
    %v110 = vld [vmem:[%s1 + $0x2c0] sm:$0xff]
    %v111 = vld [vmem:[%s1 + $0x2c8] sm:$0xff]
    %v112 = vld [vmem:[%s1 + $0x2d0] sm:$0xff]
    %v113 = vld [vmem:[%s1 + $0x2d8] sm:$0xff]
    %v114 = vld [vmem:[%s1 + $0x2e0] sm:$0xff]
    %v115 = vld [vmem:[%s1 + $0x2e8] sm:$0xff]
    %v116 = vld [vmem:[%s1 + $0x2f0] sm:$0xff]
    %v117 = vld [vmem:[%s1 + $0x2f8] sm:$0xff]
    %v118 = vld [vmem:[%s1 + $0x300] sm:$0xff]
    %v119 = vld [vmem:[%s1 + $0x308] sm:$0xff]
    %v120 = vld [vmem:[%s1 + $0x310] sm:$0xff]
    %v121 = vld [vmem:[%s1 + $0x318] sm:$0xff]
    %v122 = vld [vmem:[%s1 + $0x320] sm:$0xff]
    %v123 = vld [vmem:[%s1 + $0x328] sm:$0xff]
    %v124 = vld [vmem:[%s1 + $0x330] sm:$0xff]
    %v125 = vld [vmem:[%s1 + $0x338] sm:$0xff]
    %v126 = vld [vmem:[%s1 + $0x340] sm:$0xff]
    %v127 = vld [vmem:[%s1 + $0x348] sm:$0xff]
    %v128 = vld [vmem:[%s1 + $0x350] sm:$0xff]
    %v129 = vld [vmem:[%s1 + $0x358] sm:$0xff]
    %v130 = vld [vmem:[%s1 + $0x360] sm:$0xff]
    %v131 = vld [vmem:[%s1 + $0x368] sm:$0xff]
    %v132 = vld [vmem:[%s1 + $0x370] sm:$0xff]
    %v133 = vld [vmem:[%s1 + $0x378] sm:$0xff]
    %v134 = vld [vmem:[%s1 + $0x380] sm:$0xff]
    %v135 = vld [vmem:[%s1 + $0x388] sm:$0xff]
    %v136 = vld [vmem:[%s1 + $0x390] sm:$0xff]
    %v137 = vld [vmem:[%s1 + $0x398] sm:$0xff]
    %v138 = vld [vmem:[%s1 + $0x3a0] sm:$0xff]
    %v139 = vld [vmem:[%s1 + $0x3a8] sm:$0xff]
    %v140 = vld [vmem:[%s1 + $0x3b0] sm:$0xff]
    %v141 = vld [vmem:[%s1 + $0x3b8] sm:$0xff]
    %v142 = vld [vmem:[%s1 + $0x3c0] sm:$0xff]
    %v143 = vld [vmem:[%s1 + $0x3c8] sm:$0xff]
    %v144 = vld [vmem:[%s1 + $0x3d0] sm:$0xff]
    %v145 = vld [vmem:[%s1 + $0x3d8] sm:$0xff]
    %v146 = vld [vmem:[%s1 + $0x3e0] sm:$0xff]
    %v147 = vld [vmem:[%s1 + $0x3e8] sm:$0xff]
    %v148 = vld [vmem:[%s1 + $0x3f0] sm:$0xff]
    %v149 = vld [vmem:[%s1 + $0x3f8] sm:$0xff]
    %v150 = vld [vmem:[%s1 + $0x400] sm:$0xff]
    %v151 = vld [vmem:[%s1 + $0x408] sm:$0xff]
    %v152 = vld [vmem:[%s1 + $0x410] sm:$0xff]
    %v153 = vld [vmem:[%s1 + $0x418] sm:$0xff]
    %v154 = vld [vmem:[%s1 + $0x420] sm:$0xff]
    %v155 = vld [vmem:[%s1 + $0x428] sm:$0xff]
    %v156 = vld [vmem:[%s1 + $0x430] sm:$0xff]
    %v157 = vld [vmem:[%s1 + $0x438] sm:$0xff]
    %v158 = vld [vmem:[%s1 + $0x440] sm:$0xff]
    %v159 = vld [vmem:[%s1 + $0x448] sm:$0xff]
    %v160 = vld [vmem:[%s1 + $0x450] sm:$0xff]
    %v161 = vld [vmem:[%s1 + $0x458] sm:$0xff]
    %v162 = vld [vmem:[%s1 + $0x460] sm:$0xff]
    %v163 = vld [vmem:[%s1 + $0x468] sm:$0xff]
    %v164 = vld [vmem:[%s1 + $0x470] sm:$0xff]
    %v165 = vld [vmem:[%s1 + $0x478] sm:$0xff]
    %v166 = vld [vmem:[%s1 + $0x480] sm:$0xff]
    %v167 = vld [vmem:[%s1 + $0x488] sm:$0xff]
    %v168 = vld [vmem:[%s1 + $0x490] sm:$0xff]
    %v169 = vld [vmem:[%s1 + $0x498] sm:$0xff]
    %v170 = vld [vmem:[%s1 + $0x4a0] sm:$0xff]
    %v171 = vld [vmem:[%s1 + $0x4a8] sm:$0xff]
    %v172 = vld [vmem:[%s1 + $0x4b0] sm:$0xff]
    %v173 = vld [vmem:[%s1 + $0x4b8] sm:$0xff]
    %v174 = vld [vmem:[%s1 + $0x4c0] sm:$0xff]
    %v175 = vld [vmem:[%s1 + $0x4c8] sm:$0xff]
    %v176 = vld [vmem:[%s1 + $0x4d0] sm:$0xff]
    %v177 = vld [vmem:[%s1 + $0x4d8] sm:$0xff]
    %v178 = vld [vmem:[%s1 + $0x4e0] sm:$0xff]
    %v179 = vld [vmem:[%s1 + $0x4e8] sm:$0xff]
    %v180 = vld [vmem:[%s1 + $0x4f0] sm:$0xff]
    %v181 = vld [vmem:[%s1 + $0x4f8] sm:$0xff]
    %v182 = vld [vmem:[%s1 + $0x500] sm:$0xff]
    %v183 = vld [vmem:[%s1 + $0x508] sm:$0xff]
    %v184 = vld [vmem:[%s1 + $0x510] sm:$0xff]
    %v185 = vld [vmem:[%s1 + $0x518] sm:$0xff]
    %v186 = vld [vmem:[%s1 + $0x520] sm:$0xff]
    %v187 = vld [vmem:[%s1 + $0x528] sm:$0xff]
    %v188 = vld [vmem:[%s1 + $0x530] sm:$0xff]
    %v189 = vld [vmem:[%s1 + $0x538] sm:$0xff]
    %v190 = vld [vmem:[%s1 + $0x540] sm:$0xff]
    %v191 = vld [vmem:[%s1 + $0x548] sm:$0xff]
    %v192 = vld [vmem:[%s1 + $0x550] sm:$0xff]
    %v193 = vld [vmem:[%s1 + $0x558] sm:$0xff]
    %v194 = vld [vmem:[%s1 + $0x560] sm:$0xff]
    %v195 = vld [vmem:[%s1 + $0x568] sm:$0xff]
    %v196 = vld [vmem:[%s1 + $0x570] sm:$0xff]
    %v197 = vld [vmem:[%s1 + $0x578] sm:$0xff]
    %v198 = vld [vmem:[%s1 + $0x580] sm:$0xff]
    %v199 = vld [vmem:[%s1 + $0x588] sm:$0xff]
    %v200 = vld [vmem:[%s1 + $0x590] sm:$0xff]
    %v201 = vld [vmem:[%s1 + $0x598] sm:$0xff]
    %v202 = vld [vmem:[%s1 + $0x5a0] sm:$0xff]
    %v203 = vld [vmem:[%s1 + $0x5a8] sm:$0xff]
    %v204 = vld [vmem:[%s1 + $0x5b0] sm:$0xff]
    %v205 = vld [vmem:[%s1 + $0x5b8] sm:$0xff]
    %v206 = vld [vmem:[%s1 + $0x5c0] sm:$0xff]
    %v207 = vld [vmem:[%s1 + $0x5c8] sm:$0xff]
    %v208 = vld [vmem:[%s1 + $0x5d0] sm:$0xff]
    %v209 = vld [vmem:[%s1 + $0x5d8] sm:$0xff]
    %v210 = vld [vmem:[%s1 + $0x5e0] sm:$0xff]
    %v211 = vld [vmem:[%s1 + $0x5e8] sm:$0xff]
    %v212 = vld [vmem:[%s1 + $0x5f0] sm:$0xff]
    %v213 = vld [vmem:[%s1 + $0x5f8] sm:$0xff]
    %v214 = vld [vmem:[%s1 + $0x600] sm:$0xff]
    %v215 = vld [vmem:[%s1 + $0x608] sm:$0xff]
    %v216 = vld [vmem:[%s1 + $0x610] sm:$0xff]
    %v217 = vld [vmem:[%s1 + $0x618] sm:$0xff]
    %v218 = vld [vmem:[%s1 + $0x620] sm:$0xff]
    %v219 = vld [vmem:[%s1 + $0x628] sm:$0xff]
    %v220 = vld [vmem:[%s1 + $0x630] sm:$0xff]
    %v221 = vld [vmem:[%s1 + $0x638] sm:$0xff]
    %v222 = vld [vmem:[%s1 + $0x640] sm:$0xff]
    %v223 = vld [vmem:[%s1 + $0x648] sm:$0xff]
    %v224 = vld [vmem:[%s1 + $0x650] sm:$0xff]
    %v225 = vld [vmem:[%s1 + $0x658] sm:$0xff]
    %v226 = vld [vmem:[%s1 + $0x660] sm:$0xff]
    %v227 = vld [vmem:[%s1 + $0x668] sm:$0xff]
    %v228 = vld [vmem:[%s1 + $0x670] sm:$0xff]
    %v229 = vld [vmem:[%s1 + $0x678] sm:$0xff]
    %v230 = vld [vmem:[%s1 + $0x680] sm:$0xff]
    %v231 = vld [vmem:[%s1 + $0x688] sm:$0xff]
    %v232 = vld [vmem:[%s1 + $0x690] sm:$0xff]
    %v233 = vld [vmem:[%s1 + $0x698] sm:$0xff]
    %v234 = vld [vmem:[%s1 + $0x6a0] sm:$0xff]
    %v235 = vld [vmem:[%s1 + $0x6a8] sm:$0xff]
    %v236 = vld [vmem:[%s1 + $0x6b0] sm:$0xff]
    %v237 = vld [vmem:[%s1 + $0x6b8] sm:$0xff]
    %v238 = vld [vmem:[%s1 + $0x6c0] sm:$0xff]
    %v239 = vld [vmem:[%s1 + $0x6c8] sm:$0xff]
    %v240 = vld [vmem:[%s1 + $0x6d0] sm:$0xff]
    %v241 = vld [vmem:[%s1 + $0x6d8] sm:$0xff]
    %v242 = vld [vmem:[%s1 + $0x6e0] sm:$0xff]
    %v243 = vld [vmem:[%s1 + $0x6e8] sm:$0xff]
    %v244 = vld [vmem:[%s1 + $0x6f0] sm:$0xff]
    %v245 = vld [vmem:[%s1 + $0x6f8] sm:$0xff]
    %v246 = vld [vmem:[%s1 + $0x700] sm:$0xff]
    %v247 = vld [vmem:[%s1 + $0x708] sm:$0xff]
    %v248 = vld [vmem:[%s1 + $0x710] sm:$0xff]
    %v249 = vld [vmem:[%s1 + $0x718] sm:$0xff]
    %v250 = vld [vmem:[%s1 + $0x720] sm:$0xff]
    %v251 = vld [vmem:[%s1 + $0x728] sm:$0xff]
    %v252 = vld [vmem:[%s1 + $0x730] sm:$0xff]
    %v253 = vld [vmem:[%s1 + $0x738] sm:$0xff]
    %v254 = vld [vmem:[%s1 + $0x740] sm:$0xff]
    %v255 = vld [vmem:[%s1 + $0x748] sm:$0xff]
    %v256 = vld [vmem:[%s1 + $0x750] sm:$0xff]
    %v257 = vld [vmem:[%s1 + $0x758] sm:$0xff]
    %v258 = vld [vmem:[%s1 + $0x760] sm:$0xff]
    %v259 = vld [vmem:[%s1 + $0x768] sm:$0xff]
    %v260 = vld [vmem:[%s1 + $0x770] sm:$0xff]
    %v261 = vld [vmem:[%s1 + $0x778] sm:$0xff]
    %v262 = vld [vmem:[%s1 + $0x780] sm:$0xff]
    %v263 = vld [vmem:[%s1 + $0x788] sm:$0xff]
    %v264 = vld [vmem:[%s1 + $0x790] sm:$0xff]
    %v265 = vld [vmem:[%s1 + $0x798] sm:$0xff]
    %v266 = vld [vmem:[%s1 + $0x7a0] sm:$0xff]
    %v267 = vld [vmem:[%s1 + $0x7a8] sm:$0xff]
    %v268 = vld [vmem:[%s1 + $0x7b0] sm:$0xff]
    %v269 = vld [vmem:[%s1 + $0x7b8] sm:$0xff]
    %v270 = vld [vmem:[%s1 + $0x7c0] sm:$0xff]
    %v271 = vld [vmem:[%s1 + $0x7c8] sm:$0xff]
    %v272 = vld [vmem:[%s1 + $0x7d0] sm:$0xff]
    %v273 = vld [vmem:[%s1 + $0x7d8] sm:$0xff]
    %v274 = vld [vmem:[%s1 + $0x7e0] sm:$0xff]
    %v275 = vld [vmem:[%s1 + $0x7e8] sm:$0xff]
    %v276 = vld [vmem:[%s1 + $0x7f0] sm:$0xff]
    %v277 = vld [vmem:[%s1 + $0x7f8] sm:$0xff]
    %v278 = vld [vmem:[%s1 + $0x800] sm:$0xff]
    %v279 = vld [vmem:[%s1 + $0x808] sm:$0xff]
    %v280 = vld [vmem:[%s1 + $0x810] sm:$0xff]
    %v281 = vld [vmem:[%s1 + $0x818] sm:$0xff]
    %v282 = vld [vmem:[%s1 + $0x820] sm:$0xff]
    %v283 = vld [vmem:[%s1 + $0x828] sm:$0xff]
    %v284 = vld [vmem:[%s1 + $0x830] sm:$0xff]
    %v285 = vld [vmem:[%s1 + $0x838] sm:$0xff]
    %v286 = vld [vmem:[%s1 + $0x840] sm:$0xff]
    %v287 = vld [vmem:[%s1 + $0x848] sm:$0xff]
    %v288 = vld [vmem:[%s1 + $0x850] sm:$0xff]
    %v289 = vld [vmem:[%s1 + $0x858] sm:$0xff]
    %v290 = vld [vmem:[%s1 + $0x860] sm:$0xff]
    %v291 = vld [vmem:[%s1 + $0x868] sm:$0xff]
    %v292 = vld [vmem:[%s1 + $0x870] sm:$0xff]
    %v293 = vld [vmem:[%s1 + $0x878] sm:$0xff]
    %v294 = vld [vmem:[%s1 + $0x880] sm:$0xff]
    %v295 = vld [vmem:[%s1 + $0x888] sm:$0xff]
    %v296 = vld [vmem:[%s1 + $0x890] sm:$0xff]
    %v297 = vld [vmem:[%s1 + $0x898] sm:$0xff]
    %v298 = vld [vmem:[%s1 + $0x8a0] sm:$0xff]
    %v299 = vld [vmem:[%s1 + $0x8a8] sm:$0xff]
    %v300 = vld [vmem:[%s1 + $0x8b0] sm:$0xff]
    %v301 = vld [vmem:[%s1 + $0x8b8] sm:$0xff]
    %v302 = vld [vmem:[%s1 + $0x8c0] sm:$0xff]
    %v303 = vld [vmem:[%s1 + $0x8c8] sm:$0xff]
    %v304 = vld [vmem:[%s1 + $0x8d0] sm:$0xff]
    %v305 = vld [vmem:[%s1 + $0x8d8] sm:$0xff]
    %v306 = vld [vmem:[%s1 + $0x8e0] sm:$0xff]
    %v307 = vld [vmem:[%s1 + $0x8e8] sm:$0xff]
    %v308 = vld [vmem:[%s1 + $0x8f0] sm:$0xff]
    %v309 = vld [vmem:[%s1 + $0x8f8] sm:$0xff]
    %v310 = vld [vmem:[%s1 + $0x900] sm:$0xff]
    %v311 = vld [vmem:[%s1 + $0x908] sm:$0xff]
    %v312 = vld [vmem:[%s1 + $0x910] sm:$0xff]
    %v313 = vld [vmem:[%s1 + $0x918] sm:$0xff]
    %v314 = vld [vmem:[%s1 + $0x920] sm:$0xff]
    %v315 = vld [vmem:[%s1 + $0x928] sm:$0xff]
    %v316 = vld [vmem:[%s1 + $0x930] sm:$0xff]
    %v317 = vld [vmem:[%s1 + $0x938] sm:$0xff]
    %v318 = vld [vmem:[%s1 + $0x940] sm:$0xff]
    %v319 = vld [vmem:[%s1 + $0x948] sm:$0xff]
    %v320 = vld [vmem:[%s1 + $0x950] sm:$0xff]
    %v321 = vld [vmem:[%s1 + $0x958] sm:$0xff]
    %v322 = vld [vmem:[%s1 + $0x960] sm:$0xff]
    %v323 = vld [vmem:[%s1 + $0x968] sm:$0xff]
    %v324 = vld [vmem:[%s1 + $0x970] sm:$0xff]
    %v325 = vld [vmem:[%s1 + $0x978] sm:$0xff]
    %v326 = vld [vmem:[%s1 + $0x980] sm:$0xff]
    %v327 = vld [vmem:[%s1 + $0x988] sm:$0xff]
    %v328 = vld [vmem:[%s1 + $0x990] sm:$0xff]
    %v329 = vld [vmem:[%s1 + $0x998] sm:$0xff]
    %v330 = vld [vmem:[%s1 + $0x9a0] sm:$0xff]
    %v331 = vld [vmem:[%s1 + $0x9a8] sm:$0xff]
    %v332 = vld [vmem:[%s1 + $0x9b0] sm:$0xff]
    %v333 = vld [vmem:[%s1 + $0x9b8] sm:$0xff]
    %v334 = vld [vmem:[%s1 + $0x9c0] sm:$0xff]
    %v335 = vld [vmem:[%s1 + $0x9c8] sm:$0xff]
    %v336 = vld [vmem:[%s1 + $0x9d0] sm:$0xff]
    %v337 = vld [vmem:[%s1 + $0x9d8] sm:$0xff]
    %v338 = vld [vmem:[%s1 + $0x9e0] sm:$0xff]
    %v339 = vld [vmem:[%s1 + $0x9e8] sm:$0xff]
    %v340 = vld [vmem:[%s1 + $0x9f0] sm:$0xff]
    %v341 = vld [vmem:[%s1 + $0x9f8] sm:$0xff]
    %v342 = vld [vmem:[%s1 + $0xa00] sm:$0xff]
    %v343 = vld [vmem:[%s1 + $0xa08] sm:$0xff]
    %v344 = vld [vmem:[%s1 + $0xa10] sm:$0xff]
    %v345 = vld [vmem:[%s1 + $0xa18] sm:$0xff]
    %v346 = vld [vmem:[%s1 + $0xa20] sm:$0xff]
    %v347 = vld [vmem:[%s1 + $0xa28] sm:$0xff]
    %v348 = vld [vmem:[%s1 + $0xa30] sm:$0xff]
    %v349 = vld [vmem:[%s1 + $0xa38] sm:$0xff]
    %v350 = vld [vmem:[%s1 + $0xa40] sm:$0xff]
    %v351 = vld [vmem:[%s1 + $0xa48] sm:$0xff]
    %v352 = vld [vmem:[%s1 + $0xa50] sm:$0xff]
    %v353 = vld [vmem:[%s1 + $0xa58] sm:$0xff]
    %v354 = vld [vmem:[%s1 + $0xa60] sm:$0xff]
    %v355 = vld [vmem:[%s1 + $0xa68] sm:$0xff]
    %v356 = vld [vmem:[%s1 + $0xa70] sm:$0xff]
    %v357 = vld [vmem:[%s1 + $0xa78] sm:$0xff]
    %v358 = vld [vmem:[%s1 + $0xa80] sm:$0xff]
    %v359 = vld [vmem:[%s1 + $0xa88] sm:$0xff]
    %v360 = vld [vmem:[%s1 + $0xa90] sm:$0xff]
    %v361 = vld [vmem:[%s1 + $0xa98] sm:$0xff]
    %v362 = vld [vmem:[%s1 + $0xaa0] sm:$0xff]
    %v363 = vld [vmem:[%s1 + $0xaa8] sm:$0xff]
    %v364 = vld [vmem:[%s1 + $0xab0] sm:$0xff]
    %v365 = vld [vmem:[%s1 + $0xab8] sm:$0xff]
    %v366 = vld [vmem:[%s1 + $0xac0] sm:$0xff]
    %v367 = vld [vmem:[%s1 + $0xac8] sm:$0xff]
    %v368 = vld [vmem:[%s1 + $0xad0] sm:$0xff]
    %v369 = vld [vmem:[%s1 + $0xad8] sm:$0xff]
    %v370 = vld [vmem:[%s1 + $0xae0] sm:$0xff]
    %v371 = vld [vmem:[%s1 + $0xae8] sm:$0xff]
    %v372 = vld [vmem:[%s1 + $0xaf0] sm:$0xff]
    %v373 = vld [vmem:[%s1 + $0xaf8] sm:$0xff]
    %v374 = vld [vmem:[%s1 + $0xb00] sm:$0xff]
    %v375 = vld [vmem:[%s1 + $0xb08] sm:$0xff]
    %v376 = vld [vmem:[%s1 + $0xb10] sm:$0xff]
    %v377 = vld [vmem:[%s1 + $0xb18] sm:$0xff]
    %v378 = vld [vmem:[%s1 + $0xb20] sm:$0xff]
    %v379 = vld [vmem:[%s1 + $0xb28] sm:$0xff]
    %v380 = vld [vmem:[%s1 + $0xb30] sm:$0xff]
    %v381 = vld [vmem:[%s1 + $0xb38] sm:$0xff]
    %v382 = vld [vmem:[%s1 + $0xb40] sm:$0xff]
    %v383 = vld [vmem:[%s1 + $0xb48] sm:$0xff]
    %v384 = vld [vmem:[%s1 + $0xb50] sm:$0xff]
    %v385 = vld [vmem:[%s1 + $0xb58] sm:$0xff]
    %v386 = vld [vmem:[%s1 + $0xb60] sm:$0xff]
    %v387 = vld [vmem:[%s1 + $0xb68] sm:$0xff]
    %v388 = vld [vmem:[%s1 + $0xb70] sm:$0xff]
    %v389 = vld [vmem:[%s1 + $0xb78] sm:$0xff]
    %v390 = vld [vmem:[%s1 + $0xb80] sm:$0xff]
    %v391 = vld [vmem:[%s1 + $0xb88] sm:$0xff]
    %v392 = vld [vmem:[%s1 + $0xb90] sm:$0xff]
    %v393 = vld [vmem:[%s1 + $0xb98] sm:$0xff]
    %v394 = vld [vmem:[%s1 + $0xba0] sm:$0xff]
    %v395 = vld [vmem:[%s1 + $0xba8] sm:$0xff]
    %v396 = vld [vmem:[%s1 + $0xbb0] sm:$0xff]
    %v397 = vld [vmem:[%s1 + $0xbb8] sm:$0xff]
    %v398 = vld [vmem:[%s1 + $0xbc0] sm:$0xff]
    %v399 = vld [vmem:[%s1 + $0xbc8] sm:$0xff]
    %v400 = vld [vmem:[%s1 + $0xbd0] sm:$0xff]
    %v401 = vld [vmem:[%s1 + $0xbd8] sm:$0xff]
    %v402 = vld [vmem:[%s1 + $0xbe0] sm:$0xff]
    %v403 = vld [vmem:[%s1 + $0xbe8] sm:$0xff]
    %v404 = vld [vmem:[%s1 + $0xbf0] sm:$0xff]
    %v405 = vld [vmem:[%s1 + $0xbf8] sm:$0xff]
    %v406 = vld [vmem:[%s1 + $0xc00] sm:$0xff]
    %v407 = vld [vmem:[%s1 + $0xc08] sm:$0xff]
    %v408 = vld [vmem:[%s1 + $0xc10] sm:$0xff]
    %v409 = vld [vmem:[%s1 + $0xc18] sm:$0xff]
    %v410 = vld [vmem:[%s1 + $0xc20] sm:$0xff]
    %v411 = vld [vmem:[%s1 + $0xc28] sm:$0xff]
    %v412 = vld [vmem:[%s1 + $0xc30] sm:$0xff]
    %v413 = vld [vmem:[%s1 + $0xc38] sm:$0xff]
    %v414 = vld [vmem:[%s1 + $0xc40] sm:$0xff]
    %v415 = vld [vmem:[%s1 + $0xc48] sm:$0xff]
    %v416 = vld [vmem:[%s1 + $0xc50] sm:$0xff]
    %v417 = vld [vmem:[%s1 + $0xc58] sm:$0xff]
    %v418 = vld [vmem:[%s1 + $0xc60] sm:$0xff]
    %v419 = vld [vmem:[%s1 + $0xc68] sm:$0xff]
    %v420 = vld [vmem:[%s1 + $0xc70] sm:$0xff]
    %v421 = vld [vmem:[%s1 + $0xc78] sm:$0xff]
    %v422 = vld [vmem:[%s2] sm:$0xff]
    %v424 = vperm.slane %v422, 0
    %v425 = vperm.slane %v422, 1
    %v426 = vperm.slane %v422, 2
    %v427 = vperm.slane %v422, 3
    %v428 = vperm.slane %v422, 4
    %v429 = vperm.slane %v422, 5
    %v430 = vperm.slane %v422, 6
    %v431 = vperm.slane %v422, 7
    %441 = vst [vmem:[#allocation1] ss:$4 sm:$0xff] %v21
    %v442 = vld.sshfl [vmem:[#allocation1] sm:$0xff pattern:$0x73625140]
    %v443 = vld.sshfl [vmem:[#allocation1 + $0x8] sm:$0xff pattern:$0x73625140]
    %v444 = vld.sshfl [vmem:[#allocation1 + $0x10] sm:$0xff pattern:$0x73625140]
    %v445 = vld.sshfl [vmem:[#allocation1 + $0x18] sm:$0xff pattern:$0x73625140]
    %vm449 = vcmask 130048
    %v450 = vsel %vm449, %v445, 0
    %452 = vmatpush.msra.mxu0 %v142
    %453 = vmatpush.msra.mxu0 %v134
    %454 = vmatpush.msra.mxu0 %v126
    %455 = vmatpush.msra.mxu0 %v118
    %456 = vmatpush.msra.mxu0 %v110
    %457 = vmatpush.msra.mxu0 %v102
    %458 = vmatpush.msra.mxu0 %v94
    %459 = vmatpush.msra.mxu0 %v86
    %460 = vmatpush.msra.mxu0 %v78
    %461 = vmatpush.msra.mxu0 %v70
    %462 = vmatpush.msra.mxu0 %v62
    %463 = vmatpush.msra.mxu0 %v54
    %464 = vmatpush.msra.mxu0 %v46
    %465 = vmatpush.msra.mxu0 %v38
    %466 = vmatpush.msra.mxu0 %v30
    %467 = vmatpush.msra.mxu0 %v22
    %468 = vmatmul.f32.gmra.mxu0 %v442
    %v469 = vpop.f32.mrf.mxu0
    %v470 = vadd.f32 %v424, %v469
    %471 = vdwg.mxu0
    %472 = vmatpush.msra.mxu0 %v270
    %473 = vmatpush.msra.mxu0 %v262
    %474 = vmatpush.msra.mxu0 %v254
    %475 = vmatpush.msra.mxu0 %v246
    %476 = vmatpush.msra.mxu0 %v238
    %477 = vmatpush.msra.mxu0 %v230
    %478 = vmatpush.msra.mxu0 %v222
    %479 = vmatpush.msra.mxu0 %v214
    %480 = vmatpush.msra.mxu0 %v206
    %481 = vmatpush.msra.mxu0 %v198
    %482 = vmatpush.msra.mxu0 %v190
    %483 = vmatpush.msra.mxu0 %v182
    %484 = vmatpush.msra.mxu0 %v174
    %485 = vmatpush.msra.mxu0 %v166
    %486 = vmatpush.msra.mxu0 %v158
    %487 = vmatpush.msra.mxu0 %v150
    %488 = vmatmul.f32.gmra.mxu0 %v443
    %v489 = vpop.f32.mrf.mxu0
    %v490 = vadd.f32 %v470, %v489
    %491 = vdwg.mxu0
    %492 = vmatpush.msra.mxu0 %v398
    %493 = vmatpush.msra.mxu0 %v390
    %494 = vmatpush.msra.mxu0 %v382
    %495 = vmatpush.msra.mxu0 %v374
    %496 = vmatpush.msra.mxu0 %v366
    %497 = vmatpush.msra.mxu0 %v358
    %498 = vmatpush.msra.mxu0 %v350
    %499 = vmatpush.msra.mxu0 %v342
    %500 = vmatpush.msra.mxu0 %v334
    %501 = vmatpush.msra.mxu0 %v326
    %502 = vmatpush.msra.mxu0 %v318
    %503 = vmatpush.msra.mxu0 %v310
    %504 = vmatpush.msra.mxu0 %v302
    %505 = vmatpush.msra.mxu0 %v294
    %506 = vmatpush.msra.mxu0 %v286
    %507 = vmatpush.msra.mxu0 %v278
    %508 = vmatmul.f32.gmra.mxu0 %v444
    %v509 = vpop.f32.mrf.mxu0
    %v510 = vadd.f32 %v490, %v509
    %511 = vdwg.mxu0
    %512 = vmatpush.msra.mxu0 0.0
    %513 = vmatpush.msra.mxu0 0.0
    %514 = vmatpush.msra.mxu0 0.0
    %515 = vmatpush.msra.mxu0 0.0
    %516 = vmatpush.msra.mxu0 0.0
    %517 = vmatpush.msra.mxu0 0.0
    %518 = vmatpush.msra.mxu0 0.0
    %519 = vmatpush.msra.mxu0 0.0
    %520 = vmatpush.msra.mxu0 0.0
    %521 = vmatpush.msra.mxu0 0.0
    %522 = vmatpush.msra.mxu0 0.0
    %523 = vmatpush.msra.mxu0 0.0
    %524 = vmatpush.msra.mxu0 0.0
    %525 = vmatpush.msra.mxu0 0.0
    %526 = vmatpush.msra.mxu0 %v414
    %527 = vmatpush.msra.mxu0 %v406
    %528 = vmatmul.f32.gmra.mxu0 %v450
    %v529 = vpop.f32.mrf.mxu0
    %v530 = vadd.f32 %v510, %v529
    %531 = vdwg.mxu0
    %532 = vmatpush.msra.mxu0 %v143
    %533 = vmatpush.msra.mxu0 %v135
    %534 = vmatpush.msra.mxu0 %v127
    %535 = vmatpush.msra.mxu0 %v119
    %536 = vmatpush.msra.mxu0 %v111
    %537 = vmatpush.msra.mxu0 %v103
    %538 = vmatpush.msra.mxu0 %v95
    %539 = vmatpush.msra.mxu0 %v87
    %540 = vmatpush.msra.mxu0 %v79
    %541 = vmatpush.msra.mxu0 %v71
    %542 = vmatpush.msra.mxu0 %v63
    %543 = vmatpush.msra.mxu0 %v55
    %544 = vmatpush.msra.mxu0 %v47
    %545 = vmatpush.msra.mxu0 %v39
    %546 = vmatpush.msra.mxu0 %v31
    %547 = vmatpush.msra.mxu0 %v23
    %548 = vmatmul.f32.gmra.mxu0 %v442
    %v549 = vpop.f32.mrf.mxu0
    %v550 = vadd.f32 %v425, %v549
    %551 = vdwg.mxu0
    %552 = vmatpush.msra.mxu0 %v271
    %553 = vmatpush.msra.mxu0 %v263
    %554 = vmatpush.msra.mxu0 %v255
    %555 = vmatpush.msra.mxu0 %v247
    %556 = vmatpush.msra.mxu0 %v239
    %557 = vmatpush.msra.mxu0 %v231
    %558 = vmatpush.msra.mxu0 %v223
    %559 = vmatpush.msra.mxu0 %v215
    %560 = vmatpush.msra.mxu0 %v207
    %561 = vmatpush.msra.mxu0 %v199
    %562 = vmatpush.msra.mxu0 %v191
    %563 = vmatpush.msra.mxu0 %v183
    %564 = vmatpush.msra.mxu0 %v175
    %565 = vmatpush.msra.mxu0 %v167
    %566 = vmatpush.msra.mxu0 %v159
    %567 = vmatpush.msra.mxu0 %v151
    %568 = vmatmul.f32.gmra.mxu0 %v443
    %v569 = vpop.f32.mrf.mxu0
    %v570 = vadd.f32 %v550, %v569
    %571 = vdwg.mxu0
    %572 = vmatpush.msra.mxu0 %v399
    %573 = vmatpush.msra.mxu0 %v391
    %574 = vmatpush.msra.mxu0 %v383
    %575 = vmatpush.msra.mxu0 %v375
    %576 = vmatpush.msra.mxu0 %v367
    %577 = vmatpush.msra.mxu0 %v359
    %578 = vmatpush.msra.mxu0 %v351
    %579 = vmatpush.msra.mxu0 %v343
    %580 = vmatpush.msra.mxu0 %v335
    %581 = vmatpush.msra.mxu0 %v327
    %582 = vmatpush.msra.mxu0 %v319
    %583 = vmatpush.msra.mxu0 %v311
    %584 = vmatpush.msra.mxu0 %v303
    %585 = vmatpush.msra.mxu0 %v295
    %586 = vmatpush.msra.mxu0 %v287
    %587 = vmatpush.msra.mxu0 %v279
    %588 = vmatmul.f32.gmra.mxu0 %v444
    %v589 = vpop.f32.mrf.mxu0
    %v590 = vadd.f32 %v570, %v589
    %591 = vdwg.mxu0
    %592 = vmatpush.msra.mxu0 0.0
    %593 = vmatpush.msra.mxu0 0.0
    %594 = vmatpush.msra.mxu0 0.0
    %595 = vmatpush.msra.mxu0 0.0
    %596 = vmatpush.msra.mxu0 0.0
    %597 = vmatpush.msra.mxu0 0.0
    %598 = vmatpush.msra.mxu0 0.0
    %599 = vmatpush.msra.mxu0 0.0
    %600 = vmatpush.msra.mxu0 0.0
    %601 = vmatpush.msra.mxu0 0.0
    %602 = vmatpush.msra.mxu0 0.0
    %603 = vmatpush.msra.mxu0 0.0
    %604 = vmatpush.msra.mxu0 0.0
    %605 = vmatpush.msra.mxu0 0.0
    %606 = vmatpush.msra.mxu0 %v415
    %607 = vmatpush.msra.mxu0 %v407
    %608 = vmatmul.f32.gmra.mxu0 %v450
    %v609 = vpop.f32.mrf.mxu0
    %v610 = vadd.f32 %v590, %v609
    %611 = vdwg.mxu0
    %612 = vmatpush.msra.mxu0 %v144
    %613 = vmatpush.msra.mxu0 %v136
    %614 = vmatpush.msra.mxu0 %v128
    %615 = vmatpush.msra.mxu0 %v120
    %616 = vmatpush.msra.mxu0 %v112
    %617 = vmatpush.msra.mxu0 %v104
    %618 = vmatpush.msra.mxu0 %v96
    %619 = vmatpush.msra.mxu0 %v88
    %620 = vmatpush.msra.mxu0 %v80
    %621 = vmatpush.msra.mxu0 %v72
    %622 = vmatpush.msra.mxu0 %v64
    %623 = vmatpush.msra.mxu0 %v56
    %624 = vmatpush.msra.mxu0 %v48
    %625 = vmatpush.msra.mxu0 %v40
    %626 = vmatpush.msra.mxu0 %v32
    %627 = vmatpush.msra.mxu0 %v24
    %628 = vmatmul.f32.gmra.mxu0 %v442
    %v629 = vpop.f32.mrf.mxu0
    %v630 = vadd.f32 %v426, %v629
    %631 = vdwg.mxu0
    %632 = vmatpush.msra.mxu0 %v272
    %633 = vmatpush.msra.mxu0 %v264
    %634 = vmatpush.msra.mxu0 %v256
    %635 = vmatpush.msra.mxu0 %v248
    %636 = vmatpush.msra.mxu0 %v240
    %637 = vmatpush.msra.mxu0 %v232
    %638 = vmatpush.msra.mxu0 %v224
    %639 = vmatpush.msra.mxu0 %v216
    %640 = vmatpush.msra.mxu0 %v208
    %641 = vmatpush.msra.mxu0 %v200
    %642 = vmatpush.msra.mxu0 %v192
    %643 = vmatpush.msra.mxu0 %v184
    %644 = vmatpush.msra.mxu0 %v176
    %645 = vmatpush.msra.mxu0 %v168
    %646 = vmatpush.msra.mxu0 %v160
    %647 = vmatpush.msra.mxu0 %v152
    %648 = vmatmul.f32.gmra.mxu0 %v443
    %v649 = vpop.f32.mrf.mxu0
    %v650 = vadd.f32 %v630, %v649
    %651 = vdwg.mxu0
    %652 = vmatpush.msra.mxu0 %v400
    %653 = vmatpush.msra.mxu0 %v392
    %654 = vmatpush.msra.mxu0 %v384
    %655 = vmatpush.msra.mxu0 %v376
    %656 = vmatpush.msra.mxu0 %v368
    %657 = vmatpush.msra.mxu0 %v360
    %658 = vmatpush.msra.mxu0 %v352
    %659 = vmatpush.msra.mxu0 %v344
    %660 = vmatpush.msra.mxu0 %v336
    %661 = vmatpush.msra.mxu0 %v328
    %662 = vmatpush.msra.mxu0 %v320
    %663 = vmatpush.msra.mxu0 %v312
    %664 = vmatpush.msra.mxu0 %v304
    %665 = vmatpush.msra.mxu0 %v296
    %666 = vmatpush.msra.mxu0 %v288
    %667 = vmatpush.msra.mxu0 %v280
    %668 = vmatmul.f32.gmra.mxu0 %v444
    %v669 = vpop.f32.mrf.mxu0
    %v670 = vadd.f32 %v650, %v669
    %671 = vdwg.mxu0
    %672 = vmatpush.msra.mxu0 0.0
    %673 = vmatpush.msra.mxu0 0.0
    %674 = vmatpush.msra.mxu0 0.0
    %675 = vmatpush.msra.mxu0 0.0
    %676 = vmatpush.msra.mxu0 0.0
    %677 = vmatpush.msra.mxu0 0.0
    %678 = vmatpush.msra.mxu0 0.0
    %679 = vmatpush.msra.mxu0 0.0
    %680 = vmatpush.msra.mxu0 0.0
    %681 = vmatpush.msra.mxu0 0.0
    %682 = vmatpush.msra.mxu0 0.0
    %683 = vmatpush.msra.mxu0 0.0
    %684 = vmatpush.msra.mxu0 0.0
    %685 = vmatpush.msra.mxu0 0.0
    %686 = vmatpush.msra.mxu0 %v416
    %687 = vmatpush.msra.mxu0 %v408
    %688 = vmatmul.f32.gmra.mxu0 %v450
    %v689 = vpop.f32.mrf.mxu0
    %v690 = vadd.f32 %v670, %v689
    %691 = vdwg.mxu0
    %692 = vmatpush.msra.mxu0 %v145
    %693 = vmatpush.msra.mxu0 %v137
    %694 = vmatpush.msra.mxu0 %v129
    %695 = vmatpush.msra.mxu0 %v121
    %696 = vmatpush.msra.mxu0 %v113
    %697 = vmatpush.msra.mxu0 %v105
    %698 = vmatpush.msra.mxu0 %v97
    %699 = vmatpush.msra.mxu0 %v89
    %700 = vmatpush.msra.mxu0 %v81
    %701 = vmatpush.msra.mxu0 %v73
    %702 = vmatpush.msra.mxu0 %v65
    %703 = vmatpush.msra.mxu0 %v57
    %704 = vmatpush.msra.mxu0 %v49
    %705 = vmatpush.msra.mxu0 %v41
    %706 = vmatpush.msra.mxu0 %v33
    %707 = vmatpush.msra.mxu0 %v25
    %708 = vmatmul.f32.gmra.mxu0 %v442
    %v709 = vpop.f32.mrf.mxu0
    %v710 = vadd.f32 %v427, %v709
    %711 = vdwg.mxu0
    %712 = vmatpush.msra.mxu0 %v273
    %713 = vmatpush.msra.mxu0 %v265
    %714 = vmatpush.msra.mxu0 %v257
    %715 = vmatpush.msra.mxu0 %v249
    %716 = vmatpush.msra.mxu0 %v241
    %717 = vmatpush.msra.mxu0 %v233
    %718 = vmatpush.msra.mxu0 %v225
    %719 = vmatpush.msra.mxu0 %v217
    %720 = vmatpush.msra.mxu0 %v209
    %721 = vmatpush.msra.mxu0 %v201
    %722 = vmatpush.msra.mxu0 %v193
    %723 = vmatpush.msra.mxu0 %v185
    %724 = vmatpush.msra.mxu0 %v177
    %725 = vmatpush.msra.mxu0 %v169
    %726 = vmatpush.msra.mxu0 %v161
    %727 = vmatpush.msra.mxu0 %v153
    %728 = vmatmul.f32.gmra.mxu0 %v443
    %v729 = vpop.f32.mrf.mxu0
    %v730 = vadd.f32 %v710, %v729
    %731 = vdwg.mxu0
    %732 = vmatpush.msra.mxu0 %v401
    %733 = vmatpush.msra.mxu0 %v393
    %734 = vmatpush.msra.mxu0 %v385
    %735 = vmatpush.msra.mxu0 %v377
    %736 = vmatpush.msra.mxu0 %v369
    %737 = vmatpush.msra.mxu0 %v361
    %738 = vmatpush.msra.mxu0 %v353
    %739 = vmatpush.msra.mxu0 %v345
    %740 = vmatpush.msra.mxu0 %v337
    %741 = vmatpush.msra.mxu0 %v329
    %742 = vmatpush.msra.mxu0 %v321
    %743 = vmatpush.msra.mxu0 %v313
    %744 = vmatpush.msra.mxu0 %v305
    %745 = vmatpush.msra.mxu0 %v297
    %746 = vmatpush.msra.mxu0 %v289
    %747 = vmatpush.msra.mxu0 %v281
    %748 = vmatmul.f32.gmra.mxu0 %v444
    %v749 = vpop.f32.mrf.mxu0
    %v750 = vadd.f32 %v730, %v749
    %751 = vdwg.mxu0
    %752 = vmatpush.msra.mxu0 0.0
    %753 = vmatpush.msra.mxu0 0.0
    %754 = vmatpush.msra.mxu0 0.0
    %755 = vmatpush.msra.mxu0 0.0
    %756 = vmatpush.msra.mxu0 0.0
    %757 = vmatpush.msra.mxu0 0.0
    %758 = vmatpush.msra.mxu0 0.0
    %759 = vmatpush.msra.mxu0 0.0
    %760 = vmatpush.msra.mxu0 0.0
    %761 = vmatpush.msra.mxu0 0.0
    %762 = vmatpush.msra.mxu0 0.0
    %763 = vmatpush.msra.mxu0 0.0
    %764 = vmatpush.msra.mxu0 0.0
    %765 = vmatpush.msra.mxu0 0.0
    %766 = vmatpush.msra.mxu0 %v417
    %767 = vmatpush.msra.mxu0 %v409
    %768 = vmatmul.f32.gmra.mxu0 %v450
    %v769 = vpop.f32.mrf.mxu0
    %v770 = vadd.f32 %v750, %v769
    %771 = vdwg.mxu0
    %772 = vmatpush.msra.mxu0 %v146
    %773 = vmatpush.msra.mxu0 %v138
    %774 = vmatpush.msra.mxu0 %v130
    %775 = vmatpush.msra.mxu0 %v122
    %776 = vmatpush.msra.mxu0 %v114
    %777 = vmatpush.msra.mxu0 %v106
    %778 = vmatpush.msra.mxu0 %v98
    %779 = vmatpush.msra.mxu0 %v90
    %780 = vmatpush.msra.mxu0 %v82
    %781 = vmatpush.msra.mxu0 %v74
    %782 = vmatpush.msra.mxu0 %v66
    %783 = vmatpush.msra.mxu0 %v58
    %784 = vmatpush.msra.mxu0 %v50
    %785 = vmatpush.msra.mxu0 %v42
    %786 = vmatpush.msra.mxu0 %v34
    %787 = vmatpush.msra.mxu0 %v26
    %788 = vmatmul.f32.gmra.mxu0 %v442
    %v789 = vpop.f32.mrf.mxu0
    %v790 = vadd.f32 %v428, %v789
    %791 = vdwg.mxu0
    %792 = vmatpush.msra.mxu0 %v274
    %793 = vmatpush.msra.mxu0 %v266
    %794 = vmatpush.msra.mxu0 %v258
    %795 = vmatpush.msra.mxu0 %v250
    %796 = vmatpush.msra.mxu0 %v242
    %797 = vmatpush.msra.mxu0 %v234
    %798 = vmatpush.msra.mxu0 %v226
    %799 = vmatpush.msra.mxu0 %v218
    %800 = vmatpush.msra.mxu0 %v210
    %801 = vmatpush.msra.mxu0 %v202
    %802 = vmatpush.msra.mxu0 %v194
    %803 = vmatpush.msra.mxu0 %v186
    %804 = vmatpush.msra.mxu0 %v178
    %805 = vmatpush.msra.mxu0 %v170
    %806 = vmatpush.msra.mxu0 %v162
    %807 = vmatpush.msra.mxu0 %v154
    %808 = vmatmul.f32.gmra.mxu0 %v443
    %v809 = vpop.f32.mrf.mxu0
    %v810 = vadd.f32 %v790, %v809
    %811 = vdwg.mxu0
    %812 = vmatpush.msra.mxu0 %v402
    %813 = vmatpush.msra.mxu0 %v394
    %814 = vmatpush.msra.mxu0 %v386
    %815 = vmatpush.msra.mxu0 %v378
    %816 = vmatpush.msra.mxu0 %v370
    %817 = vmatpush.msra.mxu0 %v362
    %818 = vmatpush.msra.mxu0 %v354
    %819 = vmatpush.msra.mxu0 %v346
    %820 = vmatpush.msra.mxu0 %v338
    %821 = vmatpush.msra.mxu0 %v330
    %822 = vmatpush.msra.mxu0 %v322
    %823 = vmatpush.msra.mxu0 %v314
    %824 = vmatpush.msra.mxu0 %v306
    %825 = vmatpush.msra.mxu0 %v298
    %826 = vmatpush.msra.mxu0 %v290
    %827 = vmatpush.msra.mxu0 %v282
    %828 = vmatmul.f32.gmra.mxu0 %v444
    %v829 = vpop.f32.mrf.mxu0
    %v830 = vadd.f32 %v810, %v829
    %831 = vdwg.mxu0
    %832 = vmatpush.msra.mxu0 0.0
    %833 = vmatpush.msra.mxu0 0.0
    %834 = vmatpush.msra.mxu0 0.0
    %835 = vmatpush.msra.mxu0 0.0
    %836 = vmatpush.msra.mxu0 0.0
    %837 = vmatpush.msra.mxu0 0.0
    %838 = vmatpush.msra.mxu0 0.0
    %839 = vmatpush.msra.mxu0 0.0
    %840 = vmatpush.msra.mxu0 0.0
    %841 = vmatpush.msra.mxu0 0.0
    %842 = vmatpush.msra.mxu0 0.0
    %843 = vmatpush.msra.mxu0 0.0
    %844 = vmatpush.msra.mxu0 0.0
    %845 = vmatpush.msra.mxu0 0.0
    %846 = vmatpush.msra.mxu0 %v418
    %847 = vmatpush.msra.mxu0 %v410
    %848 = vmatmul.f32.gmra.mxu0 %v450
    %v849 = vpop.f32.mrf.mxu0
    %v850 = vadd.f32 %v830, %v849
    %851 = vdwg.mxu0
    %852 = vmatpush.msra.mxu0 %v147
    %853 = vmatpush.msra.mxu0 %v139
    %854 = vmatpush.msra.mxu0 %v131
    %855 = vmatpush.msra.mxu0 %v123
    %856 = vmatpush.msra.mxu0 %v115
    %857 = vmatpush.msra.mxu0 %v107
    %858 = vmatpush.msra.mxu0 %v99
    %859 = vmatpush.msra.mxu0 %v91
    %860 = vmatpush.msra.mxu0 %v83
    %861 = vmatpush.msra.mxu0 %v75
    %862 = vmatpush.msra.mxu0 %v67
    %863 = vmatpush.msra.mxu0 %v59
    %864 = vmatpush.msra.mxu0 %v51
    %865 = vmatpush.msra.mxu0 %v43
    %866 = vmatpush.msra.mxu0 %v35
    %867 = vmatpush.msra.mxu0 %v27
    %868 = vmatmul.f32.gmra.mxu0 %v442
    %v869 = vpop.f32.mrf.mxu0
    %v870 = vadd.f32 %v429, %v869
    %871 = vdwg.mxu0
    %872 = vmatpush.msra.mxu0 %v275
    %873 = vmatpush.msra.mxu0 %v267
    %874 = vmatpush.msra.mxu0 %v259
    %875 = vmatpush.msra.mxu0 %v251
    %876 = vmatpush.msra.mxu0 %v243
    %877 = vmatpush.msra.mxu0 %v235
    %878 = vmatpush.msra.mxu0 %v227
    %879 = vmatpush.msra.mxu0 %v219
    %880 = vmatpush.msra.mxu0 %v211
    %881 = vmatpush.msra.mxu0 %v203
    %882 = vmatpush.msra.mxu0 %v195
    %883 = vmatpush.msra.mxu0 %v187
    %884 = vmatpush.msra.mxu0 %v179
    %885 = vmatpush.msra.mxu0 %v171
    %886 = vmatpush.msra.mxu0 %v163
    %887 = vmatpush.msra.mxu0 %v155
    %888 = vmatmul.f32.gmra.mxu0 %v443
    %v889 = vpop.f32.mrf.mxu0
    %v890 = vadd.f32 %v870, %v889
    %891 = vdwg.mxu0
    %892 = vmatpush.msra.mxu0 %v403
    %893 = vmatpush.msra.mxu0 %v395
    %894 = vmatpush.msra.mxu0 %v387
    %895 = vmatpush.msra.mxu0 %v379
    %896 = vmatpush.msra.mxu0 %v371
    %897 = vmatpush.msra.mxu0 %v363
    %898 = vmatpush.msra.mxu0 %v355
    %899 = vmatpush.msra.mxu0 %v347
    %900 = vmatpush.msra.mxu0 %v339
    %901 = vmatpush.msra.mxu0 %v331
    %902 = vmatpush.msra.mxu0 %v323
    %903 = vmatpush.msra.mxu0 %v315
    %904 = vmatpush.msra.mxu0 %v307
    %905 = vmatpush.msra.mxu0 %v299
    %906 = vmatpush.msra.mxu0 %v291
    %907 = vmatpush.msra.mxu0 %v283
    %908 = vmatmul.f32.gmra.mxu0 %v444
    %v909 = vpop.f32.mrf.mxu0
    %v910 = vadd.f32 %v890, %v909
    %911 = vdwg.mxu0
    %912 = vmatpush.msra.mxu0 0.0
    %913 = vmatpush.msra.mxu0 0.0
    %914 = vmatpush.msra.mxu0 0.0
    %915 = vmatpush.msra.mxu0 0.0
    %916 = vmatpush.msra.mxu0 0.0
    %917 = vmatpush.msra.mxu0 0.0
    %918 = vmatpush.msra.mxu0 0.0
    %919 = vmatpush.msra.mxu0 0.0
    %920 = vmatpush.msra.mxu0 0.0
    %921 = vmatpush.msra.mxu0 0.0
    %922 = vmatpush.msra.mxu0 0.0
    %923 = vmatpush.msra.mxu0 0.0
    %924 = vmatpush.msra.mxu0 0.0
    %925 = vmatpush.msra.mxu0 0.0
    %926 = vmatpush.msra.mxu0 %v419
    %927 = vmatpush.msra.mxu0 %v411
    %928 = vmatmul.f32.gmra.mxu0 %v450
    %v929 = vpop.f32.mrf.mxu0
    %v930 = vadd.f32 %v910, %v929
    %931 = vdwg.mxu0
    %932 = vmatpush.msra.mxu0 %v148
    %933 = vmatpush.msra.mxu0 %v140
    %934 = vmatpush.msra.mxu0 %v132
    %935 = vmatpush.msra.mxu0 %v124
    %936 = vmatpush.msra.mxu0 %v116
    %937 = vmatpush.msra.mxu0 %v108
    %938 = vmatpush.msra.mxu0 %v100
    %939 = vmatpush.msra.mxu0 %v92
    %940 = vmatpush.msra.mxu0 %v84
    %941 = vmatpush.msra.mxu0 %v76
    %942 = vmatpush.msra.mxu0 %v68
    %943 = vmatpush.msra.mxu0 %v60
    %944 = vmatpush.msra.mxu0 %v52
    %945 = vmatpush.msra.mxu0 %v44
    %946 = vmatpush.msra.mxu0 %v36
    %947 = vmatpush.msra.mxu0 %v28
    %948 = vmatmul.f32.gmra.mxu0 %v442
    %v949 = vpop.f32.mrf.mxu0
    %v950 = vadd.f32 %v430, %v949
    %951 = vdwg.mxu0
    %952 = vmatpush.msra.mxu0 %v276
    %953 = vmatpush.msra.mxu0 %v268
    %954 = vmatpush.msra.mxu0 %v260
    %955 = vmatpush.msra.mxu0 %v252
    %956 = vmatpush.msra.mxu0 %v244
    %957 = vmatpush.msra.mxu0 %v236
    %958 = vmatpush.msra.mxu0 %v228
    %959 = vmatpush.msra.mxu0 %v220
    %960 = vmatpush.msra.mxu0 %v212
    %961 = vmatpush.msra.mxu0 %v204
    %962 = vmatpush.msra.mxu0 %v196
    %963 = vmatpush.msra.mxu0 %v188
    %964 = vmatpush.msra.mxu0 %v180
    %965 = vmatpush.msra.mxu0 %v172
    %966 = vmatpush.msra.mxu0 %v164
    %967 = vmatpush.msra.mxu0 %v156
    %968 = vmatmul.f32.gmra.mxu0 %v443
    %v969 = vpop.f32.mrf.mxu0
    %v970 = vadd.f32 %v950, %v969
    %971 = vdwg.mxu0
    %972 = vmatpush.msra.mxu0 %v404
    %973 = vmatpush.msra.mxu0 %v396
    %974 = vmatpush.msra.mxu0 %v388
    %975 = vmatpush.msra.mxu0 %v380
    %976 = vmatpush.msra.mxu0 %v372
    %977 = vmatpush.msra.mxu0 %v364
    %978 = vmatpush.msra.mxu0 %v356
    %979 = vmatpush.msra.mxu0 %v348
    %980 = vmatpush.msra.mxu0 %v340
    %981 = vmatpush.msra.mxu0 %v332
    %982 = vmatpush.msra.mxu0 %v324
    %983 = vmatpush.msra.mxu0 %v316
    %984 = vmatpush.msra.mxu0 %v308
    %985 = vmatpush.msra.mxu0 %v300
    %986 = vmatpush.msra.mxu0 %v292
    %987 = vmatpush.msra.mxu0 %v284
    %988 = vmatmul.f32.gmra.mxu0 %v444
    %v989 = vpop.f32.mrf.mxu0
    %v990 = vadd.f32 %v970, %v989
    %991 = vdwg.mxu0
    %992 = vmatpush.msra.mxu0 0.0
    %993 = vmatpush.msra.mxu0 0.0
    %994 = vmatpush.msra.mxu0 0.0
    %995 = vmatpush.msra.mxu0 0.0
    %996 = vmatpush.msra.mxu0 0.0
    %997 = vmatpush.msra.mxu0 0.0
    %998 = vmatpush.msra.mxu0 0.0
    %999 = vmatpush.msra.mxu0 0.0
    %1000 = vmatpush.msra.mxu0 0.0
    %1001 = vmatpush.msra.mxu0 0.0
    %1002 = vmatpush.msra.mxu0 0.0
    %1003 = vmatpush.msra.mxu0 0.0
    %1004 = vmatpush.msra.mxu0 0.0
    %1005 = vmatpush.msra.mxu0 0.0
    %1006 = vmatpush.msra.mxu0 %v420
    %1007 = vmatpush.msra.mxu0 %v412
    %1008 = vmatmul.f32.gmra.mxu0 %v450
    %v1009 = vpop.f32.mrf.mxu0
    %v1010 = vadd.f32 %v990, %v1009
    %1011 = vdwg.mxu0
    %1012 = vmatpush.msra.mxu0 %v149
    %1013 = vmatpush.msra.mxu0 %v141
    %1014 = vmatpush.msra.mxu0 %v133
    %1015 = vmatpush.msra.mxu0 %v125
    %1016 = vmatpush.msra.mxu0 %v117
    %1017 = vmatpush.msra.mxu0 %v109
    %1018 = vmatpush.msra.mxu0 %v101
    %1019 = vmatpush.msra.mxu0 %v93
    %1020 = vmatpush.msra.mxu0 %v85
    %1021 = vmatpush.msra.mxu0 %v77
    %1022 = vmatpush.msra.mxu0 %v69
    %1023 = vmatpush.msra.mxu0 %v61
    %1024 = vmatpush.msra.mxu0 %v53
    %1025 = vmatpush.msra.mxu0 %v45
    %1026 = vmatpush.msra.mxu0 %v37
    %1027 = vmatpush.msra.mxu0 %v29
    %1028 = vmatmul.f32.gmra.mxu0 %v442
    %v1029 = vpop.f32.mrf.mxu0
    %v1030 = vadd.f32 %v431, %v1029
    %1031 = vdwg.mxu0
    %1032 = vmatpush.msra.mxu0 %v277
    %1033 = vmatpush.msra.mxu0 %v269
    %1034 = vmatpush.msra.mxu0 %v261
    %1035 = vmatpush.msra.mxu0 %v253
    %1036 = vmatpush.msra.mxu0 %v245
    %1037 = vmatpush.msra.mxu0 %v237
    %1038 = vmatpush.msra.mxu0 %v229
    %1039 = vmatpush.msra.mxu0 %v221
    %1040 = vmatpush.msra.mxu0 %v213
    %1041 = vmatpush.msra.mxu0 %v205
    %1042 = vmatpush.msra.mxu0 %v197
    %1043 = vmatpush.msra.mxu0 %v189
    %1044 = vmatpush.msra.mxu0 %v181
    %1045 = vmatpush.msra.mxu0 %v173
    %1046 = vmatpush.msra.mxu0 %v165
    %1047 = vmatpush.msra.mxu0 %v157
    %1048 = vmatmul.f32.gmra.mxu0 %v443
    %v1049 = vpop.f32.mrf.mxu0
    %v1050 = vadd.f32 %v1030, %v1049
    %1051 = vdwg.mxu0
    %1052 = vmatpush.msra.mxu0 %v405
    %1053 = vmatpush.msra.mxu0 %v397
    %1054 = vmatpush.msra.mxu0 %v389
    %1055 = vmatpush.msra.mxu0 %v381
    %1056 = vmatpush.msra.mxu0 %v373
    %1057 = vmatpush.msra.mxu0 %v365
    %1058 = vmatpush.msra.mxu0 %v357
    %1059 = vmatpush.msra.mxu0 %v349
    %1060 = vmatpush.msra.mxu0 %v341
    %1061 = vmatpush.msra.mxu0 %v333
    %1062 = vmatpush.msra.mxu0 %v325
    %1063 = vmatpush.msra.mxu0 %v317
    %1064 = vmatpush.msra.mxu0 %v309
    %1065 = vmatpush.msra.mxu0 %v301
    %1066 = vmatpush.msra.mxu0 %v293
    %1067 = vmatpush.msra.mxu0 %v285
    %1068 = vmatmul.f32.gmra.mxu0 %v444
    %v1069 = vpop.f32.mrf.mxu0
    %v1070 = vadd.f32 %v1050, %v1069
    %1071 = vdwg.mxu0
    %1072 = vmatpush.msra.mxu0 0.0
    %1073 = vmatpush.msra.mxu0 0.0
    %1074 = vmatpush.msra.mxu0 0.0
    %1075 = vmatpush.msra.mxu0 0.0
    %1076 = vmatpush.msra.mxu0 0.0
    %1077 = vmatpush.msra.mxu0 0.0
    %1078 = vmatpush.msra.mxu0 0.0
    %1079 = vmatpush.msra.mxu0 0.0
    %1080 = vmatpush.msra.mxu0 0.0
    %1081 = vmatpush.msra.mxu0 0.0
    %1082 = vmatpush.msra.mxu0 0.0
    %1083 = vmatpush.msra.mxu0 0.0
    %1084 = vmatpush.msra.mxu0 0.0
    %1085 = vmatpush.msra.mxu0 0.0
    %1086 = vmatpush.msra.mxu0 %v421
    %1087 = vmatpush.msra.mxu0 %v413
    %1088 = vmatmul.f32.gmra.mxu0 %v450
    %v1089 = vpop.f32.mrf.mxu0
    %v1090 = vadd.f32 %v1070, %v1089
    %1091 = vdwg.mxu0
    %v1092 = vld [vmem:[%s3] sm:$0xff]
    %v1093 = vld [vmem:[%s3 + $0x8] sm:$0xff]
    %v1094 = vld [vmem:[%s3 + $0x10] sm:$0xff]
    %v1095 = vld [vmem:[%s3 + $0x18] sm:$0xff]
    %v1096 = vld [vmem:[%s3 + $0x20] sm:$0xff]
    %v1097 = vld [vmem:[%s3 + $0x28] sm:$0xff]
    %v1098 = vld [vmem:[%s3 + $0x30] sm:$0xff]
    %v1099 = vld [vmem:[%s3 + $0x38] sm:$0xff]
    %v1100 = vld [vmem:[%s3 + $0x40] sm:$0xff]
    %v1101 = vld [vmem:[%s3 + $0x48] sm:$0xff]
    %v1102 = vld [vmem:[%s3 + $0x50] sm:$0xff]
    %v1103 = vld [vmem:[%s3 + $0x58] sm:$0xff]
    %v1104 = vld [vmem:[%s3 + $0x60] sm:$0xff]
    %v1105 = vld [vmem:[%s3 + $0x68] sm:$0xff]
    %v1106 = vld [vmem:[%s3 + $0x70] sm:$0xff]
    %v1107 = vld [vmem:[%s3 + $0x78] sm:$0xff]
    %v1108 = vld [vmem:[%s3 + $0x80] sm:$0xff]
    %v1109 = vld [vmem:[%s3 + $0x88] sm:$0xff]
    %v1110 = vld [vmem:[%s3 + $0x90] sm:$0xff]
    %v1111 = vld [vmem:[%s3 + $0x98] sm:$0xff]
    %v1112 = vld [vmem:[%s3 + $0xa0] sm:$0xff]
    %v1113 = vld [vmem:[%s3 + $0xa8] sm:$0xff]
    %v1114 = vld [vmem:[%s3 + $0xb0] sm:$0xff]
    %v1115 = vld [vmem:[%s3 + $0xb8] sm:$0xff]
    %v1116 = vld [vmem:[%s3 + $0xc0] sm:$0xff]
    %v1117 = vld [vmem:[%s3 + $0xc8] sm:$0xff]
    %v1118 = vld [vmem:[%s3 + $0xd0] sm:$0xff]
    %v1119 = vld [vmem:[%s3 + $0xd8] sm:$0xff]
    %v1120 = vld [vmem:[%s3 + $0xe0] sm:$0xff]
    %v1121 = vld [vmem:[%s3 + $0xe8] sm:$0xff]
    %v1122 = vld [vmem:[%s3 + $0xf0] sm:$0xff]
    %v1123 = vld [vmem:[%s3 + $0xf8] sm:$0xff]
    %v1124 = vld [vmem:[%s3 + $0x100] sm:$0xff]
    %v1125 = vld [vmem:[%s3 + $0x108] sm:$0xff]
    %v1126 = vld [vmem:[%s3 + $0x110] sm:$0xff]
    %v1127 = vld [vmem:[%s3 + $0x118] sm:$0xff]
    %v1128 = vld [vmem:[%s3 + $0x120] sm:$0xff]
    %v1129 = vld [vmem:[%s3 + $0x128] sm:$0xff]
    %v1130 = vld [vmem:[%s3 + $0x130] sm:$0xff]
    %v1131 = vld [vmem:[%s3 + $0x138] sm:$0xff]
    %v1132 = vld [vmem:[%s3 + $0x140] sm:$0xff]
    %v1133 = vld [vmem:[%s3 + $0x148] sm:$0xff]
    %v1134 = vld [vmem:[%s3 + $0x150] sm:$0xff]
    %v1135 = vld [vmem:[%s3 + $0x158] sm:$0xff]
    %v1136 = vld [vmem:[%s3 + $0x160] sm:$0xff]
    %v1137 = vld [vmem:[%s3 + $0x168] sm:$0xff]
    %v1138 = vld [vmem:[%s3 + $0x170] sm:$0xff]
    %v1139 = vld [vmem:[%s3 + $0x178] sm:$0xff]
    %v1140 = vld [vmem:[%s3 + $0x180] sm:$0xff]
    %v1141 = vld [vmem:[%s3 + $0x188] sm:$0xff]
    %v1142 = vld [vmem:[%s3 + $0x190] sm:$0xff]
    %v1143 = vld [vmem:[%s3 + $0x198] sm:$0xff]
    %v1144 = vld [vmem:[%s3 + $0x1a0] sm:$0xff]
    %v1145 = vld [vmem:[%s3 + $0x1a8] sm:$0xff]
    %v1146 = vld [vmem:[%s3 + $0x1b0] sm:$0xff]
    %v1147 = vld [vmem:[%s3 + $0x1b8] sm:$0xff]
    %v1148 = vld [vmem:[%s3 + $0x1c0] sm:$0xff]
    %v1149 = vld [vmem:[%s3 + $0x1c8] sm:$0xff]
    %v1150 = vld [vmem:[%s3 + $0x1d0] sm:$0xff]
    %v1151 = vld [vmem:[%s3 + $0x1d8] sm:$0xff]
    %v1152 = vld [vmem:[%s3 + $0x1e0] sm:$0xff]
    %v1153 = vld [vmem:[%s3 + $0x1e8] sm:$0xff]
    %v1154 = vld [vmem:[%s3 + $0x1f0] sm:$0xff]
    %v1155 = vld [vmem:[%s3 + $0x1f8] sm:$0xff]
    %v1156 = vld [vmem:[%s3 + $0x200] sm:$0xff]
    %v1157 = vld [vmem:[%s3 + $0x208] sm:$0xff]
    %v1158 = vld [vmem:[%s3 + $0x210] sm:$0xff]
    %v1159 = vld [vmem:[%s3 + $0x218] sm:$0xff]
    %v1160 = vld [vmem:[%s3 + $0x220] sm:$0xff]
    %v1161 = vld [vmem:[%s3 + $0x228] sm:$0xff]
    %v1162 = vld [vmem:[%s3 + $0x230] sm:$0xff]
    %v1163 = vld [vmem:[%s3 + $0x238] sm:$0xff]
    %v1164 = vld [vmem:[%s3 + $0x240] sm:$0xff]
    %v1165 = vld [vmem:[%s3 + $0x248] sm:$0xff]
    %v1166 = vld [vmem:[%s3 + $0x250] sm:$0xff]
    %v1167 = vld [vmem:[%s3 + $0x258] sm:$0xff]
    %v1168 = vld [vmem:[%s3 + $0x260] sm:$0xff]
    %v1169 = vld [vmem:[%s3 + $0x268] sm:$0xff]
    %v1170 = vld [vmem:[%s3 + $0x270] sm:$0xff]
    %v1171 = vld [vmem:[%s3 + $0x278] sm:$0xff]
    %v1172 = vld [vmem:[%s3 + $0x280] sm:$0xff]
    %v1173 = vld [vmem:[%s3 + $0x288] sm:$0xff]
    %v1174 = vld [vmem:[%s3 + $0x290] sm:$0xff]
    %v1175 = vld [vmem:[%s3 + $0x298] sm:$0xff]
    %v1176 = vld [vmem:[%s3 + $0x2a0] sm:$0xff]
    %v1177 = vld [vmem:[%s3 + $0x2a8] sm:$0xff]
    %v1178 = vld [vmem:[%s3 + $0x2b0] sm:$0xff]
    %v1179 = vld [vmem:[%s3 + $0x2b8] sm:$0xff]
    %v1180 = vld [vmem:[%s3 + $0x2c0] sm:$0xff]
    %v1181 = vld [vmem:[%s3 + $0x2c8] sm:$0xff]
    %v1182 = vld [vmem:[%s3 + $0x2d0] sm:$0xff]
    %v1183 = vld [vmem:[%s3 + $0x2d8] sm:$0xff]
    %v1184 = vld [vmem:[%s3 + $0x2e0] sm:$0xff]
    %v1185 = vld [vmem:[%s3 + $0x2e8] sm:$0xff]
    %v1186 = vld [vmem:[%s3 + $0x2f0] sm:$0xff]
    %v1187 = vld [vmem:[%s3 + $0x2f8] sm:$0xff]
    %v1188 = vld [vmem:[%s3 + $0x300] sm:$0xff]
    %v1189 = vld [vmem:[%s3 + $0x308] sm:$0xff]
    %v1190 = vld [vmem:[%s3 + $0x310] sm:$0xff]
    %v1191 = vld [vmem:[%s3 + $0x318] sm:$0xff]
    %v1192 = vld [vmem:[%s3 + $0x320] sm:$0xff]
    %v1193 = vld [vmem:[%s3 + $0x328] sm:$0xff]
    %v1194 = vld [vmem:[%s3 + $0x330] sm:$0xff]
    %v1195 = vld [vmem:[%s3 + $0x338] sm:$0xff]
    %v1196 = vld [vmem:[%s3 + $0x340] sm:$0xff]
    %v1197 = vld [vmem:[%s3 + $0x348] sm:$0xff]
    %v1198 = vld [vmem:[%s3 + $0x350] sm:$0xff]
    %v1199 = vld [vmem:[%s3 + $0x358] sm:$0xff]
    %v1200 = vld [vmem:[%s3 + $0x360] sm:$0xff]
    %v1201 = vld [vmem:[%s3 + $0x368] sm:$0xff]
    %v1202 = vld [vmem:[%s3 + $0x370] sm:$0xff]
    %v1203 = vld [vmem:[%s3 + $0x378] sm:$0xff]
    %v1204 = vld [vmem:[%s3 + $0x380] sm:$0xff]
    %v1205 = vld [vmem:[%s3 + $0x388] sm:$0xff]
    %v1206 = vld [vmem:[%s3 + $0x390] sm:$0xff]
    %v1207 = vld [vmem:[%s3 + $0x398] sm:$0xff]
    %v1208 = vld [vmem:[%s3 + $0x3a0] sm:$0xff]
    %v1209 = vld [vmem:[%s3 + $0x3a8] sm:$0xff]
    %v1210 = vld [vmem:[%s3 + $0x3b0] sm:$0xff]
    %v1211 = vld [vmem:[%s3 + $0x3b8] sm:$0xff]
    %v1212 = vld [vmem:[%s3 + $0x3c0] sm:$0xff]
    %v1213 = vld [vmem:[%s3 + $0x3c8] sm:$0xff]
    %v1214 = vld [vmem:[%s3 + $0x3d0] sm:$0xff]
    %v1215 = vld [vmem:[%s3 + $0x3d8] sm:$0xff]
    %v1216 = vld [vmem:[%s3 + $0x3e0] sm:$0xff]
    %v1217 = vld [vmem:[%s3 + $0x3e8] sm:$0xff]
    %v1218 = vld [vmem:[%s3 + $0x3f0] sm:$0xff]
    %v1219 = vld [vmem:[%s3 + $0x3f8] sm:$0xff]
    %v1220 = vld [vmem:[%s4] sm:$0x1]
    %v1222 = vperm.slane %v1220, 0
    %1224 = vmatpush.msra.mxu0 %v1107
    %1225 = vmatpush.msra.mxu0 %v1106
    %1226 = vmatpush.msra.mxu0 %v1105
    %1227 = vmatpush.msra.mxu0 %v1104
    %1228 = vmatpush.msra.mxu0 %v1103
    %1229 = vmatpush.msra.mxu0 %v1102
    %1230 = vmatpush.msra.mxu0 %v1101
    %1231 = vmatpush.msra.mxu0 %v1100
    %1232 = vmatpush.msra.mxu0 %v1099
    %1233 = vmatpush.msra.mxu0 %v1098
    %1234 = vmatpush.msra.mxu0 %v1097
    %1235 = vmatpush.msra.mxu0 %v1096
    %1236 = vmatpush.msra.mxu0 %v1095
    %1237 = vmatpush.msra.mxu0 %v1094
    %1238 = vmatpush.msra.mxu0 %v1093
    %1239 = vmatpush.msra.mxu0 %v1092
    %1240 = vmatmul.f32.gmra.mxu0 %v530
    %v1241 = vpop.f32.mrf.mxu0
    %v1242 = vadd.f32 %v1222, %v1241
    %1243 = vdwg.mxu0
    %1244 = vmatpush.msra.mxu0 %v1123
    %1245 = vmatpush.msra.mxu0 %v1122
    %1246 = vmatpush.msra.mxu0 %v1121
    %1247 = vmatpush.msra.mxu0 %v1120
    %1248 = vmatpush.msra.mxu0 %v1119
    %1249 = vmatpush.msra.mxu0 %v1118
    %1250 = vmatpush.msra.mxu0 %v1117
    %1251 = vmatpush.msra.mxu0 %v1116
    %1252 = vmatpush.msra.mxu0 %v1115
    %1253 = vmatpush.msra.mxu0 %v1114
    %1254 = vmatpush.msra.mxu0 %v1113
    %1255 = vmatpush.msra.mxu0 %v1112
    %1256 = vmatpush.msra.mxu0 %v1111
    %1257 = vmatpush.msra.mxu0 %v1110
    %1258 = vmatpush.msra.mxu0 %v1109
    %1259 = vmatpush.msra.mxu0 %v1108
    %1260 = vmatmul.f32.gmra.mxu0 %v610
    %v1261 = vpop.f32.mrf.mxu0
    %v1262 = vadd.f32 %v1242, %v1261
    %1263 = vdwg.mxu0
    %1264 = vmatpush.msra.mxu0 %v1139
    %1265 = vmatpush.msra.mxu0 %v1138
    %1266 = vmatpush.msra.mxu0 %v1137
    %1267 = vmatpush.msra.mxu0 %v1136
    %1268 = vmatpush.msra.mxu0 %v1135
    %1269 = vmatpush.msra.mxu0 %v1134
    %1270 = vmatpush.msra.mxu0 %v1133
    %1271 = vmatpush.msra.mxu0 %v1132
    %1272 = vmatpush.msra.mxu0 %v1131
    %1273 = vmatpush.msra.mxu0 %v1130
    %1274 = vmatpush.msra.mxu0 %v1129
    %1275 = vmatpush.msra.mxu0 %v1128
    %1276 = vmatpush.msra.mxu0 %v1127
    %1277 = vmatpush.msra.mxu0 %v1126
    %1278 = vmatpush.msra.mxu0 %v1125
    %1279 = vmatpush.msra.mxu0 %v1124
    %1280 = vmatmul.f32.gmra.mxu0 %v690
    %v1281 = vpop.f32.mrf.mxu0
    %v1282 = vadd.f32 %v1262, %v1281
    %1283 = vdwg.mxu0
    %1284 = vmatpush.msra.mxu0 %v1155
    %1285 = vmatpush.msra.mxu0 %v1154
    %1286 = vmatpush.msra.mxu0 %v1153
    %1287 = vmatpush.msra.mxu0 %v1152
    %1288 = vmatpush.msra.mxu0 %v1151
    %1289 = vmatpush.msra.mxu0 %v1150
    %1290 = vmatpush.msra.mxu0 %v1149
    %1291 = vmatpush.msra.mxu0 %v1148
    %1292 = vmatpush.msra.mxu0 %v1147
    %1293 = vmatpush.msra.mxu0 %v1146
    %1294 = vmatpush.msra.mxu0 %v1145
    %1295 = vmatpush.msra.mxu0 %v1144
    %1296 = vmatpush.msra.mxu0 %v1143
    %1297 = vmatpush.msra.mxu0 %v1142
    %1298 = vmatpush.msra.mxu0 %v1141
    %1299 = vmatpush.msra.mxu0 %v1140
    %1300 = vmatmul.f32.gmra.mxu0 %v770
    %v1301 = vpop.f32.mrf.mxu0
    %v1302 = vadd.f32 %v1282, %v1301
    %1303 = vdwg.mxu0
    %1304 = vmatpush.msra.mxu0 %v1171
    %1305 = vmatpush.msra.mxu0 %v1170
    %1306 = vmatpush.msra.mxu0 %v1169
    %1307 = vmatpush.msra.mxu0 %v1168
    %1308 = vmatpush.msra.mxu0 %v1167
    %1309 = vmatpush.msra.mxu0 %v1166
    %1310 = vmatpush.msra.mxu0 %v1165
    %1311 = vmatpush.msra.mxu0 %v1164
    %1312 = vmatpush.msra.mxu0 %v1163
    %1313 = vmatpush.msra.mxu0 %v1162
    %1314 = vmatpush.msra.mxu0 %v1161
    %1315 = vmatpush.msra.mxu0 %v1160
    %1316 = vmatpush.msra.mxu0 %v1159
    %1317 = vmatpush.msra.mxu0 %v1158
    %1318 = vmatpush.msra.mxu0 %v1157
    %1319 = vmatpush.msra.mxu0 %v1156
    %1320 = vmatmul.f32.gmra.mxu0 %v850
    %v1321 = vpop.f32.mrf.mxu0
    %v1322 = vadd.f32 %v1302, %v1321
    %1323 = vdwg.mxu0
    %1324 = vmatpush.msra.mxu0 %v1187
    %1325 = vmatpush.msra.mxu0 %v1186
    %1326 = vmatpush.msra.mxu0 %v1185
    %1327 = vmatpush.msra.mxu0 %v1184
    %1328 = vmatpush.msra.mxu0 %v1183
    %1329 = vmatpush.msra.mxu0 %v1182
    %1330 = vmatpush.msra.mxu0 %v1181
    %1331 = vmatpush.msra.mxu0 %v1180
    %1332 = vmatpush.msra.mxu0 %v1179
    %1333 = vmatpush.msra.mxu0 %v1178
    %1334 = vmatpush.msra.mxu0 %v1177
    %1335 = vmatpush.msra.mxu0 %v1176
    %1336 = vmatpush.msra.mxu0 %v1175
    %1337 = vmatpush.msra.mxu0 %v1174
    %1338 = vmatpush.msra.mxu0 %v1173
    %1339 = vmatpush.msra.mxu0 %v1172
    %1340 = vmatmul.f32.gmra.mxu0 %v930
    %v1341 = vpop.f32.mrf.mxu0
    %v1342 = vadd.f32 %v1322, %v1341
    %1343 = vdwg.mxu0
    %1344 = vmatpush.msra.mxu0 %v1203
    %1345 = vmatpush.msra.mxu0 %v1202
    %1346 = vmatpush.msra.mxu0 %v1201
    %1347 = vmatpush.msra.mxu0 %v1200
    %1348 = vmatpush.msra.mxu0 %v1199
    %1349 = vmatpush.msra.mxu0 %v1198
    %1350 = vmatpush.msra.mxu0 %v1197
    %1351 = vmatpush.msra.mxu0 %v1196
    %1352 = vmatpush.msra.mxu0 %v1195
    %1353 = vmatpush.msra.mxu0 %v1194
    %1354 = vmatpush.msra.mxu0 %v1193
    %1355 = vmatpush.msra.mxu0 %v1192
    %1356 = vmatpush.msra.mxu0 %v1191
    %1357 = vmatpush.msra.mxu0 %v1190
    %1358 = vmatpush.msra.mxu0 %v1189
    %1359 = vmatpush.msra.mxu0 %v1188
    %1360 = vmatmul.f32.gmra.mxu0 %v1010
    %v1361 = vpop.f32.mrf.mxu0
    %v1362 = vadd.f32 %v1342, %v1361
    %1363 = vdwg.mxu0
    %1364 = vmatpush.msra.mxu0 %v1219
    %1365 = vmatpush.msra.mxu0 %v1218
    %1366 = vmatpush.msra.mxu0 %v1217
    %1367 = vmatpush.msra.mxu0 %v1216
    %1368 = vmatpush.msra.mxu0 %v1215
    %1369 = vmatpush.msra.mxu0 %v1214
    %1370 = vmatpush.msra.mxu0 %v1213
    %1371 = vmatpush.msra.mxu0 %v1212
    %1372 = vmatpush.msra.mxu0 %v1211
    %1373 = vmatpush.msra.mxu0 %v1210
    %1374 = vmatpush.msra.mxu0 %v1209
    %1375 = vmatpush.msra.mxu0 %v1208
    %1376 = vmatpush.msra.mxu0 %v1207
    %1377 = vmatpush.msra.mxu0 %v1206
    %1378 = vmatpush.msra.mxu0 %v1205
    %1379 = vmatpush.msra.mxu0 %v1204
    %1380 = vmatmul.f32.gmra.mxu0 %v1090
    %v1381 = vpop.f32.mrf.mxu0
    %v1382 = vadd.f32 %v1362, %v1381
    %1383 = vdwg.mxu0
    %vm1384 = vcmask 33792
    %1385 = vst.msk [vmem:[#allocation2] sm:$0x3] %vm1384, %v1382
    // Predicated region
    $region22: #{base_tcn_forward.3} parent=1 // pred_check
      _
    $region23: #{base_tcn_forward.3} parent=1 // pred_check_branch
      %1387 = sbr.rel (0) target = $region25
    $region24: #{base_tcn_forward.3} parent=1 // pred_region
      %1389 = vsyncadd [#allocation3], 0
      %s1391 = sshll.u32 [#allocation2], 4
      %s1392 = int_to_ptr.vmem [resolvable:$true] %s1391
      %s1393 = sshll.u32 %s5, 4
      %s1394 = int_to_ptr.hbm [resolvable:$true] %s1393
      %1396 = dma.vmem_to_hbm [thread:$0]  %s1392, 32, %s1394, [#allocation3]
    $region25: #{base_tcn_forward.3} parent=1 // pred_fallthru
      _
    // Predicated region
    $region26: #{base_tcn_forward.3} parent=1 // pred_check
      _
    $region27: #{base_tcn_forward.3} parent=1 // pred_check_branch
      %1398 = sbr.rel (0) target = $region29
    $region28: #{base_tcn_forward.3} parent=1 // pred_region
      %1400 = dma.done [#allocation3], 32
    $region29: #{base_tcn_forward.3} parent=1 // pred_fallthru
      _
    %1401 = vsyncpa [#allocation3], 1

</llo_original>
